<compile_context>
chip_gen: v6e
topology: v6e:2x2x1
jax: 0.10.0
libtpu: 0.0.40
codegen_flags: <defaults>
</compile_context>

<pallas_src>
import functools

import jax
import jax.numpy as jnp
import numpy as np
from jax import lax
from jax.experimental import pallas as pl
from jax.experimental.pallas import tpu as pltpu

EPS = 1e-5        # torch.nn.LayerNorm default eps
NEG_INF = -1e20   # same sentinel the reference masked_fill uses


# ---------------------------------------------------------------------------
# In-kernel helpers (traced inside the Pallas kernel body)
# ---------------------------------------------------------------------------
def _layernorm(x, gamma, beta):
    mean = jnp.mean(x, axis=-1, keepdims=True)
    var = jnp.mean((x - mean) ** 2, axis=-1, keepdims=True)
    return (x - mean) * lax.rsqrt(var + EPS) * gamma + beta


def _split_heads(y2, B, L, H, D):
    """(B*L, H*D) f32 -> (H*B, L, D) bf16, batch axis ordered x = h*B + b.

    One lane slice per head over the WHOLE batch (H slices total, not B*H),
    then a layout-trivial reshape: the (B*L -> L) sublane regrouping lands on
    8-row tile boundaries for L = 8 (and is tile-aligned at production D=128).
    """
    parts = [y2[:, h * D:(h + 1) * D] for h in range(H)]
    return jnp.stack(parts, axis=0).reshape(H * B, L, D).astype(jnp.bfloat16)


def _merge_heads(o3, B, L, H, D):
    """(H*B, L, D) f32 -> (B*L, H*D) f32 with head-blocked columns."""
    o4 = o3.reshape(H, B * L, D)
    return jnp.concatenate([o4[h] for h in range(H)], axis=-1)


def _mha(q2, k2, v2, add_mask, wq, wk, wv, wo, bo, B, Lq, Lk, H, D):
    """Fully batched multi-head attention.

    q2:(B*Lq,E) k2,v2:(B*Lk,E) f32;  add_mask broadcastable to (H*B, Lq, Lk) f32;
    wq/wk/wv:(E,E) bf16 block-diagonal (shared per-head (D,D) weights on the blocks,
    1/sqrt(E) folded into wq);  wo:(E,E) bf16 = fc_out.weight.T;  bo:(1,E) f32.
    Returns (B*Lq, E) float32.
    """
    f32, bf16 = jnp.float32, jnp.bfloat16
    # One lane-dense (B*L, E) @ (E, E) matmul per projection (no per-head matmuls).
    q = jnp.dot(q2.astype(bf16), wq, preferred_element_type=f32)
    k = jnp.dot(k2.astype(bf16), wk, preferred_element_type=f32)
    v = jnp.dot(v2.astype(bf16), wv, preferred_element_type=f32)

    qh = _split_heads(q, B, Lq, H, D)          # (H*B, Lq, D) bf16
    kh = _split_heads(k, B, Lk, H, D)          # (H*B, Lk, D) bf16
    vh = _split_heads(v, B, Lk, H, D)          # (H*B, Lk, D) bf16

    # Single head+batch-batched contraction per stage (documented-safe patterns).
    energy = jnp.einsum('xqd,xkd->xqk', qh, kh, preferred_element_type=f32)
    energy = energy + add_mask                 # additive mask (0 / -1e20), f32
    m = jnp.max(energy, axis=-1, keepdims=True)
    p = jnp.exp(energy - m)
    denom = jnp.sum(p, axis=-1, keepdims=True)
    attn = p * pl.reciprocal(denom, approx=True)   # EUP slot, off the VALU

    oh = jnp.einsum('xqk,xkd->xqd', attn.astype(bf16), vh, preferred_element_type=f32)

    # Merge heads back to (B*Lq, E) and hit fc_out as ONE (E,E) matmul.
    o2 = _merge_heads(oh, B, Lq, H, D)
    return jnp.dot(o2.astype(bf16), wo, preferred_element_type=f32) + bo


# ---------------------------------------------------------------------------
# Fused decoder-block kernel: whole (toy-sized) batch in one invocation (no grid).
# ---------------------------------------------------------------------------
def decoder_block_kernel(src_len_ref, x_ref, val_ref, key_ref,
                         wq1_ref, wk1_ref, wv1_ref, wo1_ref, bo1_ref, g1_ref, b1_ref,
                         wq2_ref, wk2_ref, wv2_ref, wo2_ref, bo2_ref, g2_ref, b2_ref,
                         wf1_ref, bf1_ref, wf2_ref, bf2_ref, g3_ref, b3_ref,
                         o_ref, *, heads):
    f32, bf16 = jnp.float32, jnp.bfloat16
    B, Lt, E = x_ref.shape
    Ls = val_ref.shape[1]
    H = heads
    D = E // H

    # Whole batch resident in VMEM; flatten to (B*L, E) so LayerNorm / FFN /
    # projection matmuls get a real M dimension (tile-aligned reshapes for L=8).
    x2 = x_ref[...].reshape(B * Lt, E)
    k2 = key_ref[...].reshape(B * Ls, E)
    v2 = val_ref[...].reshape(B * Ls, E)

    # Masks built in-kernel (nothing (N,Lq,Lk) DMA'd), as additive 0 / -1e20 masks.
    ri = lax.broadcasted_iota(jnp.int32, (1, Lt, Lt), 1)
    ci = lax.broadcasted_iota(jnp.int32, (1, Lt, Lt), 2)
    causal_add = jnp.where(ci <= ri, 0.0, NEG_INF).astype(f32)      # (1, Lt, Lt)

    kcol = lax.broadcasted_iota(jnp.int32, (B, 1, Ls), 2)
    lens = src_len_ref[...].reshape(B, 1, 1)
    smask_b = jnp.where(kcol < lens, 0.0, NEG_INF).astype(f32)      # (B, 1, Ls)
    smask_x = jnp.tile(smask_b, (H, 1, 1))                          # (H*B, 1, Ls)

    # 1) masked self-attention on x (causal mask) + residual + LayerNorm
    attn1 = _mha(x2, x2, x2, causal_add,
                 wq1_ref[...], wk1_ref[...], wv1_ref[...], wo1_ref[...], bo1_ref[...],
                 B, Lt, Lt, H, D)
    h1 = _layernorm(attn1 + x2, g1_ref[...], b1_ref[...])
    # dropout == identity (inference)

    # 2) cross-attention: Q = h1, K = key, V = value (key-padding mask)
    attn2 = _mha(h1, k2, v2, smask_x,
                 wq2_ref[...], wk2_ref[...], wv2_ref[...], wo2_ref[...], bo2_ref[...],
                 B, Lt, Ls, H, D)
    h2 = _layernorm(attn2 + h1, g2_ref[...], b2_ref[...])

    # 3) feed-forward (Linear -> ReLU -> Linear) + residual + LayerNorm, bf16 MXU
    ff = jnp.dot(h2.astype(bf16), wf1_ref[...], preferred_element_type=f32) + bf1_ref[...]
    ff = jnp.maximum(ff, 0.0)
    ff = jnp.dot(ff.astype(bf16), wf2_ref[...], preferred_element_type=f32) + bf2_ref[...]
    out = _layernorm(ff + h2, g3_ref[...], b3_ref[...])

    # E is a multiple of 128 in the demo -> lane-dense (unmasked) output stores.
    o_ref[...] = out.reshape(B, Lt, E).astype(o_ref.dtype)


# ---------------------------------------------------------------------------
# Host wrapper
# ---------------------------------------------------------------------------
def _block_diag_heads(w_t, heads):
    """Place the shared per-head weight w_t (D, D) ('x @ w' layout) on the diagonal
    blocks of an (E, E) matrix so the projection is one lane-dense matmul."""
    D = w_t.shape[0]
    eye = jnp.eye(heads, dtype=w_t.dtype)
    return jnp.einsum('ij,kl->ikjl', eye, w_t).reshape(heads * D, heads * D)


def run_decoder_block(x, value, key, src_len, params, heads):
    """x/value/key: (N, L, E) f32; src_len: (N, 1) int32 (valid source length per
    batch element — the canonical causal trg mask and key-padding src mask are
    built in-kernel, so no (N, Lq, Lk) mask tensors are DMA'd)."""
    N, Lt, E = x.shape
    bf16, f32 = jnp.bfloat16, jnp.float32
    scale = 1.0 / (float(E) ** 0.5)   # reference scales energies by sqrt(embed_size)

    def row(v):
        return v.reshape(1, -1).astype(f32)

    def bd(w_dd):
        return _block_diag_heads(w_dd, heads).astype(bf16)

    kweights = [
        bd(params["sa"]["wq"].T * scale),        # scale folded into Wq
        bd(params["sa"]["wk"].T),
        bd(params["sa"]["wv"].T),
        params["sa"]["wo"].T.astype(bf16),       # full fc_out weight, one matmul
        row(params["sa"]["bo"]),
        row(params["ln1_g"]), row(params["ln1_b"]),
        bd(params["ca"]["wq"].T * scale),
        bd(params["ca"]["wk"].T),
        bd(params["ca"]["wv"].T),
        params["ca"]["wo"].T.astype(bf16),
        row(params["ca"]["bo"]),
        row(params["ln2_g"]), row(params["ln2_b"]),
        params["ff_w1"].T.astype(bf16), row(params["ff_b1"]),
        params["ff_w2"].T.astype(bf16), row(params["ff_b2"]),
        row(params["ln3_g"]), row(params["ln3_b"]),
    ]

    vmem = pltpu.MemorySpace.VMEM
    in_specs = [pl.BlockSpec(memory_space=vmem)] * (4 + len(kweights))

    # Explicit VMEM budget (v5e scoped default is only 16 MiB); at production sizes
    # re-derive for v7x's 64 MiB physical VMEM (keep <= ~48 MiB there).
    return pl.pallas_call(
        functools.partial(decoder_block_kernel, heads=heads),
        out_shape=jax.ShapeDtypeStruct((N, Lt, E), jnp.float32),
        in_specs=in_specs,
        out_specs=pl.BlockSpec(memory_space=vmem),
        compiler_params=pltpu.CompilerParams(vmem_limit_bytes=32 * 1024 * 1024),
    )(src_len.astype(jnp.int32), x, value, key, *kweights)


# ---------------------------------------------------------------------------
# Pure-JAX f32 reference (faithful transcription of the PyTorch modules, eval mode)
# ---------------------------------------------------------------------------
def _self_attention_ref(values, keys, query, mask, p, heads):
    N, vl, E = values.shape
    kl, ql = keys.shape[1], query.shape[1]
    D = E // heads
    v = values.reshape(N, vl, heads, D) @ p["wv"].T
    k = keys.reshape(N, kl, heads, D) @ p["wk"].T
    q = query.reshape(N, ql, heads, D) @ p["wq"].T
    energy = jnp.einsum("nqhd,nkhd->nhqk", q, k)
    energy = jnp.where(mask == 0, -1e20, energy)
    attn = jax.nn.softmax(energy / jnp.sqrt(jnp.float32(E)), axis=3)
    out = jnp.einsum("nhqk,nkhd->nqhd", attn, v).reshape(N, ql, E)
    return out @ p["wo"].T + p["bo"]


def _layernorm_ref(x, g, b):
    mean = x.mean(-1, keepdims=True)
    var = ((x - mean) ** 2).mean(-1, keepdims=True)
    return (x - mean) / jnp.sqrt(var + EPS) * g + b


def decoder_block_ref(x, value, key, src_mask, trg_mask, P, heads):
    attn = _self_attention_ref(x, x, x, trg_mask, P["sa"], heads)
    h1 = _layernorm_ref(attn + x, P["ln1_g"], P["ln1_b"])
    attn2 = _self_attention_ref(value, key, h1, src_mask, P["ca"], heads)
    h2 = _layernorm_ref(attn2 + h1, P["ln2_g"], P["ln2_b"])
    ff = jax.nn.relu(h2 @ P["ff_w1"].T + P["ff_b1"]) @ P["ff_w2"].T + P["ff_b2"]
    return _layernorm_ref(ff + h2, P["ln3_g"], P["ln3_b"])


# ---------------------------------------------------------------------------
if __name__ == "__main__":
    N, Lt, Ls = 2, 8, 8
    E, heads, fexp = 128, 4, 4          # E = 128 -> lane-dense last dim everywhere
    D = E // heads
    F = fexp * E

    root = jax.random.PRNGKey(0)
    ks = jax.random.split(root, 32)
    nrm = lambda k, shape, s=0.1: jax.random.normal(k, shape, jnp.float32) * s

    # Parameters in PyTorch layout (Linear weight = (out, in); y = x @ W.T + b)
    P = {
        "sa": {"wq": nrm(ks[0], (D, D)), "wk": nrm(ks[1], (D, D)),
               "wv": nrm(ks[2], (D, D)), "wo": nrm(ks[3], (E, E)),
               "bo": nrm(ks[4], (E,))},
        "ln1_g": 1.0 + nrm(ks[5], (E,)), "ln1_b": nrm(ks[6], (E,)),
        "ca": {"wq": nrm(ks[7], (D, D)), "wk": nrm(ks[8], (D, D)),
               "wv": nrm(ks[9], (D, D)), "wo": nrm(ks[10], (E, E)),
               "bo": nrm(ks[11], (E,))},
        "ln2_g": 1.0 + nrm(ks[12], (E,)), "ln2_b": nrm(ks[13], (E,)),
        "ff_w1": nrm(ks[14], (F, E)), "ff_b1": nrm(ks[15], (F,)),
        "ff_w2": nrm(ks[16], (E, F)), "ff_b2": nrm(ks[17], (E,)),
        "ln3_g": 1.0 + nrm(ks[18], (E,)), "ln3_b": nrm(ks[19], (E,)),
    }

    # Inputs
    x = jax.random.normal(ks[20], (N, Lt, E), jnp.float32)
    value = jax.random.normal(ks[21], (N, Ls, E), jnp.float32)
    key = jax.random.normal(ks[22], (N, Ls, E), jnp.float32)

    # Canonical decoder masks: causal target mask + key-padding source mask
    # (last 2 source tokens of batch element 1 masked out).
    src_lens = jnp.array([Ls, Ls - 2], dtype=jnp.int32)

    out = run_decoder_block(x, value, key, src_lens.reshape(N, 1), P, heads)
    jax.block_until_ready(out)

    # f32 reference uses the explicit (N,1,Lq,Lk)-broadcastable 0/1 masks.
    trg_mask = jnp.broadcast_to(
        jnp.tril(jnp.ones((Lt, Lt), jnp.float32))[None, None], (N, 1, Lt, Lt))
    src_mask = (jnp.arange(Ls)[None, :] < src_lens[:, None]
                ).astype(jnp.float32)[:, None, None, :]                  # (N,1,1,Ls)
    ref = decoder_block_ref(x, value, key, src_mask, trg_mask, P, heads)

    # Looser tolerance than pure f32: kernel runs its matmuls with bf16 MXU inputs
    # (f32 accumulation) and uses the approximate EUP reciprocal in the softmax.
    np.testing.assert_allclose(np.asarray(out), np.asarray(ref),
                               rtol=5e-2, atol=5e-2)
    print("KERNEL_OK")
</pallas_src>

<mosaic_0001>
module attributes {stable_mosaic.version = 11 : i64} {
  func.func @decoder_block_kernel(%arg0: memref<2x1xi32, #tpu.memory_space<vmem>>, %arg1: memref<2x8x128xf32, #tpu.memory_space<vmem>>, %arg2: memref<2x8x128xf32, #tpu.memory_space<vmem>>, %arg3: memref<2x8x128xf32, #tpu.memory_space<vmem>>, %arg4: memref<128x128xbf16, #tpu.memory_space<vmem>>, %arg5: memref<128x128xbf16, #tpu.memory_space<vmem>>, %arg6: memref<128x128xbf16, #tpu.memory_space<vmem>>, %arg7: memref<128x128xbf16, #tpu.memory_space<vmem>>, %arg8: memref<1x128xf32, #tpu.memory_space<vmem>>, %arg9: memref<1x128xf32, #tpu.memory_space<vmem>>, %arg10: memref<1x128xf32, #tpu.memory_space<vmem>>, %arg11: memref<128x128xbf16, #tpu.memory_space<vmem>>, %arg12: memref<128x128xbf16, #tpu.memory_space<vmem>>, %arg13: memref<128x128xbf16, #tpu.memory_space<vmem>>, %arg14: memref<128x128xbf16, #tpu.memory_space<vmem>>, %arg15: memref<1x128xf32, #tpu.memory_space<vmem>>, %arg16: memref<1x128xf32, #tpu.memory_space<vmem>>, %arg17: memref<1x128xf32, #tpu.memory_space<vmem>>, %arg18: memref<128x512xbf16, #tpu.memory_space<vmem>>, %arg19: memref<1x512xf32, #tpu.memory_space<vmem>>, %arg20: memref<512x128xbf16, #tpu.memory_space<vmem>>, %arg21: memref<1x128xf32, #tpu.memory_space<vmem>>, %arg22: memref<1x128xf32, #tpu.memory_space<vmem>>, %arg23: memref<1x128xf32, #tpu.memory_space<vmem>>, %arg24: memref<2x8x128xf32, #tpu.memory_space<vmem>>) attributes {dimension_semantics = [], scalar_prefetch = 0 : i64, scratch_operands = 0 : i64, tpu.core_type = #tpu.core_type<tc>} {
    %c0 = arith.constant 0 : index
    %c0_0 = arith.constant 0 : index
    %c0_1 = arith.constant 0 : index
    %0 = vector.load %arg1[%c0, %c0_0, %c0_1] : memref<2x8x128xf32, #tpu.memory_space<vmem>>, vector<2x8x128xf32>
    %1 = vector.shape_cast %0 : vector<2x8x128xf32> to vector<16x128xf32>
    %c0_2 = arith.constant 0 : index
    %c0_3 = arith.constant 0 : index
    %c0_4 = arith.constant 0 : index
    %2 = vector.load %arg3[%c0_2, %c0_3, %c0_4] : memref<2x8x128xf32, #tpu.memory_space<vmem>>, vector<2x8x128xf32>
    %3 = vector.shape_cast %2 : vector<2x8x128xf32> to vector<16x128xf32>
    %c0_5 = arith.constant 0 : index
    %c0_6 = arith.constant 0 : index
    %c0_7 = arith.constant 0 : index
    %4 = vector.load %arg2[%c0_5, %c0_6, %c0_7] : memref<2x8x128xf32, #tpu.memory_space<vmem>>, vector<2x8x128xf32>
    %5 = vector.shape_cast %4 : vector<2x8x128xf32> to vector<16x128xf32>
    %6 = tpu.iota {dimensions = array<i32: 1>} : vector<1x8x8xi32>
    %7 = tpu.iota {dimensions = array<i32: 2>} : vector<1x8x8xi32>
    %8 = arith.cmpi sle, %7, %6 : vector<1x8x8xi32>
    %cst = arith.constant 0.000000e+00 : f32
    %cst_8 = arith.constant -1.000000e+20 : f32
    %9 = vector.broadcast %cst : f32 to vector<1x8x8xf32>
    %10 = vector.broadcast %cst_8 : f32 to vector<1x8x8xf32>
    %11 = arith.select %8, %9, %10 : vector<1x8x8xi1>, vector<1x8x8xf32>
    %12 = tpu.iota {dimensions = array<i32: 2>} : vector<2x1x8xi32>
    %c0_9 = arith.constant 0 : index
    %c0_10 = arith.constant 0 : index
    %13 = vector.load %arg0[%c0_9, %c0_10] : memref<2x1xi32, #tpu.memory_space<vmem>>, vector<2x1xi32>
    %14 = vector.shape_cast %13 : vector<2x1xi32> to vector<2x1x1xi32>
    %15 = vector.broadcast %14 : vector<2x1x1xi32> to vector<2x1x8xi32>
    %16 = arith.cmpi slt, %12, %15 : vector<2x1x8xi32>
    %cst_11 = arith.constant 0.000000e+00 : f32
    %cst_12 = arith.constant -1.000000e+20 : f32
    %17 = vector.broadcast %cst_11 : f32 to vector<2x1x8xf32>
    %18 = vector.broadcast %cst_12 : f32 to vector<2x1x8xf32>
    %19 = arith.select %16, %17, %18 : vector<2x1x8xi1>, vector<2x1x8xf32>
    %20 = tpu.concatenate %19, %19, %19, %19 in 0 : vector<2x1x8xf32>, vector<2x1x8xf32>, vector<2x1x8xf32>, vector<2x1x8xf32> -> vector<8x1x8xf32>
    %c0_13 = arith.constant 0 : index
    %c0_14 = arith.constant 0 : index
    %21 = vector.load %arg4[%c0_13, %c0_14] : memref<128x128xbf16, #tpu.memory_space<vmem>>, vector<128x128xbf16>
    %c0_15 = arith.constant 0 : index
    %c0_16 = arith.constant 0 : index
    %22 = vector.load %arg5[%c0_15, %c0_16] : memref<128x128xbf16, #tpu.memory_space<vmem>>, vector<128x128xbf16>
    %c0_17 = arith.constant 0 : index
    %c0_18 = arith.constant 0 : index
    %23 = vector.load %arg6[%c0_17, %c0_18] : memref<128x128xbf16, #tpu.memory_space<vmem>>, vector<128x128xbf16>
    %c0_19 = arith.constant 0 : index
    %c0_20 = arith.constant 0 : index
    %24 = vector.load %arg7[%c0_19, %c0_20] : memref<128x128xbf16, #tpu.memory_space<vmem>>, vector<128x128xbf16>
    %c0_21 = arith.constant 0 : index
    %c0_22 = arith.constant 0 : index
    %25 = vector.load %arg8[%c0_21, %c0_22] : memref<1x128xf32, #tpu.memory_space<vmem>>, vector<1x128xf32>
    %26 = arith.truncf %1 : vector<16x128xf32> to vector<16x128xbf16>
    %cst_23 = arith.constant dense<0.000000e+00> : vector<16x128xf32>
    %27 = tpu.matmul %26, %21, %cst_23 {dimension_numbers = #tpu.dot_dimension_numbers<[1], [0], [0], [1], [0, 0, 1, 1], [], []>} : vector<16x128xbf16>, vector<128x128xbf16>, vector<16x128xf32> -> vector<16x128xf32>
    %28 = arith.truncf %1 : vector<16x128xf32> to vector<16x128xbf16>
    %cst_24 = arith.constant dense<0.000000e+00> : vector<16x128xf32>
    %29 = tpu.matmul %28, %22, %cst_24 {dimension_numbers = #tpu.dot_dimension_numbers<[1], [0], [0], [1], [0, 0, 1, 1], [], []>} : vector<16x128xbf16>, vector<128x128xbf16>, vector<16x128xf32> -> vector<16x128xf32>
    %30 = arith.truncf %1 : vector<16x128xf32> to vector<16x128xbf16>
    %cst_25 = arith.constant dense<0.000000e+00> : vector<16x128xf32>
    %31 = tpu.matmul %30, %23, %cst_25 {dimension_numbers = #tpu.dot_dimension_numbers<[1], [0], [0], [1], [0, 0, 1, 1], [], []>} : vector<16x128xbf16>, vector<128x128xbf16>, vector<16x128xf32> -> vector<16x128xf32>
    %32 = vector.extract_strided_slice %27 {offsets = [0, 0], sizes = [16, 32], strides = [1, 1]} : vector<16x128xf32> to vector<16x32xf32>
    %33 = vector.extract_strided_slice %27 {offsets = [0, 32], sizes = [16, 32], strides = [1, 1]} : vector<16x128xf32> to vector<16x32xf32>
    %34 = vector.extract_strided_slice %27 {offsets = [0, 64], sizes = [16, 32], strides = [1, 1]} : vector<16x128xf32> to vector<16x32xf32>
    %35 = vector.extract_strided_slice %27 {offsets = [0, 96], sizes = [16, 32], strides = [1, 1]} : vector<16x128xf32> to vector<16x32xf32>
    %36 = vector.shape_cast %32 : vector<16x32xf32> to vector<1x16x32xf32>
    %37 = vector.shape_cast %33 : vector<16x32xf32> to vector<1x16x32xf32>
    %38 = vector.shape_cast %34 : vector<16x32xf32> to vector<1x16x32xf32>
    %39 = vector.shape_cast %35 : vector<16x32xf32> to vector<1x16x32xf32>
    %40 = tpu.concatenate %36, %37, %38, %39 in 0 : vector<1x16x32xf32>, vector<1x16x32xf32>, vector<1x16x32xf32>, vector<1x16x32xf32> -> vector<4x16x32xf32>
    %41 = vector.shape_cast %40 : vector<4x16x32xf32> to vector<8x8x32xf32>
    %42 = arith.truncf %41 : vector<8x8x32xf32> to vector<8x8x32xbf16>
    %43 = vector.extract_strided_slice %29 {offsets = [0, 0], sizes = [16, 32], strides = [1, 1]} : vector<16x128xf32> to vector<16x32xf32>
    %44 = vector.extract_strided_slice %29 {offsets = [0, 32], sizes = [16, 32], strides = [1, 1]} : vector<16x128xf32> to vector<16x32xf32>
    %45 = vector.extract_strided_slice %29 {offsets = [0, 64], sizes = [16, 32], strides = [1, 1]} : vector<16x128xf32> to vector<16x32xf32>
    %46 = vector.extract_strided_slice %29 {offsets = [0, 96], sizes = [16, 32], strides = [1, 1]} : vector<16x128xf32> to vector<16x32xf32>
    %47 = vector.shape_cast %43 : vector<16x32xf32> to vector<1x16x32xf32>
    %48 = vector.shape_cast %44 : vector<16x32xf32> to vector<1x16x32xf32>
    %49 = vector.shape_cast %45 : vector<16x32xf32> to vector<1x16x32xf32>
    %50 = vector.shape_cast %46 : vector<16x32xf32> to vector<1x16x32xf32>
    %51 = tpu.concatenate %47, %48, %49, %50 in 0 : vector<1x16x32xf32>, vector<1x16x32xf32>, vector<1x16x32xf32>, vector<1x16x32xf32> -> vector<4x16x32xf32>
    %52 = vector.shape_cast %51 : vector<4x16x32xf32> to vector<8x8x32xf32>
    %53 = arith.truncf %52 : vector<8x8x32xf32> to vector<8x8x32xbf16>
    %54 = vector.extract_strided_slice %31 {offsets = [0, 0], sizes = [16, 32], strides = [1, 1]} : vector<16x128xf32> to vector<16x32xf32>
    %55 = vector.extract_strided_slice %31 {offsets = [0, 32], sizes = [16, 32], strides = [1, 1]} : vector<16x128xf32> to vector<16x32xf32>
    %56 = vector.extract_strided_slice %31 {offsets = [0, 64], sizes = [16, 32], strides = [1, 1]} : vector<16x128xf32> to vector<16x32xf32>
    %57 = vector.extract_strided_slice %31 {offsets = [0, 96], sizes = [16, 32], strides = [1, 1]} : vector<16x128xf32> to vector<16x32xf32>
    %58 = vector.shape_cast %54 : vector<16x32xf32> to vector<1x16x32xf32>
    %59 = vector.shape_cast %55 : vector<16x32xf32> to vector<1x16x32xf32>
    %60 = vector.shape_cast %56 : vector<16x32xf32> to vector<1x16x32xf32>
    %61 = vector.shape_cast %57 : vector<16x32xf32> to vector<1x16x32xf32>
    %62 = tpu.concatenate %58, %59, %60, %61 in 0 : vector<1x16x32xf32>, vector<1x16x32xf32>, vector<1x16x32xf32>, vector<1x16x32xf32> -> vector<4x16x32xf32>
    %63 = vector.shape_cast %62 : vector<4x16x32xf32> to vector<8x8x32xf32>
    %64 = arith.truncf %63 : vector<8x8x32xf32> to vector<8x8x32xbf16>
    "tpu.trace_start"() <{level = 10 : i32, message = "xqd,xkd->xqk"}> : () -> ()
    %cst_26 = arith.constant dense<0.000000e+00> : vector<8x8x8xf32>
    %65 = tpu.matmul %42, %53, %cst_26 {dimension_numbers = #tpu.dot_dimension_numbers<[2], [2], [1], [1], [0, 0, 0, 1, 1, 1], [0], [0]>} : vector<8x8x32xbf16>, vector<8x8x32xbf16>, vector<8x8x8xf32> -> vector<8x8x8xf32>
    "tpu.trace_stop"() : () -> ()
    %66 = vector.broadcast %11 : vector<1x8x8xf32> to vector<8x8x8xf32>
    %67 = arith.addf %65, %66 : vector<8x8x8xf32>
    %cst_27 = arith.constant dense<0xFF800000> : vector<8x8xf32>
    %68 = vector.multi_reduction <maximumf>, %67, %cst_27 [2] : vector<8x8x8xf32> to vector<8x8xf32>
    %69 = vector.shape_cast %68 : vector<8x8xf32> to vector<8x8x1xf32>
    %70 = vector.broadcast %69 : vector<8x8x1xf32> to vector<8x8x8xf32>
    %71 = arith.subf %67, %70 : vector<8x8x8xf32>
    %72 = math.exp %71 : vector<8x8x8xf32>
    %cst_28 = arith.constant dense<0.000000e+00> : vector<8x8xf32>
    %73 = vector.multi_reduction <add>, %72, %cst_28 [2] : vector<8x8x8xf32> to vector<8x8xf32>
    %74 = vector.shape_cast %73 : vector<8x8xf32> to vector<8x8x1xf32>
    %75 = tpu.reciprocal %74 {approx = true} : vector<8x8x1xf32> -> vector<8x8x1xf32>
    %76 = vector.broadcast %75 : vector<8x8x1xf32> to vector<8x8x8xf32>
    %77 = arith.mulf %72, %76 : vector<8x8x8xf32>
    %78 = arith.truncf %77 : vector<8x8x8xf32> to vector<8x8x8xbf16>
    "tpu.trace_start"() <{level = 10 : i32, message = "xqk,xkd->xqd"}> : () -> ()
    %cst_29 = arith.constant dense<0.000000e+00> : vector<8x8x32xf32>
    %79 = tpu.matmul %78, %64, %cst_29 {dimension_numbers = #tpu.dot_dimension_numbers<[2], [1], [1], [2], [0, 0, 0, 1, 1, 2], [0], [0]>} : vector<8x8x8xbf16>, vector<8x8x32xbf16>, vector<8x8x32xf32> -> vector<8x8x32xf32>
    "tpu.trace_stop"() : () -> ()
    %80 = vector.shape_cast %79 : vector<8x8x32xf32> to vector<4x16x32xf32>
    %81 = vector.extract_strided_slice %80 {offsets = [0, 0, 0], sizes = [1, 16, 32], strides = [1, 1, 1]} : vector<4x16x32xf32> to vector<1x16x32xf32>
    %82 = vector.shape_cast %81 : vector<1x16x32xf32> to vector<16x32xf32>
    %83 = vector.extract_strided_slice %80 {offsets = [1, 0, 0], sizes = [1, 16, 32], strides = [1, 1, 1]} : vector<4x16x32xf32> to vector<1x16x32xf32>
    %84 = vector.shape_cast %83 : vector<1x16x32xf32> to vector<16x32xf32>
    %85 = vector.extract_strided_slice %80 {offsets = [2, 0, 0], sizes = [1, 16, 32], strides = [1, 1, 1]} : vector<4x16x32xf32> to vector<1x16x32xf32>
    %86 = vector.shape_cast %85 : vector<1x16x32xf32> to vector<16x32xf32>
    %87 = vector.extract_strided_slice %80 {offsets = [3, 0, 0], sizes = [1, 16, 32], strides = [1, 1, 1]} : vector<4x16x32xf32> to vector<1x16x32xf32>
    %88 = vector.shape_cast %87 : vector<1x16x32xf32> to vector<16x32xf32>
    %89 = tpu.concatenate %82, %84, %86, %88 in 1 : vector<16x32xf32>, vector<16x32xf32>, vector<16x32xf32>, vector<16x32xf32> -> vector<16x128xf32>
    %90 = arith.truncf %89 : vector<16x128xf32> to vector<16x128xbf16>
    %cst_30 = arith.constant dense<0.000000e+00> : vector<16x128xf32>
    %91 = tpu.matmul %90, %24, %cst_30 {dimension_numbers = #tpu.dot_dimension_numbers<[1], [0], [0], [1], [0, 0, 1, 1], [], []>} : vector<16x128xbf16>, vector<128x128xbf16>, vector<16x128xf32> -> vector<16x128xf32>
    %92 = vector.broadcast %25 : vector<1x128xf32> to vector<16x128xf32>
    %93 = arith.addf %91, %92 : vector<16x128xf32>
    %94 = arith.addf %93, %1 : vector<16x128xf32>
    %c0_31 = arith.constant 0 : index
    %c0_32 = arith.constant 0 : index
    %95 = vector.load %arg9[%c0_31, %c0_32] : memref<1x128xf32, #tpu.memory_space<vmem>>, vector<1x128xf32>
    %c0_33 = arith.constant 0 : index
    %c0_34 = arith.constant 0 : index
    %96 = vector.load %arg10[%c0_33, %c0_34] : memref<1x128xf32, #tpu.memory_space<vmem>>, vector<1x128xf32>
    %cst_35 = arith.constant dense<0.000000e+00> : vector<16xf32>
    %97 = vector.multi_reduction <add>, %94, %cst_35 [1] : vector<16x128xf32> to vector<16xf32>
    %98 = vector.shape_cast %97 : vector<16xf32> to vector<16x1xf32>
    %cst_36 = arith.constant 1.280000e+02 : f32
    %99 = vector.broadcast %cst_36 : f32 to vector<16x1xf32>
    %100 = arith.divf %98, %99 : vector<16x1xf32>
    %101 = vector.broadcast %100 : vector<16x1xf32> to vector<16x128xf32>
    %102 = arith.subf %94, %101 : vector<16x128xf32>
    %103 = arith.mulf %102, %102 : vector<16x128xf32>
    %cst_37 = arith.constant dense<0.000000e+00> : vector<16xf32>
    %104 = vector.multi_reduction <add>, %103, %cst_37 [1] : vector<16x128xf32> to vector<16xf32>
    %105 = vector.shape_cast %104 : vector<16xf32> to vector<16x1xf32>
    %cst_38 = arith.constant 1.280000e+02 : f32
    %106 = vector.broadcast %cst_38 : f32 to vector<16x1xf32>
    %107 = arith.divf %105, %106 : vector<16x1xf32>
    %108 = vector.broadcast %100 : vector<16x1xf32> to vector<16x128xf32>
    %109 = arith.subf %94, %108 : vector<16x128xf32>
    %cst_39 = arith.constant 9.99999974E-6 : f32
    %110 = vector.broadcast %cst_39 : f32 to vector<16x1xf32>
    %111 = arith.addf %107, %110 : vector<16x1xf32>
    %112 = math.rsqrt %111 : vector<16x1xf32>
    %113 = vector.broadcast %112 : vector<16x1xf32> to vector<16x128xf32>
    %114 = arith.mulf %109, %113 : vector<16x128xf32>
    %115 = vector.broadcast %95 : vector<1x128xf32> to vector<16x128xf32>
    %116 = arith.mulf %114, %115 : vector<16x128xf32>
    %117 = vector.broadcast %96 : vector<1x128xf32> to vector<16x128xf32>
    %118 = arith.addf %116, %117 : vector<16x128xf32>
    %c0_40 = arith.constant 0 : index
    %c0_41 = arith.constant 0 : index
    %119 = vector.load %arg11[%c0_40, %c0_41] : memref<128x128xbf16, #tpu.memory_space<vmem>>, vector<128x128xbf16>
    %c0_42 = arith.constant 0 : index
    %c0_43 = arith.constant 0 : index
    %120 = vector.load %arg12[%c0_42, %c0_43] : memref<128x128xbf16, #tpu.memory_space<vmem>>, vector<128x128xbf16>
    %c0_44 = arith.constant 0 : index
    %c0_45 = arith.constant 0 : index
    %121 = vector.load %arg13[%c0_44, %c0_45] : memref<128x128xbf16, #tpu.memory_space<vmem>>, vector<128x128xbf16>
    %c0_46 = arith.constant 0 : index
    %c0_47 = arith.constant 0 : index
    %122 = vector.load %arg14[%c0_46, %c0_47] : memref<128x128xbf16, #tpu.memory_space<vmem>>, vector<128x128xbf16>
    %c0_48 = arith.constant 0 : index
    %c0_49 = arith.constant 0 : index
    %123 = vector.load %arg15[%c0_48, %c0_49] : memref<1x128xf32, #tpu.memory_space<vmem>>, vector<1x128xf32>
    %124 = arith.truncf %118 : vector<16x128xf32> to vector<16x128xbf16>
    %cst_50 = arith.constant dense<0.000000e+00> : vector<16x128xf32>
    %125 = tpu.matmul %124, %119, %cst_50 {dimension_numbers = #tpu.dot_dimension_numbers<[1], [0], [0], [1], [0, 0, 1, 1], [], []>} : vector<16x128xbf16>, vector<128x128xbf16>, vector<16x128xf32> -> vector<16x128xf32>
    %126 = arith.truncf %3 : vector<16x128xf32> to vector<16x128xbf16>
    %cst_51 = arith.constant dense<0.000000e+00> : vector<16x128xf32>
    %127 = tpu.matmul %126, %120, %cst_51 {dimension_numbers = #tpu.dot_dimension_numbers<[1], [0], [0], [1], [0, 0, 1, 1], [], []>} : vector<16x128xbf16>, vector<128x128xbf16>, vector<16x128xf32> -> vector<16x128xf32>
    %128 = arith.truncf %5 : vector<16x128xf32> to vector<16x128xbf16>
    %cst_52 = arith.constant dense<0.000000e+00> : vector<16x128xf32>
    %129 = tpu.matmul %128, %121, %cst_52 {dimension_numbers = #tpu.dot_dimension_numbers<[1], [0], [0], [1], [0, 0, 1, 1], [], []>} : vector<16x128xbf16>, vector<128x128xbf16>, vector<16x128xf32> -> vector<16x128xf32>
    %130 = vector.extract_strided_slice %125 {offsets = [0, 0], sizes = [16, 32], strides = [1, 1]} : vector<16x128xf32> to vector<16x32xf32>
    %131 = vector.extract_strided_slice %125 {offsets = [0, 32], sizes = [16, 32], strides = [1, 1]} : vector<16x128xf32> to vector<16x32xf32>
    %132 = vector.extract_strided_slice %125 {offsets = [0, 64], sizes = [16, 32], strides = [1, 1]} : vector<16x128xf32> to vector<16x32xf32>
    %133 = vector.extract_strided_slice %125 {offsets = [0, 96], sizes = [16, 32], strides = [1, 1]} : vector<16x128xf32> to vector<16x32xf32>
    %134 = vector.shape_cast %130 : vector<16x32xf32> to vector<1x16x32xf32>
    %135 = vector.shape_cast %131 : vector<16x32xf32> to vector<1x16x32xf32>
    %136 = vector.shape_cast %132 : vector<16x32xf32> to vector<1x16x32xf32>
    %137 = vector.shape_cast %133 : vector<16x32xf32> to vector<1x16x32xf32>
    %138 = tpu.concatenate %134, %135, %136, %137 in 0 : vector<1x16x32xf32>, vector<1x16x32xf32>, vector<1x16x32xf32>, vector<1x16x32xf32> -> vector<4x16x32xf32>
    %139 = vector.shape_cast %138 : vector<4x16x32xf32> to vector<8x8x32xf32>
    %140 = arith.truncf %139 : vector<8x8x32xf32> to vector<8x8x32xbf16>
    %141 = vector.extract_strided_slice %127 {offsets = [0, 0], sizes = [16, 32], strides = [1, 1]} : vector<16x128xf32> to vector<16x32xf32>
    %142 = vector.extract_strided_slice %127 {offsets = [0, 32], sizes = [16, 32], strides = [1, 1]} : vector<16x128xf32> to vector<16x32xf32>
    %143 = vector.extract_strided_slice %127 {offsets = [0, 64], sizes = [16, 32], strides = [1, 1]} : vector<16x128xf32> to vector<16x32xf32>
    %144 = vector.extract_strided_slice %127 {offsets = [0, 96], sizes = [16, 32], strides = [1, 1]} : vector<16x128xf32> to vector<16x32xf32>
    %145 = vector.shape_cast %141 : vector<16x32xf32> to vector<1x16x32xf32>
    %146 = vector.shape_cast %142 : vector<16x32xf32> to vector<1x16x32xf32>
    %147 = vector.shape_cast %143 : vector<16x32xf32> to vector<1x16x32xf32>
    %148 = vector.shape_cast %144 : vector<16x32xf32> to vector<1x16x32xf32>
    %149 = tpu.concatenate %145, %146, %147, %148 in 0 : vector<1x16x32xf32>, vector<1x16x32xf32>, vector<1x16x32xf32>, vector<1x16x32xf32> -> vector<4x16x32xf32>
    %150 = vector.shape_cast %149 : vector<4x16x32xf32> to vector<8x8x32xf32>
    %151 = arith.truncf %150 : vector<8x8x32xf32> to vector<8x8x32xbf16>
    %152 = vector.extract_strided_slice %129 {offsets = [0, 0], sizes = [16, 32], strides = [1, 1]} : vector<16x128xf32> to vector<16x32xf32>
    %153 = vector.extract_strided_slice %129 {offsets = [0, 32], sizes = [16, 32], strides = [1, 1]} : vector<16x128xf32> to vector<16x32xf32>
    %154 = vector.extract_strided_slice %129 {offsets = [0, 64], sizes = [16, 32], strides = [1, 1]} : vector<16x128xf32> to vector<16x32xf32>
    %155 = vector.extract_strided_slice %129 {offsets = [0, 96], sizes = [16, 32], strides = [1, 1]} : vector<16x128xf32> to vector<16x32xf32>
    %156 = vector.shape_cast %152 : vector<16x32xf32> to vector<1x16x32xf32>
    %157 = vector.shape_cast %153 : vector<16x32xf32> to vector<1x16x32xf32>
    %158 = vector.shape_cast %154 : vector<16x32xf32> to vector<1x16x32xf32>
    %159 = vector.shape_cast %155 : vector<16x32xf32> to vector<1x16x32xf32>
    %160 = tpu.concatenate %156, %157, %158, %159 in 0 : vector<1x16x32xf32>, vector<1x16x32xf32>, vector<1x16x32xf32>, vector<1x16x32xf32> -> vector<4x16x32xf32>
    %161 = vector.shape_cast %160 : vector<4x16x32xf32> to vector<8x8x32xf32>
    %162 = arith.truncf %161 : vector<8x8x32xf32> to vector<8x8x32xbf16>
    "tpu.trace_start"() <{level = 10 : i32, message = "xqd,xkd->xqk"}> : () -> ()
    %cst_53 = arith.constant dense<0.000000e+00> : vector<8x8x8xf32>
    %163 = tpu.matmul %140, %151, %cst_53 {dimension_numbers = #tpu.dot_dimension_numbers<[2], [2], [1], [1], [0, 0, 0, 1, 1, 1], [0], [0]>} : vector<8x8x32xbf16>, vector<8x8x32xbf16>, vector<8x8x8xf32> -> vector<8x8x8xf32>
    "tpu.trace_stop"() : () -> ()
    %164 = vector.broadcast %20 : vector<8x1x8xf32> to vector<8x8x8xf32>
    %165 = arith.addf %163, %164 : vector<8x8x8xf32>
    %cst_54 = arith.constant dense<0xFF800000> : vector<8x8xf32>
    %166 = vector.multi_reduction <maximumf>, %165, %cst_54 [2] : vector<8x8x8xf32> to vector<8x8xf32>
    %167 = vector.shape_cast %166 : vector<8x8xf32> to vector<8x8x1xf32>
    %168 = vector.broadcast %167 : vector<8x8x1xf32> to vector<8x8x8xf32>
    %169 = arith.subf %165, %168 : vector<8x8x8xf32>
    %170 = math.exp %169 : vector<8x8x8xf32>
    %cst_55 = arith.constant dense<0.000000e+00> : vector<8x8xf32>
    %171 = vector.multi_reduction <add>, %170, %cst_55 [2] : vector<8x8x8xf32> to vector<8x8xf32>
    %172 = vector.shape_cast %171 : vector<8x8xf32> to vector<8x8x1xf32>
    %173 = tpu.reciprocal %172 {approx = true} : vector<8x8x1xf32> -> vector<8x8x1xf32>
    %174 = vector.broadcast %173 : vector<8x8x1xf32> to vector<8x8x8xf32>
    %175 = arith.mulf %170, %174 : vector<8x8x8xf32>
    %176 = arith.truncf %175 : vector<8x8x8xf32> to vector<8x8x8xbf16>
    "tpu.trace_start"() <{level = 10 : i32, message = "xqk,xkd->xqd"}> : () -> ()
    %cst_56 = arith.constant dense<0.000000e+00> : vector<8x8x32xf32>
    %177 = tpu.matmul %176, %162, %cst_56 {dimension_numbers = #tpu.dot_dimension_numbers<[2], [1], [1], [2], [0, 0, 0, 1, 1, 2], [0], [0]>} : vector<8x8x8xbf16>, vector<8x8x32xbf16>, vector<8x8x32xf32> -> vector<8x8x32xf32>
    "tpu.trace_stop"() : () -> ()
    %178 = vector.shape_cast %177 : vector<8x8x32xf32> to vector<4x16x32xf32>
    %179 = vector.extract_strided_slice %178 {offsets = [0, 0, 0], sizes = [1, 16, 32], strides = [1, 1, 1]} : vector<4x16x32xf32> to vector<1x16x32xf32>
    %180 = vector.shape_cast %179 : vector<1x16x32xf32> to vector<16x32xf32>
    %181 = vector.extract_strided_slice %178 {offsets = [1, 0, 0], sizes = [1, 16, 32], strides = [1, 1, 1]} : vector<4x16x32xf32> to vector<1x16x32xf32>
    %182 = vector.shape_cast %181 : vector<1x16x32xf32> to vector<16x32xf32>
    %183 = vector.extract_strided_slice %178 {offsets = [2, 0, 0], sizes = [1, 16, 32], strides = [1, 1, 1]} : vector<4x16x32xf32> to vector<1x16x32xf32>
    %184 = vector.shape_cast %183 : vector<1x16x32xf32> to vector<16x32xf32>
    %185 = vector.extract_strided_slice %178 {offsets = [3, 0, 0], sizes = [1, 16, 32], strides = [1, 1, 1]} : vector<4x16x32xf32> to vector<1x16x32xf32>
    %186 = vector.shape_cast %185 : vector<1x16x32xf32> to vector<16x32xf32>
    %187 = tpu.concatenate %180, %182, %184, %186 in 1 : vector<16x32xf32>, vector<16x32xf32>, vector<16x32xf32>, vector<16x32xf32> -> vector<16x128xf32>
    %188 = arith.truncf %187 : vector<16x128xf32> to vector<16x128xbf16>
    %cst_57 = arith.constant dense<0.000000e+00> : vector<16x128xf32>
    %189 = tpu.matmul %188, %122, %cst_57 {dimension_numbers = #tpu.dot_dimension_numbers<[1], [0], [0], [1], [0, 0, 1, 1], [], []>} : vector<16x128xbf16>, vector<128x128xbf16>, vector<16x128xf32> -> vector<16x128xf32>
    %190 = vector.broadcast %123 : vector<1x128xf32> to vector<16x128xf32>
    %191 = arith.addf %189, %190 : vector<16x128xf32>
    %192 = arith.addf %191, %118 : vector<16x128xf32>
    %c0_58 = arith.constant 0 : index
    %c0_59 = arith.constant 0 : index
    %193 = vector.load %arg16[%c0_58, %c0_59] : memref<1x128xf32, #tpu.memory_space<vmem>>, vector<1x128xf32>
    %c0_60 = arith.constant 0 : index
    %c0_61 = arith.constant 0 : index
    %194 = vector.load %arg17[%c0_60, %c0_61] : memref<1x128xf32, #tpu.memory_space<vmem>>, vector<1x128xf32>
    %cst_62 = arith.constant dense<0.000000e+00> : vector<16xf32>
    %195 = vector.multi_reduction <add>, %192, %cst_62 [1] : vector<16x128xf32> to vector<16xf32>
    %196 = vector.shape_cast %195 : vector<16xf32> to vector<16x1xf32>
    %cst_63 = arith.constant 1.280000e+02 : f32
    %197 = vector.broadcast %cst_63 : f32 to vector<16x1xf32>
    %198 = arith.divf %196, %197 : vector<16x1xf32>
    %199 = vector.broadcast %198 : vector<16x1xf32> to vector<16x128xf32>
    %200 = arith.subf %192, %199 : vector<16x128xf32>
    %201 = arith.mulf %200, %200 : vector<16x128xf32>
    %cst_64 = arith.constant dense<0.000000e+00> : vector<16xf32>
    %202 = vector.multi_reduction <add>, %201, %cst_64 [1] : vector<16x128xf32> to vector<16xf32>
    %203 = vector.shape_cast %202 : vector<16xf32> to vector<16x1xf32>
    %cst_65 = arith.constant 1.280000e+02 : f32
    %204 = vector.broadcast %cst_65 : f32 to vector<16x1xf32>
    %205 = arith.divf %203, %204 : vector<16x1xf32>
    %206 = vector.broadcast %198 : vector<16x1xf32> to vector<16x128xf32>
    %207 = arith.subf %192, %206 : vector<16x128xf32>
    %cst_66 = arith.constant 9.99999974E-6 : f32
    %208 = vector.broadcast %cst_66 : f32 to vector<16x1xf32>
    %209 = arith.addf %205, %208 : vector<16x1xf32>
    %210 = math.rsqrt %209 : vector<16x1xf32>
    %211 = vector.broadcast %210 : vector<16x1xf32> to vector<16x128xf32>
    %212 = arith.mulf %207, %211 : vector<16x128xf32>
    %213 = vector.broadcast %193 : vector<1x128xf32> to vector<16x128xf32>
    %214 = arith.mulf %212, %213 : vector<16x128xf32>
    %215 = vector.broadcast %194 : vector<1x128xf32> to vector<16x128xf32>
    %216 = arith.addf %214, %215 : vector<16x128xf32>
    %217 = arith.truncf %216 : vector<16x128xf32> to vector<16x128xbf16>
    %c0_67 = arith.constant 0 : index
    %c0_68 = arith.constant 0 : index
    %218 = vector.load %arg18[%c0_67, %c0_68] : memref<128x512xbf16, #tpu.memory_space<vmem>>, vector<128x512xbf16>
    %cst_69 = arith.constant dense<0.000000e+00> : vector<16x512xf32>
    %219 = tpu.matmul %217, %218, %cst_69 {dimension_numbers = #tpu.dot_dimension_numbers<[1], [0], [0], [1], [0, 0, 1, 1], [], []>} : vector<16x128xbf16>, vector<128x512xbf16>, vector<16x512xf32> -> vector<16x512xf32>
    %c0_70 = arith.constant 0 : index
    %c0_71 = arith.constant 0 : index
    %220 = vector.load %arg19[%c0_70, %c0_71] : memref<1x512xf32, #tpu.memory_space<vmem>>, vector<1x512xf32>
    %221 = vector.broadcast %220 : vector<1x512xf32> to vector<16x512xf32>
    %222 = arith.addf %219, %221 : vector<16x512xf32>
    %cst_72 = arith.constant 0.000000e+00 : f32
    %223 = vector.broadcast %cst_72 : f32 to vector<16x512xf32>
    %224 = arith.maximumf %222, %223 : vector<16x512xf32>
    %225 = arith.truncf %224 : vector<16x512xf32> to vector<16x512xbf16>
    %c0_73 = arith.constant 0 : index
    %c0_74 = arith.constant 0 : index
    %226 = vector.load %arg20[%c0_73, %c0_74] : memref<512x128xbf16, #tpu.memory_space<vmem>>, vector<512x128xbf16>
    %cst_75 = arith.constant dense<0.000000e+00> : vector<16x128xf32>
    %227 = tpu.matmul %225, %226, %cst_75 {dimension_numbers = #tpu.dot_dimension_numbers<[1], [0], [0], [1], [0, 0, 1, 1], [], []>} : vector<16x512xbf16>, vector<512x128xbf16>, vector<16x128xf32> -> vector<16x128xf32>
    %c0_76 = arith.constant 0 : index
    %c0_77 = arith.constant 0 : index
    %228 = vector.load %arg21[%c0_76, %c0_77] : memref<1x128xf32, #tpu.memory_space<vmem>>, vector<1x128xf32>
    %229 = vector.broadcast %228 : vector<1x128xf32> to vector<16x128xf32>
    %230 = arith.addf %227, %229 : vector<16x128xf32>
    %231 = arith.addf %230, %216 : vector<16x128xf32>
    %c0_78 = arith.constant 0 : index
    %c0_79 = arith.constant 0 : index
    %232 = vector.load %arg22[%c0_78, %c0_79] : memref<1x128xf32, #tpu.memory_space<vmem>>, vector<1x128xf32>
    %c0_80 = arith.constant 0 : index
    %c0_81 = arith.constant 0 : index
    %233 = vector.load %arg23[%c0_80, %c0_81] : memref<1x128xf32, #tpu.memory_space<vmem>>, vector<1x128xf32>
    %cst_82 = arith.constant dense<0.000000e+00> : vector<16xf32>
    %234 = vector.multi_reduction <add>, %231, %cst_82 [1] : vector<16x128xf32> to vector<16xf32>
    %235 = vector.shape_cast %234 : vector<16xf32> to vector<16x1xf32>
    %cst_83 = arith.constant 1.280000e+02 : f32
    %236 = vector.broadcast %cst_83 : f32 to vector<16x1xf32>
    %237 = arith.divf %235, %236 : vector<16x1xf32>
    %238 = vector.broadcast %237 : vector<16x1xf32> to vector<16x128xf32>
    %239 = arith.subf %231, %238 : vector<16x128xf32>
    %240 = arith.mulf %239, %239 : vector<16x128xf32>
    %cst_84 = arith.constant dense<0.000000e+00> : vector<16xf32>
    %241 = vector.multi_reduction <add>, %240, %cst_84 [1] : vector<16x128xf32> to vector<16xf32>
    %242 = vector.shape_cast %241 : vector<16xf32> to vector<16x1xf32>
    %cst_85 = arith.constant 1.280000e+02 : f32
    %243 = vector.broadcast %cst_85 : f32 to vector<16x1xf32>
    %244 = arith.divf %242, %243 : vector<16x1xf32>
    %245 = vector.broadcast %237 : vector<16x1xf32> to vector<16x128xf32>
    %246 = arith.subf %231, %245 : vector<16x128xf32>
    %cst_86 = arith.constant 9.99999974E-6 : f32
    %247 = vector.broadcast %cst_86 : f32 to vector<16x1xf32>
    %248 = arith.addf %244, %247 : vector<16x1xf32>
    %249 = math.rsqrt %248 : vector<16x1xf32>
    %250 = vector.broadcast %249 : vector<16x1xf32> to vector<16x128xf32>
    %251 = arith.mulf %246, %250 : vector<16x128xf32>
    %252 = vector.broadcast %232 : vector<1x128xf32> to vector<16x128xf32>
    %253 = arith.mulf %251, %252 : vector<16x128xf32>
    %254 = vector.broadcast %233 : vector<1x128xf32> to vector<16x128xf32>
    %255 = arith.addf %253, %254 : vector<16x128xf32>
    %256 = vector.shape_cast %255 : vector<16x128xf32> to vector<2x8x128xf32>
    %c0_87 = arith.constant 0 : index
    %c0_88 = arith.constant 0 : index
    %c0_89 = arith.constant 0 : index
    %257 = vector.load %arg24[%c0_87, %c0_88, %c0_89] : memref<2x8x128xf32, #tpu.memory_space<vmem>>, vector<2x8x128xf32>
    tpu.vector_store %arg24[%c0_87, %c0_88, %c0_89], %256 {strides = array<i32>} : memref<2x8x128xf32, #tpu.memory_space<vmem>>, vector<2x8x128xf32>,
    return
  }
}

</mosaic_0001>

<llo_original>
// kernel: tpu_custom_call.1
$region0: #{tpu_custom_call.1}
  #allocation0 [shape = 'u32[]', space=smem, size = 0x4, offset = 0x4, fixed_abs, tag = 'smem constant byte address 0x4 - core index']
  #allocation1 [shape = 'u32[144,128]{1,0:T(1,128)}', space=vmem, size = 0x12000, scoped, tag = 'internal scratch']
  %s0 = inlined_call_operand.vmem [shape: s32[2,1], index: 0, kind: input, shape index: {}]
  %s1 = inlined_call_operand.hbm [shape: f32[2,8,128], index: 1, kind: input, shape index: {}]
  %s2 = inlined_call_operand.hbm [shape: f32[2,8,128], index: 2, kind: input, shape index: {}]
  %s3 = inlined_call_operand.hbm [shape: f32[2,8,128], index: 3, kind: input, shape index: {}]
  %s4 = inlined_call_operand.hbm [shape: bf16[128,128], index: 4, kind: input, shape index: {}]
  %s5 = inlined_call_operand.hbm [shape: bf16[128,128], index: 5, kind: input, shape index: {}]
  %s6 = inlined_call_operand.hbm [shape: bf16[128,128], index: 6, kind: input, shape index: {}]
  %s7 = inlined_call_operand.hbm [shape: bf16[128,128], index: 7, kind: input, shape index: {}]
  %s8 = inlined_call_operand.vmem [shape: f32[1,128], index: 8, kind: input, shape index: {}]
  %s9 = inlined_call_operand.vmem [shape: f32[1,128], index: 9, kind: input, shape index: {}]
  %s10 = inlined_call_operand.vmem [shape: f32[1,128], index: 10, kind: input, shape index: {}]
  %s11 = inlined_call_operand.hbm [shape: bf16[128,128], index: 11, kind: input, shape index: {}]
  %s12 = inlined_call_operand.hbm [shape: bf16[128,128], index: 12, kind: input, shape index: {}]
  %s13 = inlined_call_operand.hbm [shape: bf16[128,128], index: 13, kind: input, shape index: {}]
  %s14 = inlined_call_operand.hbm [shape: bf16[128,128], index: 14, kind: input, shape index: {}]
  %s15 = inlined_call_operand.vmem [shape: f32[1,128], index: 15, kind: input, shape index: {}]
  %s16 = inlined_call_operand.vmem [shape: f32[1,128], index: 16, kind: input, shape index: {}]
  %s17 = inlined_call_operand.vmem [shape: f32[1,128], index: 17, kind: input, shape index: {}]
  %s18 = inlined_call_operand.hbm [shape: bf16[128,512], index: 18, kind: input, shape index: {}]
  %s19 = inlined_call_operand.vmem [shape: f32[1,512], index: 19, kind: input, shape index: {}]
  %s20 = inlined_call_operand.hbm [shape: bf16[512,128], index: 20, kind: input, shape index: {}]
  %s21 = inlined_call_operand.vmem [shape: f32[1,128], index: 21, kind: input, shape index: {}]
  %s22 = inlined_call_operand.vmem [shape: f32[1,128], index: 22, kind: input, shape index: {}]
  %s23 = inlined_call_operand.vmem [shape: f32[1,128], index: 23, kind: input, shape index: {}]
  %s24 = inlined_call_operand.hbm [shape: f32[2,8,128], index: 24, kind: output, shape index: {}]
  %s25 = sld [smem:[#allocation0]]
  $region158: #{tpu_custom_call.1} parent=0
    _
  %s27 = ssub.s32 1, %s25
  %s28 = scalar_select 0, %s27, %s25
  $region1: #{tpu_custom_call.1} parent=0
    #allocation2 [shape = 'u8[8192]{0}', space=vmem, size = 0x2000, scoped, tag = 'input window, operand 1, single buffered']
    #allocation3 [shape = 's32[1]{0}', space=sflag, size = 0x4, scoped, tag = 'scoped memory for tpu_custom_call.1']
    #allocation4 [shape = 's32[1]{0}', space=sflag, size = 0x4, scoped, tag = 'scoped memory for tpu_custom_call.1']
    #allocation5 [shape = 'u8[8192]{0}', space=vmem, size = 0x2000, scoped, tag = 'input window, operand 2, single buffered']
    #allocation6 [shape = 's32[1]{0}', space=sflag, size = 0x4, scoped, tag = 'scoped memory for tpu_custom_call.1']
    #allocation7 [shape = 'u8[8192]{0}', space=vmem, size = 0x2000, scoped, tag = 'input window, operand 3, single buffered']
    #allocation8 [shape = 'u8[32768]{0}', space=vmem, size = 0x8000, scoped, tag = 'input window, operand 4, single buffered']
    #allocation9 [shape = 's32[1]{0}', space=sflag, size = 0x4, scoped, tag = 'scoped memory for tpu_custom_call.1']
    #allocation10 [shape = 'u8[32768]{0}', space=vmem, size = 0x8000, scoped, tag = 'input window, operand 5, single buffered']
    #allocation11 [shape = 'u8[32768]{0}', space=vmem, size = 0x8000, scoped, tag = 'input window, operand 6, single buffered']
    #allocation12 [shape = 's32[1]{0}', space=sflag, size = 0x4, scoped, tag = 'scoped memory for tpu_custom_call.1']
    #allocation13 [shape = 'u8[32768]{0}', space=vmem, size = 0x8000, scoped, tag = 'input window, operand 7, single buffered']
    #allocation14 [shape = 'u8[32768]{0}', space=vmem, size = 0x8000, scoped, tag = 'input window, operand 11, single buffered']
    #allocation15 [shape = 's32[1]{0}', space=sflag, size = 0x4, scoped, tag = 'scoped memory for tpu_custom_call.1']
    #allocation16 [shape = 'u8[32768]{0}', space=vmem, size = 0x8000, scoped, tag = 'input window, operand 12, single buffered']
    #allocation17 [shape = 'u8[32768]{0}', space=vmem, size = 0x8000, scoped, tag = 'input window, operand 13, single buffered']
    #allocation18 [shape = 's32[1]{0}', space=sflag, size = 0x4, scoped, tag = 'scoped memory for tpu_custom_call.1']
    #allocation19 [shape = 'u8[32768]{0}', space=vmem, size = 0x8000, scoped, tag = 'input window, operand 14, single buffered']
    #allocation20 [shape = 'u8[131072]{0}', space=vmem, size = 0x20000, scoped, tag = 'input window, operand 18, single buffered']
    #allocation21 [shape = 's32[1]{0}', space=sflag, size = 0x4, scoped, tag = 'scoped memory for tpu_custom_call.1']
    #allocation22 [shape = 'u8[131072]{0}', space=vmem, size = 0x20000, scoped, tag = 'input window, operand 20, single buffered']
    #allocation23 [shape = 'u8[8192]{0}', space=vmem, size = 0x2000, scoped, tag = 'output window, operand 0, single buffered']
    %29 = vsyncpa [#allocation3], 0
    %30 = vsyncpa [#allocation6], 0
    %31 = vsyncpa [#allocation9], 0
    %32 = vsyncpa [#allocation12], 0
    %33 = vsyncpa [#allocation15], 0
    %34 = vsyncpa [#allocation18], 0
    %35 = vsyncpa [#allocation21], 0
    %36 = vsyncpa [#allocation4], 0
    // Predicated region
    $region2: #{tpu_custom_call.1} parent=1 // pred_check
      _
    $region3: #{tpu_custom_call.1} parent=1 // pred_check_branch
      %38 = sbr.rel (0) target = $region5
    $region4: #{tpu_custom_call.1} parent=1 // pred_region
      _
    $region5: #{tpu_custom_call.1} parent=1 // pred_fallthru
      _
    // Predicated region
    $region6: #{tpu_custom_call.1} parent=1 // pred_check
      _
    $region7: #{tpu_custom_call.1} parent=1 // pred_check_branch
      %40 = sbr.rel (0) target = $region9
    $region8: #{tpu_custom_call.1} parent=1 // pred_region
      %s42 = ssub.s32 256, 256
      %43 = vsyncadd [#allocation3], %s42
      %s44 = sshll.u32 [#allocation2], 4
      %s45 = int_to_ptr.vmem [resolvable:$true] %s44
      %50 = dma.hbm_to_vmem [thread:$0]  %s1, 256, %s45, [#allocation3], 128, 128, 8
    $region9: #{tpu_custom_call.1} parent=1 // pred_fallthru
      _
    // Predicated region
    $region10: #{tpu_custom_call.1} parent=1 // pred_check
      _
    $region11: #{tpu_custom_call.1} parent=1 // pred_check_branch
      %52 = sbr.rel (0) target = $region13
    $region12: #{tpu_custom_call.1} parent=1 // pred_region
      %s54 = ssub.s32 256, 256
      %55 = vsyncadd [#allocation6], %s54
      %s56 = sshll.u32 [#allocation5], 4
      %s57 = int_to_ptr.vmem [resolvable:$true] %s56
      %62 = dma.hbm_to_vmem [thread:$0]  %s2, 256, %s57, [#allocation6], 128, 128, 8
    $region13: #{tpu_custom_call.1} parent=1 // pred_fallthru
      _
    // Predicated region
    $region14: #{tpu_custom_call.1} parent=1 // pred_check
      _
    $region15: #{tpu_custom_call.1} parent=1 // pred_check_branch
      %64 = sbr.rel (0) target = $region17
    $region16: #{tpu_custom_call.1} parent=1 // pred_region
      %s66 = ssub.s32 256, 256
      %67 = vsyncadd [#allocation6], %s66
      %s68 = sshll.u32 [#allocation7], 4
      %s69 = int_to_ptr.vmem [resolvable:$true] %s68
      %74 = dma.hbm_to_vmem [thread:$0]  %s3, 256, %s69, [#allocation6], 128, 128, 8
    $region17: #{tpu_custom_call.1} parent=1 // pred_fallthru
      _
    // Predicated region
    $region18: #{tpu_custom_call.1} parent=1 // pred_check
      _
    $region19: #{tpu_custom_call.1} parent=1 // pred_check_branch
      %76 = sbr.rel (0) target = $region21
    $region20: #{tpu_custom_call.1} parent=1 // pred_region
      %s78 = ssub.s32 1024, 1024
      %79 = vsyncadd [#allocation9], %s78
      %s80 = sshll.u32 [#allocation8], 4
      %s81 = int_to_ptr.vmem [resolvable:$true] %s80
      %86 = dma.hbm_to_vmem [thread:$0]  %s4, 1024, %s81, [#allocation9], 64, 64, 4
    $region21: #{tpu_custom_call.1} parent=1 // pred_fallthru
      _
    // Predicated region
    $region22: #{tpu_custom_call.1} parent=1 // pred_check
      _
    $region23: #{tpu_custom_call.1} parent=1 // pred_check_branch
      %88 = sbr.rel (0) target = $region25
    $region24: #{tpu_custom_call.1} parent=1 // pred_region
      %s90 = ssub.s32 1024, 1024
      %91 = vsyncadd [#allocation9], %s90
      %s92 = sshll.u32 [#allocation10], 4
      %s93 = int_to_ptr.vmem [resolvable:$true] %s92
      %98 = dma.hbm_to_vmem [thread:$0]  %s5, 1024, %s93, [#allocation9], 64, 64, 4
    $region25: #{tpu_custom_call.1} parent=1 // pred_fallthru
      _
    // Predicated region
    $region26: #{tpu_custom_call.1} parent=1 // pred_check
      _
    $region27: #{tpu_custom_call.1} parent=1 // pred_check_branch
      %100 = sbr.rel (0) target = $region29
    $region28: #{tpu_custom_call.1} parent=1 // pred_region
      %s102 = ssub.s32 1024, 1024
      %103 = vsyncadd [#allocation12], %s102
      %s104 = sshll.u32 [#allocation11], 4
      %s105 = int_to_ptr.vmem [resolvable:$true] %s104
      %110 = dma.hbm_to_vmem [thread:$0]  %s6, 1024, %s105, [#allocation12], 64, 64, 4
    $region29: #{tpu_custom_call.1} parent=1 // pred_fallthru
      _
    // Predicated region
    $region30: #{tpu_custom_call.1} parent=1 // pred_check
      _
    $region31: #{tpu_custom_call.1} parent=1 // pred_check_branch
      %112 = sbr.rel (0) target = $region33
    $region32: #{tpu_custom_call.1} parent=1 // pred_region
      %s114 = ssub.s32 1024, 1024
      %115 = vsyncadd [#allocation12], %s114
      %s116 = sshll.u32 [#allocation13], 4
      %s117 = int_to_ptr.vmem [resolvable:$true] %s116
      %122 = dma.hbm_to_vmem [thread:$0]  %s7, 1024, %s117, [#allocation12], 64, 64, 4
    $region33: #{tpu_custom_call.1} parent=1 // pred_fallthru
      _
    // Predicated region
    $region34: #{tpu_custom_call.1} parent=1 // pred_check
      _
    $region35: #{tpu_custom_call.1} parent=1 // pred_check_branch
      %124 = sbr.rel (0) target = $region37
    $region36: #{tpu_custom_call.1} parent=1 // pred_region
      _
    $region37: #{tpu_custom_call.1} parent=1 // pred_fallthru
      _
    // Predicated region
    $region38: #{tpu_custom_call.1} parent=1 // pred_check
      _
    $region39: #{tpu_custom_call.1} parent=1 // pred_check_branch
      %126 = sbr.rel (0) target = $region41
    $region40: #{tpu_custom_call.1} parent=1 // pred_region
      _
    $region41: #{tpu_custom_call.1} parent=1 // pred_fallthru
      _
    // Predicated region
    $region42: #{tpu_custom_call.1} parent=1 // pred_check
      _
    $region43: #{tpu_custom_call.1} parent=1 // pred_check_branch
      %128 = sbr.rel (0) target = $region45
    $region44: #{tpu_custom_call.1} parent=1 // pred_region
      _
    $region45: #{tpu_custom_call.1} parent=1 // pred_fallthru
      _
    // Predicated region
    $region46: #{tpu_custom_call.1} parent=1 // pred_check
      _
    $region47: #{tpu_custom_call.1} parent=1 // pred_check_branch
      %130 = sbr.rel (0) target = $region49
    $region48: #{tpu_custom_call.1} parent=1 // pred_region
      %s132 = ssub.s32 1024, 1024
      %133 = vsyncadd [#allocation15], %s132
      %s134 = sshll.u32 [#allocation14], 4
      %s135 = int_to_ptr.vmem [resolvable:$true] %s134
      %140 = dma.hbm_to_vmem [thread:$0]  %s11, 1024, %s135, [#allocation15], 64, 64, 4
    $region49: #{tpu_custom_call.1} parent=1 // pred_fallthru
      _
    // Predicated region
    $region50: #{tpu_custom_call.1} parent=1 // pred_check
      _
    $region51: #{tpu_custom_call.1} parent=1 // pred_check_branch
      %142 = sbr.rel (0) target = $region53
    $region52: #{tpu_custom_call.1} parent=1 // pred_region
      %s144 = ssub.s32 1024, 1024
      %145 = vsyncadd [#allocation15], %s144
      %s146 = sshll.u32 [#allocation16], 4
      %s147 = int_to_ptr.vmem [resolvable:$true] %s146
      %152 = dma.hbm_to_vmem [thread:$0]  %s12, 1024, %s147, [#allocation15], 64, 64, 4
    $region53: #{tpu_custom_call.1} parent=1 // pred_fallthru
      _
    // Predicated region
    $region54: #{tpu_custom_call.1} parent=1 // pred_check
      _
    $region55: #{tpu_custom_call.1} parent=1 // pred_check_branch
      %154 = sbr.rel (0) target = $region57
    $region56: #{tpu_custom_call.1} parent=1 // pred_region
      %s156 = ssub.s32 1024, 1024
      %157 = vsyncadd [#allocation18], %s156
      %s158 = sshll.u32 [#allocation17], 4
      %s159 = int_to_ptr.vmem [resolvable:$true] %s158
      %164 = dma.hbm_to_vmem [thread:$0]  %s13, 1024, %s159, [#allocation18], 64, 64, 4
    $region57: #{tpu_custom_call.1} parent=1 // pred_fallthru
      _
    // Predicated region
    $region58: #{tpu_custom_call.1} parent=1 // pred_check
      _
    $region59: #{tpu_custom_call.1} parent=1 // pred_check_branch
      %166 = sbr.rel (0) target = $region61
    $region60: #{tpu_custom_call.1} parent=1 // pred_region
      %s168 = ssub.s32 1024, 1024
      %169 = vsyncadd [#allocation18], %s168
      %s170 = sshll.u32 [#allocation19], 4
      %s171 = int_to_ptr.vmem [resolvable:$true] %s170
      %176 = dma.hbm_to_vmem [thread:$0]  %s14, 1024, %s171, [#allocation18], 64, 64, 4
    $region61: #{tpu_custom_call.1} parent=1 // pred_fallthru
      _
    // Predicated region
    $region62: #{tpu_custom_call.1} parent=1 // pred_check
      _
    $region63: #{tpu_custom_call.1} parent=1 // pred_check_branch
      %178 = sbr.rel (0) target = $region65
    $region64: #{tpu_custom_call.1} parent=1 // pred_region
      _
    $region65: #{tpu_custom_call.1} parent=1 // pred_fallthru
      _
    // Predicated region
    $region66: #{tpu_custom_call.1} parent=1 // pred_check
      _
    $region67: #{tpu_custom_call.1} parent=1 // pred_check_branch
      %180 = sbr.rel (0) target = $region69
    $region68: #{tpu_custom_call.1} parent=1 // pred_region
      _
    $region69: #{tpu_custom_call.1} parent=1 // pred_fallthru
      _
    // Predicated region
    $region70: #{tpu_custom_call.1} parent=1 // pred_check
      _
    $region71: #{tpu_custom_call.1} parent=1 // pred_check_branch
      %182 = sbr.rel (0) target = $region73
    $region72: #{tpu_custom_call.1} parent=1 // pred_region
      _
    $region73: #{tpu_custom_call.1} parent=1 // pred_fallthru
      _
    // Predicated region
    $region74: #{tpu_custom_call.1} parent=1 // pred_check
      _
    $region75: #{tpu_custom_call.1} parent=1 // pred_check_branch
      %184 = sbr.rel (0) target = $region77
    $region76: #{tpu_custom_call.1} parent=1 // pred_region
      %s186 = ssub.s32 4096, 4096
      %187 = vsyncadd [#allocation21], %s186
      %s188 = sshll.u32 [#allocation20], 4
      %s189 = int_to_ptr.vmem [resolvable:$true] %s188
      %194 = dma.hbm_to_vmem [thread:$0]  %s18, 4096, %s189, [#allocation21], 256, 256, 16
    $region77: #{tpu_custom_call.1} parent=1 // pred_fallthru
      _
    // Predicated region
    $region78: #{tpu_custom_call.1} parent=1 // pred_check
      _
    $region79: #{tpu_custom_call.1} parent=1 // pred_check_branch
      %196 = sbr.rel (0) target = $region81
    $region80: #{tpu_custom_call.1} parent=1 // pred_region
      _
    $region81: #{tpu_custom_call.1} parent=1 // pred_fallthru
      _
    // Predicated region
    $region82: #{tpu_custom_call.1} parent=1 // pred_check
      _
    $region83: #{tpu_custom_call.1} parent=1 // pred_check_branch
      %198 = sbr.rel (0) target = $region85
    $region84: #{tpu_custom_call.1} parent=1 // pred_region
      %s200 = ssub.s32 4096, 4096
      %201 = vsyncadd [#allocation21], %s200
      %s202 = sshll.u32 [#allocation22], 4
      %s203 = int_to_ptr.vmem [resolvable:$true] %s202
      %208 = dma.hbm_to_vmem [thread:$0]  %s20, 4096, %s203, [#allocation21], 64, 64, 4
    $region85: #{tpu_custom_call.1} parent=1 // pred_fallthru
      _
    // Predicated region
    $region86: #{tpu_custom_call.1} parent=1 // pred_check
      _
    $region87: #{tpu_custom_call.1} parent=1 // pred_check_branch
      %210 = sbr.rel (0) target = $region89
    $region88: #{tpu_custom_call.1} parent=1 // pred_region
      _
    $region89: #{tpu_custom_call.1} parent=1 // pred_fallthru
      _
    // Predicated region
    $region90: #{tpu_custom_call.1} parent=1 // pred_check
      _
    $region91: #{tpu_custom_call.1} parent=1 // pred_check_branch
      %212 = sbr.rel (0) target = $region93
    $region92: #{tpu_custom_call.1} parent=1 // pred_region
      _
    $region93: #{tpu_custom_call.1} parent=1 // pred_fallthru
      _
    // Predicated region
    $region94: #{tpu_custom_call.1} parent=1 // pred_check
      _
    $region95: #{tpu_custom_call.1} parent=1 // pred_check_branch
      %214 = sbr.rel (0) target = $region97
    $region96: #{tpu_custom_call.1} parent=1 // pred_region
      _
    $region97: #{tpu_custom_call.1} parent=1 // pred_fallthru
      _
    // Predicated region
    $region98: #{tpu_custom_call.1} parent=1 // pred_check
      _
    $region99: #{tpu_custom_call.1} parent=1 // pred_check_branch
      %216 = sbr.rel (0) target = $region101
    $region100: #{tpu_custom_call.1} parent=1 // pred_region
      %217 = dma.done [#allocation3], 256
    $region101: #{tpu_custom_call.1} parent=1 // pred_fallthru
      _
    // Predicated region
    $region102: #{tpu_custom_call.1} parent=1 // pred_check
      _
    $region103: #{tpu_custom_call.1} parent=1 // pred_check_branch
      %219 = sbr.rel (0) target = $region105
    $region104: #{tpu_custom_call.1} parent=1 // pred_region
      %220 = dma.done [#allocation6], 256
    $region105: #{tpu_custom_call.1} parent=1 // pred_fallthru
      _
    // Predicated region
    $region106: #{tpu_custom_call.1} parent=1 // pred_check
      _
    $region107: #{tpu_custom_call.1} parent=1 // pred_check_branch
      %222 = sbr.rel (0) target = $region109
    $region108: #{tpu_custom_call.1} parent=1 // pred_region
      %223 = dma.done [#allocation6], 256
    $region109: #{tpu_custom_call.1} parent=1 // pred_fallthru
      _
    // Predicated region
    $region110: #{tpu_custom_call.1} parent=1 // pred_check
      _
    $region111: #{tpu_custom_call.1} parent=1 // pred_check_branch
      %225 = sbr.rel (0) target = $region113
    $region112: #{tpu_custom_call.1} parent=1 // pred_region
      %226 = dma.done [#allocation9], 1024
    $region113: #{tpu_custom_call.1} parent=1 // pred_fallthru
      _
    // Predicated region
    $region114: #{tpu_custom_call.1} parent=1 // pred_check
      _
    $region115: #{tpu_custom_call.1} parent=1 // pred_check_branch
      %228 = sbr.rel (0) target = $region117
    $region116: #{tpu_custom_call.1} parent=1 // pred_region
      %229 = dma.done [#allocation9], 1024
    $region117: #{tpu_custom_call.1} parent=1 // pred_fallthru
      _
    // Predicated region
    $region118: #{tpu_custom_call.1} parent=1 // pred_check
      _
    $region119: #{tpu_custom_call.1} parent=1 // pred_check_branch
      %231 = sbr.rel (0) target = $region121
    $region120: #{tpu_custom_call.1} parent=1 // pred_region
      %232 = dma.done [#allocation12], 1024
    $region121: #{tpu_custom_call.1} parent=1 // pred_fallthru
      _
    // Predicated region
    $region122: #{tpu_custom_call.1} parent=1 // pred_check
      _
    $region123: #{tpu_custom_call.1} parent=1 // pred_check_branch
      %234 = sbr.rel (0) target = $region125
    $region124: #{tpu_custom_call.1} parent=1 // pred_region
      %235 = dma.done [#allocation12], 1024
    $region125: #{tpu_custom_call.1} parent=1 // pred_fallthru
      _
    // Predicated region
    $region126: #{tpu_custom_call.1} parent=1 // pred_check
      _
    $region127: #{tpu_custom_call.1} parent=1 // pred_check_branch
      %237 = sbr.rel (0) target = $region129
    $region128: #{tpu_custom_call.1} parent=1 // pred_region
      %238 = dma.done [#allocation15], 1024
    $region129: #{tpu_custom_call.1} parent=1 // pred_fallthru
      _
    // Predicated region
    $region130: #{tpu_custom_call.1} parent=1 // pred_check
      _
    $region131: #{tpu_custom_call.1} parent=1 // pred_check_branch
      %240 = sbr.rel (0) target = $region133
    $region132: #{tpu_custom_call.1} parent=1 // pred_region
      %241 = dma.done [#allocation15], 1024
    $region133: #{tpu_custom_call.1} parent=1 // pred_fallthru
      _
    // Predicated region
    $region134: #{tpu_custom_call.1} parent=1 // pred_check
      _
    $region135: #{tpu_custom_call.1} parent=1 // pred_check_branch
      %243 = sbr.rel (0) target = $region137
    $region136: #{tpu_custom_call.1} parent=1 // pred_region
      %244 = dma.done [#allocation18], 1024
    $region137: #{tpu_custom_call.1} parent=1 // pred_fallthru
      _
    // Predicated region
    $region138: #{tpu_custom_call.1} parent=1 // pred_check
      _
    $region139: #{tpu_custom_call.1} parent=1 // pred_check_branch
      %246 = sbr.rel (0) target = $region141
    $region140: #{tpu_custom_call.1} parent=1 // pred_region
      %247 = dma.done [#allocation18], 1024
    $region141: #{tpu_custom_call.1} parent=1 // pred_fallthru
      _
    // Predicated region
    $region142: #{tpu_custom_call.1} parent=1 // pred_check
      _
    $region143: #{tpu_custom_call.1} parent=1 // pred_check_branch
      %249 = sbr.rel (0) target = $region145
    $region144: #{tpu_custom_call.1} parent=1 // pred_region
      %250 = dma.done [#allocation21], 4096
    $region145: #{tpu_custom_call.1} parent=1 // pred_fallthru
      _
    // Predicated region
    $region146: #{tpu_custom_call.1} parent=1 // pred_check
      _
    $region147: #{tpu_custom_call.1} parent=1 // pred_check_branch
      %252 = sbr.rel (0) target = $region149
    $region148: #{tpu_custom_call.1} parent=1 // pred_region
      %253 = dma.done [#allocation21], 4096
    $region149: #{tpu_custom_call.1} parent=1 // pred_fallthru
      _
    %v255 = vld [vmem:[#allocation2] sm:$0xff]
    %v256 = vld [vmem:[#allocation2 + $0x8] sm:$0xff]
    %v257 = vld [vmem:[#allocation7] sm:$0xff]
    %v258 = vld [vmem:[#allocation7 + $0x8] sm:$0xff]
    %v259 = vld [vmem:[#allocation5] sm:$0xff]
    %v260 = vld [vmem:[#allocation5 + $0x8] sm:$0xff]
    %v261 = vlaneseq
    %v262 = vshrl.u32 %v261, 7
    %v263 = vlaneseq
    %v264 = vand.u32 %v263, 127
    %vm265 = vcmp.le.s32.totalorder %v264, %v262
    %v266 = vsel %vm265, 0.0, -1e+20
    %v267 = vld [vmem:[%s0] sm:$0x3]
    %v269 = vunpack.c.l.s4 1966171168
    %v270 = vunpack.c.0.s8 %v269
    %v271 = vlaneseq
    %v272 = vshrl.u32 %v271, 7
    %v273 = vsub.s32 %v270, %v272
    %v274 = vrot.slane %v267, %v273
    %v275 = vcombine.high %v274, %v274
    %v277 = vunpack.c.l.s4 1966171168
    %v278 = vunpack.c.0.s8 %v277
    %v279 = vlaneseq
    %v280 = vshrl.u32 %v279, 7
    %v281 = vsub.s32 %v278, %v280
    %v282 = vrot.slane %v274, %v281
    %v284 = vunpack.c.l.s4 1966171168
    %v285 = vunpack.c.0.s8 %v284
    %v286 = vlaneseq
    %v287 = vshrl.u32 %v286, 7
    %v288 = vsub.s32 %v285, %v287
    %v289 = vrot.slane %v275, %v288
    %290 = vset.pattern.permute.xlu0 0
    %291 = vperm.xlu0 %290, %v282
    %v292 = vpop.permute.xlu0 %291
    %v293 = vlaneseq
    %v294 = vshrl.u32 %v293, 7
    %v295 = vsub.s32 0, %v294
    %v296 = vrot.slane %v292, %v295
    %297 = vset.pattern.permute.xlu0 0
    %298 = vperm.xlu0 %297, %v289
    %v299 = vpop.permute.xlu0 %298
    %v300 = vlaneseq
    %v301 = vshrl.u32 %v300, 7
    %v302 = vsub.s32 0, %v301
    %v303 = vrot.slane %v299, %v302
    %vm304 = vcmp.lt.s32.totalorder %v264, %v296
    %vm305 = vcmp.lt.s32.totalorder %v264, %v303
    %v306 = vsel %vm304, 0.0, -1e+20
    %v307 = vsel %vm305, 0.0, -1e+20
    %v308 = vld [vmem:[#allocation8] sm:$0xf]
    %v309 = vld [vmem:[#allocation8 + $0x4] sm:$0xf]
    %v310 = vld [vmem:[#allocation8 + $0x8] sm:$0xf]
    %v311 = vld [vmem:[#allocation8 + $0xc] sm:$0xf]
    %v312 = vld [vmem:[#allocation8 + $0x10] sm:$0xf]
    %v313 = vld [vmem:[#allocation8 + $0x14] sm:$0xf]
    %v314 = vld [vmem:[#allocation8 + $0x18] sm:$0xf]
    %v315 = vld [vmem:[#allocation8 + $0x1c] sm:$0xf]
    %v316 = vld [vmem:[#allocation8 + $0x20] sm:$0xf]
    %v317 = vld [vmem:[#allocation8 + $0x24] sm:$0xf]
    %v318 = vld [vmem:[#allocation8 + $0x28] sm:$0xf]
    %v319 = vld [vmem:[#allocation8 + $0x2c] sm:$0xf]
    %v320 = vld [vmem:[#allocation8 + $0x30] sm:$0xf]
    %v321 = vld [vmem:[#allocation8 + $0x34] sm:$0xf]
    %v322 = vld [vmem:[#allocation8 + $0x38] sm:$0xf]
    %v323 = vld [vmem:[#allocation8 + $0x3c] sm:$0xf]
    %v324 = vld [vmem:[#allocation10] sm:$0xf]
    %v325 = vld [vmem:[#allocation10 + $0x4] sm:$0xf]
    %v326 = vld [vmem:[#allocation10 + $0x8] sm:$0xf]
    %v327 = vld [vmem:[#allocation10 + $0xc] sm:$0xf]
    %v328 = vld [vmem:[#allocation10 + $0x10] sm:$0xf]
    %v329 = vld [vmem:[#allocation10 + $0x14] sm:$0xf]
    %v330 = vld [vmem:[#allocation10 + $0x18] sm:$0xf]
    %v331 = vld [vmem:[#allocation10 + $0x1c] sm:$0xf]
    %v332 = vld [vmem:[#allocation10 + $0x20] sm:$0xf]
    %v333 = vld [vmem:[#allocation10 + $0x24] sm:$0xf]
    %v334 = vld [vmem:[#allocation10 + $0x28] sm:$0xf]
    %v335 = vld [vmem:[#allocation10 + $0x2c] sm:$0xf]
    %v336 = vld [vmem:[#allocation10 + $0x30] sm:$0xf]
    %v337 = vld [vmem:[#allocation10 + $0x34] sm:$0xf]
    %v338 = vld [vmem:[#allocation10 + $0x38] sm:$0xf]
    %v339 = vld [vmem:[#allocation10 + $0x3c] sm:$0xf]
    %v340 = vld [vmem:[#allocation11] sm:$0xf]
    %v341 = vld [vmem:[#allocation11 + $0x4] sm:$0xf]
    %v342 = vld [vmem:[#allocation11 + $0x8] sm:$0xf]
    %v343 = vld [vmem:[#allocation11 + $0xc] sm:$0xf]
    %v344 = vld [vmem:[#allocation11 + $0x10] sm:$0xf]
    %v345 = vld [vmem:[#allocation11 + $0x14] sm:$0xf]
    %v346 = vld [vmem:[#allocation11 + $0x18] sm:$0xf]
    %v347 = vld [vmem:[#allocation11 + $0x1c] sm:$0xf]
    %v348 = vld [vmem:[#allocation11 + $0x20] sm:$0xf]
    %v349 = vld [vmem:[#allocation11 + $0x24] sm:$0xf]
    %v350 = vld [vmem:[#allocation11 + $0x28] sm:$0xf]
    %v351 = vld [vmem:[#allocation11 + $0x2c] sm:$0xf]
    %v352 = vld [vmem:[#allocation11 + $0x30] sm:$0xf]
    %v353 = vld [vmem:[#allocation11 + $0x34] sm:$0xf]
    %v354 = vld [vmem:[#allocation11 + $0x38] sm:$0xf]
    %v355 = vld [vmem:[#allocation11 + $0x3c] sm:$0xf]
    %v356 = vld [vmem:[#allocation13] sm:$0xf]
    %v357 = vld [vmem:[#allocation13 + $0x4] sm:$0xf]
    %v358 = vld [vmem:[#allocation13 + $0x8] sm:$0xf]
    %v359 = vld [vmem:[#allocation13 + $0xc] sm:$0xf]
    %v360 = vld [vmem:[#allocation13 + $0x10] sm:$0xf]
    %v361 = vld [vmem:[#allocation13 + $0x14] sm:$0xf]
    %v362 = vld [vmem:[#allocation13 + $0x18] sm:$0xf]
    %v363 = vld [vmem:[#allocation13 + $0x1c] sm:$0xf]
    %v364 = vld [vmem:[#allocation13 + $0x20] sm:$0xf]
    %v365 = vld [vmem:[#allocation13 + $0x24] sm:$0xf]
    %v366 = vld [vmem:[#allocation13 + $0x28] sm:$0xf]
    %v367 = vld [vmem:[#allocation13 + $0x2c] sm:$0xf]
    %v368 = vld [vmem:[#allocation13 + $0x30] sm:$0xf]
    %v369 = vld [vmem:[#allocation13 + $0x34] sm:$0xf]
    %v370 = vld [vmem:[#allocation13 + $0x38] sm:$0xf]
    %v371 = vld [vmem:[#allocation13 + $0x3c] sm:$0xf]
    %v372 = vld [vmem:[%s8] sm:$0x1]
    %v373 = vpack.c.bf16 %v256, %v255
    %v390 = vunpack.c.l.b16 %v308
    %v391 = vunpack.c.l.b16 %v309
    %v392 = vunpack.c.l.b16 %v310
    %v393 = vunpack.c.l.b16 %v311
    %v394 = vunpack.c.l.b16 %v312
    %v395 = vunpack.c.l.b16 %v313
    %v396 = vunpack.c.l.b16 %v314
    %v397 = vunpack.c.l.b16 %v315
    %v398 = vunpack.c.l.b16 %v316
    %v399 = vunpack.c.l.b16 %v317
    %v400 = vunpack.c.l.b16 %v318
    %v401 = vunpack.c.l.b16 %v319
    %v402 = vunpack.c.l.b16 %v320
    %v403 = vunpack.c.l.b16 %v321
    %v404 = vunpack.c.l.b16 %v322
    %v405 = vunpack.c.l.b16 %v323
    %v406 = vpack.c.b16 %v391, %v390
    %v407 = vpack.c.b16 %v393, %v392
    %v408 = vpack.c.b16 %v395, %v394
    %v409 = vpack.c.b16 %v397, %v396
    %v410 = vpack.c.b16 %v399, %v398
    %v411 = vpack.c.b16 %v401, %v400
    %v412 = vpack.c.b16 %v403, %v402
    %v413 = vpack.c.b16 %v405, %v404
    %422 = vmatprep.subr.bf16.mxu0 0
    %423 = vmatpush1.bf16.msra.mxu0 %v413
    %424 = vmatprep.subr.bf16.mxu0 0
    %425 = vmatpush1.bf16.msra.mxu0 %v412
    %426 = vmatprep.subr.bf16.mxu0 0
    %427 = vmatpush1.bf16.msra.mxu0 %v411
    %428 = vmatprep.subr.bf16.mxu0 0
    %429 = vmatpush1.bf16.msra.mxu0 %v410
    %430 = vmatprep.subr.bf16.mxu0 0
    %431 = vmatpush1.bf16.msra.mxu0 %v409
    %432 = vmatprep.subr.bf16.mxu0 0
    %433 = vmatpush1.bf16.msra.mxu0 %v408
    %434 = vmatprep.subr.bf16.mxu0 0
    %435 = vmatpush1.bf16.msra.mxu0 %v407
    %436 = vmatprep.subr.bf16.mxu0 0
    %437 = vmatpush1.bf16.msra.mxu0 %v406
    %438 = vmatprep.subr.bf16.mxu0 0
    %439 = vmatpush2.bf16.msra.mxu0 0
    %440 = vmatprep.subr.bf16.mxu0 0
    %441 = vmatpush2.bf16.msra.mxu0 0
    %442 = vmatprep.subr.bf16.mxu0 0
    %443 = vmatpush2.bf16.msra.mxu0 0
    %444 = vmatprep.subr.bf16.mxu0 0
    %445 = vmatpush2.bf16.msra.mxu0 0
    %446 = vmatprep.subr.bf16.mxu0 0
    %447 = vmatpush2.bf16.msra.mxu0 0
    %448 = vmatprep.subr.bf16.mxu0 0
    %449 = vmatpush2.bf16.msra.mxu0 0
    %450 = vmatprep.subr.bf16.mxu0 0
    %451 = vmatpush2.bf16.msra.mxu0 0
    %452 = vmatprep.subr.bf16.mxu0 0
    %453 = vmatpush2.bf16.msra.mxu0 0
    %454 = vmatprep.mubr.bf16.mxu0 0
    %455 = vmatmul.mubr.bf16.gmra.mxu0 %v373
    %v456 = vpop.f32.mrf.mxu0
    %v457 = vadd.f32 0.0, %v456
    %v458 = vpop.f32.mrf.mxu0
    %v459 = vpop.f32.mrf.mxu0
    %v460 = vadd.f32 0.0, %v459
    %v461 = vpop.f32.mrf.mxu0
    %462 = vdwg.mxu0
    %v479 = vunpack.c.l.b16 %v324
    %v480 = vunpack.c.l.b16 %v325
    %v481 = vunpack.c.l.b16 %v326
    %v482 = vunpack.c.l.b16 %v327
    %v483 = vunpack.c.l.b16 %v328
    %v484 = vunpack.c.l.b16 %v329
    %v485 = vunpack.c.l.b16 %v330
    %v486 = vunpack.c.l.b16 %v331
    %v487 = vunpack.c.l.b16 %v332
    %v488 = vunpack.c.l.b16 %v333
    %v489 = vunpack.c.l.b16 %v334
    %v490 = vunpack.c.l.b16 %v335
    %v491 = vunpack.c.l.b16 %v336
    %v492 = vunpack.c.l.b16 %v337
    %v493 = vunpack.c.l.b16 %v338
    %v494 = vunpack.c.l.b16 %v339
    %v495 = vpack.c.b16 %v480, %v479
    %v496 = vpack.c.b16 %v482, %v481
    %v497 = vpack.c.b16 %v484, %v483
    %v498 = vpack.c.b16 %v486, %v485
    %v499 = vpack.c.b16 %v488, %v487
    %v500 = vpack.c.b16 %v490, %v489
    %v501 = vpack.c.b16 %v492, %v491
    %v502 = vpack.c.b16 %v494, %v493
    %511 = vmatprep.subr.bf16.mxu0 0
    %512 = vmatpush1.bf16.msra.mxu0 %v502
    %513 = vmatprep.subr.bf16.mxu0 0
    %514 = vmatpush1.bf16.msra.mxu0 %v501
    %515 = vmatprep.subr.bf16.mxu0 0
    %516 = vmatpush1.bf16.msra.mxu0 %v500
    %517 = vmatprep.subr.bf16.mxu0 0
    %518 = vmatpush1.bf16.msra.mxu0 %v499
    %519 = vmatprep.subr.bf16.mxu0 0
    %520 = vmatpush1.bf16.msra.mxu0 %v498
    %521 = vmatprep.subr.bf16.mxu0 0
    %522 = vmatpush1.bf16.msra.mxu0 %v497
    %523 = vmatprep.subr.bf16.mxu0 0
    %524 = vmatpush1.bf16.msra.mxu0 %v496
    %525 = vmatprep.subr.bf16.mxu0 0
    %526 = vmatpush1.bf16.msra.mxu0 %v495
    %527 = vmatprep.subr.bf16.mxu0 0
    %528 = vmatpush2.bf16.msra.mxu0 0
    %529 = vmatprep.subr.bf16.mxu0 0
    %530 = vmatpush2.bf16.msra.mxu0 0
    %531 = vmatprep.subr.bf16.mxu0 0
    %532 = vmatpush2.bf16.msra.mxu0 0
    %533 = vmatprep.subr.bf16.mxu0 0
    %534 = vmatpush2.bf16.msra.mxu0 0
    %535 = vmatprep.subr.bf16.mxu0 0
    %536 = vmatpush2.bf16.msra.mxu0 0
    %537 = vmatprep.subr.bf16.mxu0 0
    %538 = vmatpush2.bf16.msra.mxu0 0
    %539 = vmatprep.subr.bf16.mxu0 0
    %540 = vmatpush2.bf16.msra.mxu0 0
    %541 = vmatprep.subr.bf16.mxu0 0
    %542 = vmatpush2.bf16.msra.mxu0 0
    %543 = vmatprep.mubr.bf16.mxu0 0
    %544 = vmatmul.mubr.bf16.gmra.mxu0 %v373
    %v545 = vpop.f32.mrf.mxu0
    %v546 = vadd.f32 0.0, %v545
    %v547 = vpop.f32.mrf.mxu0
    %v548 = vpop.f32.mrf.mxu0
    %v549 = vadd.f32 0.0, %v548
    %v550 = vpop.f32.mrf.mxu0
    %551 = vdwg.mxu0
    %v568 = vunpack.c.l.b16 %v340
    %v569 = vunpack.c.l.b16 %v341
    %v570 = vunpack.c.l.b16 %v342
    %v571 = vunpack.c.l.b16 %v343
    %v572 = vunpack.c.l.b16 %v344
    %v573 = vunpack.c.l.b16 %v345
    %v574 = vunpack.c.l.b16 %v346
    %v575 = vunpack.c.l.b16 %v347
    %v576 = vunpack.c.l.b16 %v348
    %v577 = vunpack.c.l.b16 %v349
    %v578 = vunpack.c.l.b16 %v350
    %v579 = vunpack.c.l.b16 %v351
    %v580 = vunpack.c.l.b16 %v352
    %v581 = vunpack.c.l.b16 %v353
    %v582 = vunpack.c.l.b16 %v354
    %v583 = vunpack.c.l.b16 %v355
    %v584 = vpack.c.b16 %v569, %v568
    %v585 = vpack.c.b16 %v571, %v570
    %v586 = vpack.c.b16 %v573, %v572
    %v587 = vpack.c.b16 %v575, %v574
    %v588 = vpack.c.b16 %v577, %v576
    %v589 = vpack.c.b16 %v579, %v578
    %v590 = vpack.c.b16 %v581, %v580
    %v591 = vpack.c.b16 %v583, %v582
    %600 = vmatprep.subr.bf16.mxu0 0
    %601 = vmatpush1.bf16.msra.mxu0 %v591
    %602 = vmatprep.subr.bf16.mxu0 0
    %603 = vmatpush1.bf16.msra.mxu0 %v590
    %604 = vmatprep.subr.bf16.mxu0 0
    %605 = vmatpush1.bf16.msra.mxu0 %v589
    %606 = vmatprep.subr.bf16.mxu0 0
    %607 = vmatpush1.bf16.msra.mxu0 %v588
    %608 = vmatprep.subr.bf16.mxu0 0
    %609 = vmatpush1.bf16.msra.mxu0 %v587
    %610 = vmatprep.subr.bf16.mxu0 0
    %611 = vmatpush1.bf16.msra.mxu0 %v586
    %612 = vmatprep.subr.bf16.mxu0 0
    %613 = vmatpush1.bf16.msra.mxu0 %v585
    %614 = vmatprep.subr.bf16.mxu0 0
    %615 = vmatpush1.bf16.msra.mxu0 %v584
    %616 = vmatprep.subr.bf16.mxu0 0
    %617 = vmatpush2.bf16.msra.mxu0 0
    %618 = vmatprep.subr.bf16.mxu0 0
    %619 = vmatpush2.bf16.msra.mxu0 0
    %620 = vmatprep.subr.bf16.mxu0 0
    %621 = vmatpush2.bf16.msra.mxu0 0
    %622 = vmatprep.subr.bf16.mxu0 0
    %623 = vmatpush2.bf16.msra.mxu0 0
    %624 = vmatprep.subr.bf16.mxu0 0
    %625 = vmatpush2.bf16.msra.mxu0 0
    %626 = vmatprep.subr.bf16.mxu0 0
    %627 = vmatpush2.bf16.msra.mxu0 0
    %628 = vmatprep.subr.bf16.mxu0 0
    %629 = vmatpush2.bf16.msra.mxu0 0
    %630 = vmatprep.subr.bf16.mxu0 0
    %631 = vmatpush2.bf16.msra.mxu0 0
    %632 = vmatprep.mubr.bf16.mxu0 0
    %633 = vmatmul.mubr.bf16.gmra.mxu0 %v373
    %v634 = vpop.f32.mrf.mxu0
    %v635 = vadd.f32 0.0, %v634
    %v636 = vpop.f32.mrf.mxu0
    %v637 = vpop.f32.mrf.mxu0
    %v638 = vadd.f32 0.0, %v637
    %v639 = vpop.f32.mrf.mxu0
    %640 = vdwg.mxu0
    %643 = vrot.lane.b32.xlu0 %v457, 96
    %v644 = vpop.permute.xlu0 %643
    %645 = vrot.lane.b32.xlu0 %v460, 96
    %v646 = vpop.permute.xlu0 %645
    %649 = vrot.lane.b32.xlu0 %v457, 64
    %v650 = vpop.permute.xlu0 %649
    %651 = vrot.lane.b32.xlu0 %v460, 64
    %v652 = vpop.permute.xlu0 %651
    %655 = vrot.lane.b32.xlu0 %v457, 32
    %v656 = vpop.permute.xlu0 %655
    %657 = vrot.lane.b32.xlu0 %v460, 32
    %v658 = vpop.permute.xlu0 %657
    %v661 = vpack.c.bf16 %v457, %v457
    %v662 = vpack.c.bf16 %v460, %v460
    %v663 = vpack.c.bf16 %v644, %v644
    %v664 = vpack.c.bf16 %v646, %v646
    %v665 = vpack.c.bf16 %v650, %v650
    %v666 = vpack.c.bf16 %v652, %v652
    %v667 = vpack.c.bf16 %v656, %v656
    %v668 = vpack.c.bf16 %v658, %v658
    %671 = vrot.lane.b32.xlu0 %v546, 96
    %v672 = vpop.permute.xlu0 %671
    %673 = vrot.lane.b32.xlu0 %v549, 96
    %v674 = vpop.permute.xlu0 %673
    %677 = vrot.lane.b32.xlu0 %v546, 64
    %v678 = vpop.permute.xlu0 %677
    %679 = vrot.lane.b32.xlu0 %v549, 64
    %v680 = vpop.permute.xlu0 %679
    %683 = vrot.lane.b32.xlu0 %v546, 32
    %v684 = vpop.permute.xlu0 %683
    %685 = vrot.lane.b32.xlu0 %v549, 32
    %v686 = vpop.permute.xlu0 %685
    %v689 = vpack.c.bf16 %v546, %v546
    %v690 = vpack.c.bf16 %v549, %v549
    %v691 = vpack.c.bf16 %v672, %v672
    %v692 = vpack.c.bf16 %v674, %v674
    %v693 = vpack.c.bf16 %v678, %v678
    %v694 = vpack.c.bf16 %v680, %v680
    %v695 = vpack.c.bf16 %v684, %v684
    %v696 = vpack.c.bf16 %v686, %v686
    %699 = vrot.lane.b32.xlu0 %v635, 96
    %v700 = vpop.permute.xlu0 %699
    %701 = vrot.lane.b32.xlu0 %v638, 96
    %v702 = vpop.permute.xlu0 %701
    %705 = vrot.lane.b32.xlu0 %v635, 64
    %v706 = vpop.permute.xlu0 %705
    %707 = vrot.lane.b32.xlu0 %v638, 64
    %v708 = vpop.permute.xlu0 %707
    %711 = vrot.lane.b32.xlu0 %v635, 32
    %v712 = vpop.permute.xlu0 %711
    %713 = vrot.lane.b32.xlu0 %v638, 32
    %v714 = vpop.permute.xlu0 %713
    %v717 = vpack.c.bf16 %v635, %v635
    %v718 = vpack.c.bf16 %v638, %v638
    %v719 = vpack.c.bf16 %v700, %v700
    %v720 = vpack.c.bf16 %v702, %v702
    %v721 = vpack.c.bf16 %v706, %v706
    %v722 = vpack.c.bf16 %v708, %v708
    %v723 = vpack.c.bf16 %v712, %v712
    %v724 = vpack.c.bf16 %v714, %v714
    %vm725 = vcmask 261120
    %v727 = vsel %vm725, %v661, 0
    %v730 = vsel %vm725, %v689, 0
    %732 = vmatprep.subr.bf16.mxu0 0
    %733 = vmatpush1.bf16.xpose.msra.mxu0 0
    %734 = vmatprep.subr.bf16.mxu0 0
    %735 = vmatpush1.bf16.xpose.msra.mxu0 0
    %736 = vmatprep.subr.bf16.mxu0 0
    %737 = vmatpush1.bf16.xpose.msra.mxu0 0
    %738 = vmatprep.subr.bf16.mxu0 0
    %739 = vmatpush1.bf16.xpose.msra.mxu0 0
    %740 = vmatprep.subr.bf16.mxu0 0
    %741 = vmatpush1.bf16.xpose.msra.mxu0 0
    %742 = vmatprep.subr.bf16.mxu0 0
    %743 = vmatpush1.bf16.xpose.msra.mxu0 0
    %744 = vmatprep.subr.bf16.mxu0 0
    %745 = vmatpush1.bf16.xpose.msra.mxu0 0
    %746 = vmatprep.subr.bf16.mxu0 0
    %747 = vmatpush1.bf16.xpose.msra.mxu0 %v730
    %748 = vmatprep.subr.bf16.mxu0 0
    %749 = vmatpush2.bf16.xpose.msra.mxu0 0
    %750 = vmatprep.subr.bf16.mxu0 0
    %751 = vmatpush2.bf16.xpose.msra.mxu0 0
    %752 = vmatprep.subr.bf16.mxu0 0
    %753 = vmatpush2.bf16.xpose.msra.mxu0 0
    %754 = vmatprep.subr.bf16.mxu0 0
    %755 = vmatpush2.bf16.xpose.msra.mxu0 0
    %756 = vmatprep.subr.bf16.mxu0 0
    %757 = vmatpush2.bf16.xpose.msra.mxu0 0
    %758 = vmatprep.subr.bf16.mxu0 0
    %759 = vmatpush2.bf16.xpose.msra.mxu0 0
    %760 = vmatprep.subr.bf16.mxu0 0
    %761 = vmatpush2.bf16.xpose.msra.mxu0 0
    %762 = vmatprep.subr.bf16.mxu0 0
    %763 = vmatpush2.bf16.xpose.msra.mxu0 0
    %764 = vmatprep.mubr.bf16.mxu0 0
    %765 = vmatmul.mubr.bf16.gmra.mxu0 %v727
    %v766 = vpop.f32.mrf.mxu0
    %v767 = vadd.f32 %v266, %v766
    %v768 = vpop.f32.mrf.mxu0
    %v769 = vpop.f32.mrf.mxu0
    %v770 = vpop.f32.mrf.mxu0
    %771 = vdwg.mxu0
    %v773 = vsel %vm725, %v662, 0
    %v776 = vsel %vm725, %v690, 0
    %778 = vmatprep.subr.bf16.mxu0 0
    %779 = vmatpush1.bf16.xpose.msra.mxu0 0
    %780 = vmatprep.subr.bf16.mxu0 0
    %781 = vmatpush1.bf16.xpose.msra.mxu0 0
    %782 = vmatprep.subr.bf16.mxu0 0
    %783 = vmatpush1.bf16.xpose.msra.mxu0 0
    %784 = vmatprep.subr.bf16.mxu0 0
    %785 = vmatpush1.bf16.xpose.msra.mxu0 0
    %786 = vmatprep.subr.bf16.mxu0 0
    %787 = vmatpush1.bf16.xpose.msra.mxu0 0
    %788 = vmatprep.subr.bf16.mxu0 0
    %789 = vmatpush1.bf16.xpose.msra.mxu0 0
    %790 = vmatprep.subr.bf16.mxu0 0
    %791 = vmatpush1.bf16.xpose.msra.mxu0 0
    %792 = vmatprep.subr.bf16.mxu0 0
    %793 = vmatpush1.bf16.xpose.msra.mxu0 %v776
    %794 = vmatprep.subr.bf16.mxu0 0
    %795 = vmatpush2.bf16.xpose.msra.mxu0 0
    %796 = vmatprep.subr.bf16.mxu0 0
    %797 = vmatpush2.bf16.xpose.msra.mxu0 0
    %798 = vmatprep.subr.bf16.mxu0 0
    %799 = vmatpush2.bf16.xpose.msra.mxu0 0
    %800 = vmatprep.subr.bf16.mxu0 0
    %801 = vmatpush2.bf16.xpose.msra.mxu0 0
    %802 = vmatprep.subr.bf16.mxu0 0
    %803 = vmatpush2.bf16.xpose.msra.mxu0 0
    %804 = vmatprep.subr.bf16.mxu0 0
    %805 = vmatpush2.bf16.xpose.msra.mxu0 0
    %806 = vmatprep.subr.bf16.mxu0 0
    %807 = vmatpush2.bf16.xpose.msra.mxu0 0
    %808 = vmatprep.subr.bf16.mxu0 0
    %809 = vmatpush2.bf16.xpose.msra.mxu0 0
    %810 = vmatprep.mubr.bf16.mxu0 0
    %811 = vmatmul.mubr.bf16.gmra.mxu0 %v773
    %v812 = vpop.f32.mrf.mxu0
    %v813 = vadd.f32 %v266, %v812
    %v814 = vpop.f32.mrf.mxu0
    %v815 = vpop.f32.mrf.mxu0
    %v816 = vpop.f32.mrf.mxu0
    %817 = vdwg.mxu0
    %v819 = vsel %vm725, %v663, 0
    %v822 = vsel %vm725, %v691, 0
    %824 = vmatprep.subr.bf16.mxu0 0
    %825 = vmatpush1.bf16.xpose.msra.mxu0 0
    %826 = vmatprep.subr.bf16.mxu0 0
    %827 = vmatpush1.bf16.xpose.msra.mxu0 0
    %828 = vmatprep.subr.bf16.mxu0 0
    %829 = vmatpush1.bf16.xpose.msra.mxu0 0
    %830 = vmatprep.subr.bf16.mxu0 0
    %831 = vmatpush1.bf16.xpose.msra.mxu0 0
    %832 = vmatprep.subr.bf16.mxu0 0
    %833 = vmatpush1.bf16.xpose.msra.mxu0 0
    %834 = vmatprep.subr.bf16.mxu0 0
    %835 = vmatpush1.bf16.xpose.msra.mxu0 0
    %836 = vmatprep.subr.bf16.mxu0 0
    %837 = vmatpush1.bf16.xpose.msra.mxu0 0
    %838 = vmatprep.subr.bf16.mxu0 0
    %839 = vmatpush1.bf16.xpose.msra.mxu0 %v822
    %840 = vmatprep.subr.bf16.mxu0 0
    %841 = vmatpush2.bf16.xpose.msra.mxu0 0
    %842 = vmatprep.subr.bf16.mxu0 0
    %843 = vmatpush2.bf16.xpose.msra.mxu0 0
    %844 = vmatprep.subr.bf16.mxu0 0
    %845 = vmatpush2.bf16.xpose.msra.mxu0 0
    %846 = vmatprep.subr.bf16.mxu0 0
    %847 = vmatpush2.bf16.xpose.msra.mxu0 0
    %848 = vmatprep.subr.bf16.mxu0 0
    %849 = vmatpush2.bf16.xpose.msra.mxu0 0
    %850 = vmatprep.subr.bf16.mxu0 0
    %851 = vmatpush2.bf16.xpose.msra.mxu0 0
    %852 = vmatprep.subr.bf16.mxu0 0
    %853 = vmatpush2.bf16.xpose.msra.mxu0 0
    %854 = vmatprep.subr.bf16.mxu0 0
    %855 = vmatpush2.bf16.xpose.msra.mxu0 0
    %856 = vmatprep.mubr.bf16.mxu0 0
    %857 = vmatmul.mubr.bf16.gmra.mxu0 %v819
    %v858 = vpop.f32.mrf.mxu0
    %v859 = vadd.f32 %v266, %v858
    %v860 = vpop.f32.mrf.mxu0
    %v861 = vpop.f32.mrf.mxu0
    %v862 = vpop.f32.mrf.mxu0
    %863 = vdwg.mxu0
    %v865 = vsel %vm725, %v664, 0
    %v868 = vsel %vm725, %v692, 0
    %870 = vmatprep.subr.bf16.mxu0 0
    %871 = vmatpush1.bf16.xpose.msra.mxu0 0
    %872 = vmatprep.subr.bf16.mxu0 0
    %873 = vmatpush1.bf16.xpose.msra.mxu0 0
    %874 = vmatprep.subr.bf16.mxu0 0
    %875 = vmatpush1.bf16.xpose.msra.mxu0 0
    %876 = vmatprep.subr.bf16.mxu0 0
    %877 = vmatpush1.bf16.xpose.msra.mxu0 0
    %878 = vmatprep.subr.bf16.mxu0 0
    %879 = vmatpush1.bf16.xpose.msra.mxu0 0
    %880 = vmatprep.subr.bf16.mxu0 0
    %881 = vmatpush1.bf16.xpose.msra.mxu0 0
    %882 = vmatprep.subr.bf16.mxu0 0
    %883 = vmatpush1.bf16.xpose.msra.mxu0 0
    %884 = vmatprep.subr.bf16.mxu0 0
    %885 = vmatpush1.bf16.xpose.msra.mxu0 %v868
    %886 = vmatprep.subr.bf16.mxu0 0
    %887 = vmatpush2.bf16.xpose.msra.mxu0 0
    %888 = vmatprep.subr.bf16.mxu0 0
    %889 = vmatpush2.bf16.xpose.msra.mxu0 0
    %890 = vmatprep.subr.bf16.mxu0 0
    %891 = vmatpush2.bf16.xpose.msra.mxu0 0
    %892 = vmatprep.subr.bf16.mxu0 0
    %893 = vmatpush2.bf16.xpose.msra.mxu0 0
    %894 = vmatprep.subr.bf16.mxu0 0
    %895 = vmatpush2.bf16.xpose.msra.mxu0 0
    %896 = vmatprep.subr.bf16.mxu0 0
    %897 = vmatpush2.bf16.xpose.msra.mxu0 0
    %898 = vmatprep.subr.bf16.mxu0 0
    %899 = vmatpush2.bf16.xpose.msra.mxu0 0
    %900 = vmatprep.subr.bf16.mxu0 0
    %901 = vmatpush2.bf16.xpose.msra.mxu0 0
    %902 = vmatprep.mubr.bf16.mxu0 0
    %903 = vmatmul.mubr.bf16.gmra.mxu0 %v865
    %v904 = vpop.f32.mrf.mxu0
    %v905 = vadd.f32 %v266, %v904
    %v906 = vpop.f32.mrf.mxu0
    %v907 = vpop.f32.mrf.mxu0
    %v908 = vpop.f32.mrf.mxu0
    %909 = vdwg.mxu0
    %v911 = vsel %vm725, %v665, 0
    %v914 = vsel %vm725, %v693, 0
    %916 = vmatprep.subr.bf16.mxu0 0
    %917 = vmatpush1.bf16.xpose.msra.mxu0 0
    %918 = vmatprep.subr.bf16.mxu0 0
    %919 = vmatpush1.bf16.xpose.msra.mxu0 0
    %920 = vmatprep.subr.bf16.mxu0 0
    %921 = vmatpush1.bf16.xpose.msra.mxu0 0
    %922 = vmatprep.subr.bf16.mxu0 0
    %923 = vmatpush1.bf16.xpose.msra.mxu0 0
    %924 = vmatprep.subr.bf16.mxu0 0
    %925 = vmatpush1.bf16.xpose.msra.mxu0 0
    %926 = vmatprep.subr.bf16.mxu0 0
    %927 = vmatpush1.bf16.xpose.msra.mxu0 0
    %928 = vmatprep.subr.bf16.mxu0 0
    %929 = vmatpush1.bf16.xpose.msra.mxu0 0
    %930 = vmatprep.subr.bf16.mxu0 0
    %931 = vmatpush1.bf16.xpose.msra.mxu0 %v914
    %932 = vmatprep.subr.bf16.mxu0 0
    %933 = vmatpush2.bf16.xpose.msra.mxu0 0
    %934 = vmatprep.subr.bf16.mxu0 0
    %935 = vmatpush2.bf16.xpose.msra.mxu0 0
    %936 = vmatprep.subr.bf16.mxu0 0
    %937 = vmatpush2.bf16.xpose.msra.mxu0 0
    %938 = vmatprep.subr.bf16.mxu0 0
    %939 = vmatpush2.bf16.xpose.msra.mxu0 0
    %940 = vmatprep.subr.bf16.mxu0 0
    %941 = vmatpush2.bf16.xpose.msra.mxu0 0
    %942 = vmatprep.subr.bf16.mxu0 0
    %943 = vmatpush2.bf16.xpose.msra.mxu0 0
    %944 = vmatprep.subr.bf16.mxu0 0
    %945 = vmatpush2.bf16.xpose.msra.mxu0 0
    %946 = vmatprep.subr.bf16.mxu0 0
    %947 = vmatpush2.bf16.xpose.msra.mxu0 0
    %948 = vmatprep.mubr.bf16.mxu0 0
    %949 = vmatmul.mubr.bf16.gmra.mxu0 %v911
    %v950 = vpop.f32.mrf.mxu0
    %v951 = vadd.f32 %v266, %v950
    %v952 = vpop.f32.mrf.mxu0
    %v953 = vpop.f32.mrf.mxu0
    %v954 = vpop.f32.mrf.mxu0
    %955 = vdwg.mxu0
    %v957 = vsel %vm725, %v666, 0
    %v960 = vsel %vm725, %v694, 0
    %962 = vmatprep.subr.bf16.mxu0 0
    %963 = vmatpush1.bf16.xpose.msra.mxu0 0
    %964 = vmatprep.subr.bf16.mxu0 0
    %965 = vmatpush1.bf16.xpose.msra.mxu0 0
    %966 = vmatprep.subr.bf16.mxu0 0
    %967 = vmatpush1.bf16.xpose.msra.mxu0 0
    %968 = vmatprep.subr.bf16.mxu0 0
    %969 = vmatpush1.bf16.xpose.msra.mxu0 0
    %970 = vmatprep.subr.bf16.mxu0 0
    %971 = vmatpush1.bf16.xpose.msra.mxu0 0
    %972 = vmatprep.subr.bf16.mxu0 0
    %973 = vmatpush1.bf16.xpose.msra.mxu0 0
    %974 = vmatprep.subr.bf16.mxu0 0
    %975 = vmatpush1.bf16.xpose.msra.mxu0 0
    %976 = vmatprep.subr.bf16.mxu0 0
    %977 = vmatpush1.bf16.xpose.msra.mxu0 %v960
    %978 = vmatprep.subr.bf16.mxu0 0
    %979 = vmatpush2.bf16.xpose.msra.mxu0 0
    %980 = vmatprep.subr.bf16.mxu0 0
    %981 = vmatpush2.bf16.xpose.msra.mxu0 0
    %982 = vmatprep.subr.bf16.mxu0 0
    %983 = vmatpush2.bf16.xpose.msra.mxu0 0
    %984 = vmatprep.subr.bf16.mxu0 0
    %985 = vmatpush2.bf16.xpose.msra.mxu0 0
    %986 = vmatprep.subr.bf16.mxu0 0
    %987 = vmatpush2.bf16.xpose.msra.mxu0 0
    %988 = vmatprep.subr.bf16.mxu0 0
    %989 = vmatpush2.bf16.xpose.msra.mxu0 0
    %990 = vmatprep.subr.bf16.mxu0 0
    %991 = vmatpush2.bf16.xpose.msra.mxu0 0
    %992 = vmatprep.subr.bf16.mxu0 0
    %993 = vmatpush2.bf16.xpose.msra.mxu0 0
    %994 = vmatprep.mubr.bf16.mxu0 0
    %995 = vmatmul.mubr.bf16.gmra.mxu0 %v957
    %v996 = vpop.f32.mrf.mxu0
    %v997 = vadd.f32 %v266, %v996
    %v998 = vpop.f32.mrf.mxu0
    %v999 = vpop.f32.mrf.mxu0
    %v1000 = vpop.f32.mrf.mxu0
    %1001 = vdwg.mxu0
    %v1003 = vsel %vm725, %v667, 0
    %v1006 = vsel %vm725, %v695, 0
    %1008 = vmatprep.subr.bf16.mxu0 0
    %1009 = vmatpush1.bf16.xpose.msra.mxu0 0
    %1010 = vmatprep.subr.bf16.mxu0 0
    %1011 = vmatpush1.bf16.xpose.msra.mxu0 0
    %1012 = vmatprep.subr.bf16.mxu0 0
    %1013 = vmatpush1.bf16.xpose.msra.mxu0 0
    %1014 = vmatprep.subr.bf16.mxu0 0
    %1015 = vmatpush1.bf16.xpose.msra.mxu0 0
    %1016 = vmatprep.subr.bf16.mxu0 0
    %1017 = vmatpush1.bf16.xpose.msra.mxu0 0
    %1018 = vmatprep.subr.bf16.mxu0 0
    %1019 = vmatpush1.bf16.xpose.msra.mxu0 0
    %1020 = vmatprep.subr.bf16.mxu0 0
    %1021 = vmatpush1.bf16.xpose.msra.mxu0 0
    %1022 = vmatprep.subr.bf16.mxu0 0
    %1023 = vmatpush1.bf16.xpose.msra.mxu0 %v1006
    %1024 = vmatprep.subr.bf16.mxu0 0
    %1025 = vmatpush2.bf16.xpose.msra.mxu0 0
    %1026 = vmatprep.subr.bf16.mxu0 0
    %1027 = vmatpush2.bf16.xpose.msra.mxu0 0
    %1028 = vmatprep.subr.bf16.mxu0 0
    %1029 = vmatpush2.bf16.xpose.msra.mxu0 0
    %1030 = vmatprep.subr.bf16.mxu0 0
    %1031 = vmatpush2.bf16.xpose.msra.mxu0 0
    %1032 = vmatprep.subr.bf16.mxu0 0
    %1033 = vmatpush2.bf16.xpose.msra.mxu0 0
    %1034 = vmatprep.subr.bf16.mxu0 0
    %1035 = vmatpush2.bf16.xpose.msra.mxu0 0
    %1036 = vmatprep.subr.bf16.mxu0 0
    %1037 = vmatpush2.bf16.xpose.msra.mxu0 0
    %1038 = vmatprep.subr.bf16.mxu0 0
    %1039 = vmatpush2.bf16.xpose.msra.mxu0 0
    %1040 = vmatprep.mubr.bf16.mxu0 0
    %1041 = vmatmul.mubr.bf16.gmra.mxu0 %v1003
    %v1042 = vpop.f32.mrf.mxu0
    %v1043 = vadd.f32 %v266, %v1042
    %v1044 = vpop.f32.mrf.mxu0
    %v1045 = vpop.f32.mrf.mxu0
    %v1046 = vpop.f32.mrf.mxu0
    %1047 = vdwg.mxu0
    %v1049 = vsel %vm725, %v668, 0
    %v1052 = vsel %vm725, %v696, 0
    %1054 = vmatprep.subr.bf16.mxu0 0
    %1055 = vmatpush1.bf16.xpose.msra.mxu0 0
    %1056 = vmatprep.subr.bf16.mxu0 0
    %1057 = vmatpush1.bf16.xpose.msra.mxu0 0
    %1058 = vmatprep.subr.bf16.mxu0 0
    %1059 = vmatpush1.bf16.xpose.msra.mxu0 0
    %1060 = vmatprep.subr.bf16.mxu0 0
    %1061 = vmatpush1.bf16.xpose.msra.mxu0 0
    %1062 = vmatprep.subr.bf16.mxu0 0
    %1063 = vmatpush1.bf16.xpose.msra.mxu0 0
    %1064 = vmatprep.subr.bf16.mxu0 0
    %1065 = vmatpush1.bf16.xpose.msra.mxu0 0
    %1066 = vmatprep.subr.bf16.mxu0 0
    %1067 = vmatpush1.bf16.xpose.msra.mxu0 0
    %1068 = vmatprep.subr.bf16.mxu0 0
    %1069 = vmatpush1.bf16.xpose.msra.mxu0 %v1052
    %1070 = vmatprep.subr.bf16.mxu0 0
    %1071 = vmatpush2.bf16.xpose.msra.mxu0 0
    %1072 = vmatprep.subr.bf16.mxu0 0
    %1073 = vmatpush2.bf16.xpose.msra.mxu0 0
    %1074 = vmatprep.subr.bf16.mxu0 0
    %1075 = vmatpush2.bf16.xpose.msra.mxu0 0
    %1076 = vmatprep.subr.bf16.mxu0 0
    %1077 = vmatpush2.bf16.xpose.msra.mxu0 0
    %1078 = vmatprep.subr.bf16.mxu0 0
    %1079 = vmatpush2.bf16.xpose.msra.mxu0 0
    %1080 = vmatprep.subr.bf16.mxu0 0
    %1081 = vmatpush2.bf16.xpose.msra.mxu0 0
    %1082 = vmatprep.subr.bf16.mxu0 0
    %1083 = vmatpush2.bf16.xpose.msra.mxu0 0
    %1084 = vmatprep.subr.bf16.mxu0 0
    %1085 = vmatpush2.bf16.xpose.msra.mxu0 0
    %1086 = vmatprep.mubr.bf16.mxu0 0
    %1087 = vmatmul.mubr.bf16.gmra.mxu0 %v1049
    %v1088 = vpop.f32.mrf.mxu0
    %v1089 = vadd.f32 %v266, %v1088
    %v1090 = vpop.f32.mrf.mxu0
    %v1091 = vpop.f32.mrf.mxu0
    %v1092 = vpop.f32.mrf.mxu0
    %1093 = vdwg.mxu0
    %vm1094 = vcmask 64512
    %v1095 = vsel %vm1094, %v767, -inf
    %1096 = vmax.xlane.f32.xlu0 %v1095
    %v1097 = vpop.xlane.xlu0 %1096
    %v1098 = vsel %vm1094, %v813, -inf
    %1099 = vmax.xlane.f32.xlu0 %v1098
    %v1100 = vpop.xlane.xlu0 %1099
    %v1101 = vsel %vm1094, %v859, -inf
    %1102 = vmax.xlane.f32.xlu0 %v1101
    %v1103 = vpop.xlane.xlu0 %1102
    %v1104 = vsel %vm1094, %v905, -inf
    %1105 = vmax.xlane.f32.xlu0 %v1104
    %v1106 = vpop.xlane.xlu0 %1105
    %v1107 = vsel %vm1094, %v951, -inf
    %1108 = vmax.xlane.f32.xlu0 %v1107
    %v1109 = vpop.xlane.xlu0 %1108
    %v1110 = vsel %vm1094, %v997, -inf
    %1111 = vmax.xlane.f32.xlu0 %v1110
    %v1112 = vpop.xlane.xlu0 %1111
    %v1113 = vsel %vm1094, %v1043, -inf
    %1114 = vmax.xlane.f32.xlu0 %v1113
    %v1115 = vpop.xlane.xlu0 %1114
    %v1116 = vsel %vm1094, %v1089, -inf
    %1117 = vmax.xlane.f32.xlu0 %v1116
    %v1118 = vpop.xlane.xlu0 %1117
    %v1119 = vsub.f32 %v767, %v1097
    %v1120 = vsub.f32 %v813, %v1100
    %v1121 = vsub.f32 %v859, %v1103
    %v1122 = vsub.f32 %v905, %v1106
    %v1123 = vsub.f32 %v951, %v1109
    %v1124 = vsub.f32 %v997, %v1112
    %v1125 = vsub.f32 %v1043, %v1115
    %v1126 = vsub.f32 %v1089, %v1118
    %v1127 = vmul.f32 %v1119, 1.442695
    %v1128 = vpow.pop %v1127
    %v1129 = vmul.f32 %v1120, 1.442695
    %v1130 = vpow.pop %v1129
    %v1131 = vmul.f32 %v1121, 1.442695
    %v1132 = vpow.pop %v1131
    %v1133 = vmul.f32 %v1122, 1.442695
    %v1134 = vpow.pop %v1133
    %v1135 = vmul.f32 %v1123, 1.442695
    %v1136 = vpow.pop %v1135
    %v1137 = vmul.f32 %v1124, 1.442695
    %v1138 = vpow.pop %v1137
    %v1139 = vmul.f32 %v1125, 1.442695
    %v1140 = vpow.pop %v1139
    %v1141 = vmul.f32 %v1126, 1.442695
    %v1142 = vpow.pop %v1141
    %v1143 = vsel %vm1094, %v1128, 0.0
    %1144 = vadd.xlane.f32.xlu0 %v1143
    %v1145 = vpop.xlane.xlu0 %1144
    %v1146 = vsel %vm1094, %v1130, 0.0
    %1147 = vadd.xlane.f32.xlu0 %v1146
    %v1148 = vpop.xlane.xlu0 %1147
    %v1149 = vsel %vm1094, %v1132, 0.0
    %1150 = vadd.xlane.f32.xlu0 %v1149
    %v1151 = vpop.xlane.xlu0 %1150
    %v1152 = vsel %vm1094, %v1134, 0.0
    %1153 = vadd.xlane.f32.xlu0 %v1152
    %v1154 = vpop.xlane.xlu0 %1153
    %v1155 = vsel %vm1094, %v1136, 0.0
    %1156 = vadd.xlane.f32.xlu0 %v1155
    %v1157 = vpop.xlane.xlu0 %1156
    %v1158 = vsel %vm1094, %v1138, 0.0
    %1159 = vadd.xlane.f32.xlu0 %v1158
    %v1160 = vpop.xlane.xlu0 %1159
    %v1161 = vsel %vm1094, %v1140, 0.0
    %1162 = vadd.xlane.f32.xlu0 %v1161
    %v1163 = vpop.xlane.xlu0 %1162
    %v1164 = vsel %vm1094, %v1142, 0.0
    %1165 = vadd.xlane.f32.xlu0 %v1164
    %v1166 = vpop.xlane.xlu0 %1165
    %v1167 = vrcp.pop %v1145
    %v1168 = vrcp.pop %v1148
    %v1169 = vrcp.pop %v1151
    %v1170 = vrcp.pop %v1154
    %v1171 = vrcp.pop %v1157
    %v1172 = vrcp.pop %v1160
    %v1173 = vrcp.pop %v1163
    %v1174 = vrcp.pop %v1166
    %v1175 = vmul.f32 %v1128, %v1167
    %v1176 = vmul.f32 %v1130, %v1168
    %v1177 = vmul.f32 %v1132, %v1169
    %v1178 = vmul.f32 %v1134, %v1170
    %v1179 = vmul.f32 %v1136, %v1171
    %v1180 = vmul.f32 %v1138, %v1172
    %v1181 = vmul.f32 %v1140, %v1173
    %v1182 = vmul.f32 %v1142, %v1174
    %v1183 = vpack.c.bf16 %v1175, %v1175
    %v1184 = vpack.c.bf16 %v1176, %v1176
    %v1185 = vpack.c.bf16 %v1177, %v1177
    %v1186 = vpack.c.bf16 %v1178, %v1178
    %v1187 = vpack.c.bf16 %v1179, %v1179
    %v1188 = vpack.c.bf16 %v1180, %v1180
    %v1189 = vpack.c.bf16 %v1181, %v1181
    %v1190 = vpack.c.bf16 %v1182, %v1182
    %v1192 = vsel %vm1094, %v1183, 0
    %vm1194 = vcmask 1043456
    %v1196 = vsel %vm1194, %v717, 0
    %1198 = vmatprep.subr.bf16.mxu0 0
    %1199 = vmatpush1.bf16.msra.mxu0 0
    %1200 = vmatprep.subr.bf16.mxu0 0
    %1201 = vmatpush1.bf16.msra.mxu0 0
    %1202 = vmatprep.subr.bf16.mxu0 0
    %1203 = vmatpush1.bf16.msra.mxu0 0
    %1204 = vmatprep.subr.bf16.mxu0 0
    %1205 = vmatpush1.bf16.msra.mxu0 0
    %1206 = vmatprep.subr.bf16.mxu0 0
    %1207 = vmatpush1.bf16.msra.mxu0 0
    %1208 = vmatprep.subr.bf16.mxu0 0
    %1209 = vmatpush1.bf16.msra.mxu0 0
    %1210 = vmatprep.subr.bf16.mxu0 0
    %1211 = vmatpush1.bf16.msra.mxu0 0
    %1212 = vmatprep.subr.bf16.mxu0 0
    %1213 = vmatpush1.bf16.msra.mxu0 %v1196
    %1214 = vmatprep.subr.bf16.mxu0 0
    %1215 = vmatpush2.bf16.msra.mxu0 0
    %1216 = vmatprep.subr.bf16.mxu0 0
    %1217 = vmatpush2.bf16.msra.mxu0 0
    %1218 = vmatprep.subr.bf16.mxu0 0
    %1219 = vmatpush2.bf16.msra.mxu0 0
    %1220 = vmatprep.subr.bf16.mxu0 0
    %1221 = vmatpush2.bf16.msra.mxu0 0
    %1222 = vmatprep.subr.bf16.mxu0 0
    %1223 = vmatpush2.bf16.msra.mxu0 0
    %1224 = vmatprep.subr.bf16.mxu0 0
    %1225 = vmatpush2.bf16.msra.mxu0 0
    %1226 = vmatprep.subr.bf16.mxu0 0
    %1227 = vmatpush2.bf16.msra.mxu0 0
    %1228 = vmatprep.subr.bf16.mxu0 0
    %1229 = vmatpush2.bf16.msra.mxu0 0
    %1230 = vmatprep.mubr.bf16.mxu0 0
    %1231 = vmatmul.mubr.bf16.gmra.mxu0 %v1192
    %v1232 = vpop.f32.mrf.mxu0
    %v1233 = vadd.f32 0.0, %v1232
    %v1234 = vpop.f32.mrf.mxu0
    %v1235 = vpop.f32.mrf.mxu0
    %v1236 = vpop.f32.mrf.mxu0
    %1237 = vdwg.mxu0
    %v1239 = vsel %vm1094, %v1184, 0
    %v1242 = vsel %vm1194, %v718, 0
    %1244 = vmatprep.subr.bf16.mxu0 0
    %1245 = vmatpush1.bf16.msra.mxu0 0
    %1246 = vmatprep.subr.bf16.mxu0 0
    %1247 = vmatpush1.bf16.msra.mxu0 0
    %1248 = vmatprep.subr.bf16.mxu0 0
    %1249 = vmatpush1.bf16.msra.mxu0 0
    %1250 = vmatprep.subr.bf16.mxu0 0
    %1251 = vmatpush1.bf16.msra.mxu0 0
    %1252 = vmatprep.subr.bf16.mxu0 0
    %1253 = vmatpush1.bf16.msra.mxu0 0
    %1254 = vmatprep.subr.bf16.mxu0 0
    %1255 = vmatpush1.bf16.msra.mxu0 0
    %1256 = vmatprep.subr.bf16.mxu0 0
    %1257 = vmatpush1.bf16.msra.mxu0 0
    %1258 = vmatprep.subr.bf16.mxu0 0
    %1259 = vmatpush1.bf16.msra.mxu0 %v1242
    %1260 = vmatprep.subr.bf16.mxu0 0
    %1261 = vmatpush2.bf16.msra.mxu0 0
    %1262 = vmatprep.subr.bf16.mxu0 0
    %1263 = vmatpush2.bf16.msra.mxu0 0
    %1264 = vmatprep.subr.bf16.mxu0 0
    %1265 = vmatpush2.bf16.msra.mxu0 0
    %1266 = vmatprep.subr.bf16.mxu0 0
    %1267 = vmatpush2.bf16.msra.mxu0 0
    %1268 = vmatprep.subr.bf16.mxu0 0
    %1269 = vmatpush2.bf16.msra.mxu0 0
    %1270 = vmatprep.subr.bf16.mxu0 0
    %1271 = vmatpush2.bf16.msra.mxu0 0
    %1272 = vmatprep.subr.bf16.mxu0 0
    %1273 = vmatpush2.bf16.msra.mxu0 0
    %1274 = vmatprep.subr.bf16.mxu0 0
    %1275 = vmatpush2.bf16.msra.mxu0 0
    %1276 = vmatprep.mubr.bf16.mxu0 0
    %1277 = vmatmul.mubr.bf16.gmra.mxu0 %v1239
    %v1278 = vpop.f32.mrf.mxu0
    %v1279 = vadd.f32 0.0, %v1278
    %v1280 = vpop.f32.mrf.mxu0
    %v1281 = vpop.f32.mrf.mxu0
    %v1282 = vpop.f32.mrf.mxu0
    %1283 = vdwg.mxu0
    %v1285 = vsel %vm1094, %v1185, 0
    %v1288 = vsel %vm1194, %v719, 0
    %1290 = vmatprep.subr.bf16.mxu0 0
    %1291 = vmatpush1.bf16.msra.mxu0 0
    %1292 = vmatprep.subr.bf16.mxu0 0
    %1293 = vmatpush1.bf16.msra.mxu0 0
    %1294 = vmatprep.subr.bf16.mxu0 0
    %1295 = vmatpush1.bf16.msra.mxu0 0
    %1296 = vmatprep.subr.bf16.mxu0 0
    %1297 = vmatpush1.bf16.msra.mxu0 0
    %1298 = vmatprep.subr.bf16.mxu0 0
    %1299 = vmatpush1.bf16.msra.mxu0 0
    %1300 = vmatprep.subr.bf16.mxu0 0
    %1301 = vmatpush1.bf16.msra.mxu0 0
    %1302 = vmatprep.subr.bf16.mxu0 0
    %1303 = vmatpush1.bf16.msra.mxu0 0
    %1304 = vmatprep.subr.bf16.mxu0 0
    %1305 = vmatpush1.bf16.msra.mxu0 %v1288
    %1306 = vmatprep.subr.bf16.mxu0 0
    %1307 = vmatpush2.bf16.msra.mxu0 0
    %1308 = vmatprep.subr.bf16.mxu0 0
    %1309 = vmatpush2.bf16.msra.mxu0 0
    %1310 = vmatprep.subr.bf16.mxu0 0
    %1311 = vmatpush2.bf16.msra.mxu0 0
    %1312 = vmatprep.subr.bf16.mxu0 0
    %1313 = vmatpush2.bf16.msra.mxu0 0
    %1314 = vmatprep.subr.bf16.mxu0 0
    %1315 = vmatpush2.bf16.msra.mxu0 0
    %1316 = vmatprep.subr.bf16.mxu0 0
    %1317 = vmatpush2.bf16.msra.mxu0 0
    %1318 = vmatprep.subr.bf16.mxu0 0
    %1319 = vmatpush2.bf16.msra.mxu0 0
    %1320 = vmatprep.subr.bf16.mxu0 0
    %1321 = vmatpush2.bf16.msra.mxu0 0
    %1322 = vmatprep.mubr.bf16.mxu0 0
    %1323 = vmatmul.mubr.bf16.gmra.mxu0 %v1285
    %v1324 = vpop.f32.mrf.mxu0
    %v1325 = vadd.f32 0.0, %v1324
    %v1326 = vpop.f32.mrf.mxu0
    %v1327 = vpop.f32.mrf.mxu0
    %v1328 = vpop.f32.mrf.mxu0
    %1329 = vdwg.mxu0
    %v1331 = vsel %vm1094, %v1186, 0
    %v1334 = vsel %vm1194, %v720, 0
    %1336 = vmatprep.subr.bf16.mxu0 0
    %1337 = vmatpush1.bf16.msra.mxu0 0
    %1338 = vmatprep.subr.bf16.mxu0 0
    %1339 = vmatpush1.bf16.msra.mxu0 0
    %1340 = vmatprep.subr.bf16.mxu0 0
    %1341 = vmatpush1.bf16.msra.mxu0 0
    %1342 = vmatprep.subr.bf16.mxu0 0
    %1343 = vmatpush1.bf16.msra.mxu0 0
    %1344 = vmatprep.subr.bf16.mxu0 0
    %1345 = vmatpush1.bf16.msra.mxu0 0
    %1346 = vmatprep.subr.bf16.mxu0 0
    %1347 = vmatpush1.bf16.msra.mxu0 0
    %1348 = vmatprep.subr.bf16.mxu0 0
    %1349 = vmatpush1.bf16.msra.mxu0 0
    %1350 = vmatprep.subr.bf16.mxu0 0
    %1351 = vmatpush1.bf16.msra.mxu0 %v1334
    %1352 = vmatprep.subr.bf16.mxu0 0
    %1353 = vmatpush2.bf16.msra.mxu0 0
    %1354 = vmatprep.subr.bf16.mxu0 0
    %1355 = vmatpush2.bf16.msra.mxu0 0
    %1356 = vmatprep.subr.bf16.mxu0 0
    %1357 = vmatpush2.bf16.msra.mxu0 0
    %1358 = vmatprep.subr.bf16.mxu0 0
    %1359 = vmatpush2.bf16.msra.mxu0 0
    %1360 = vmatprep.subr.bf16.mxu0 0
    %1361 = vmatpush2.bf16.msra.mxu0 0
    %1362 = vmatprep.subr.bf16.mxu0 0
    %1363 = vmatpush2.bf16.msra.mxu0 0
    %1364 = vmatprep.subr.bf16.mxu0 0
    %1365 = vmatpush2.bf16.msra.mxu0 0
    %1366 = vmatprep.subr.bf16.mxu0 0
    %1367 = vmatpush2.bf16.msra.mxu0 0
    %1368 = vmatprep.mubr.bf16.mxu0 0
    %1369 = vmatmul.mubr.bf16.gmra.mxu0 %v1331
    %v1370 = vpop.f32.mrf.mxu0
    %v1371 = vadd.f32 0.0, %v1370
    %v1372 = vpop.f32.mrf.mxu0
    %v1373 = vpop.f32.mrf.mxu0
    %v1374 = vpop.f32.mrf.mxu0
    %1375 = vdwg.mxu0
    %v1377 = vsel %vm1094, %v1187, 0
    %v1380 = vsel %vm1194, %v721, 0
    %1382 = vmatprep.subr.bf16.mxu0 0
    %1383 = vmatpush1.bf16.msra.mxu0 0
    %1384 = vmatprep.subr.bf16.mxu0 0
    %1385 = vmatpush1.bf16.msra.mxu0 0
    %1386 = vmatprep.subr.bf16.mxu0 0
    %1387 = vmatpush1.bf16.msra.mxu0 0
    %1388 = vmatprep.subr.bf16.mxu0 0
    %1389 = vmatpush1.bf16.msra.mxu0 0
    %1390 = vmatprep.subr.bf16.mxu0 0
    %1391 = vmatpush1.bf16.msra.mxu0 0
    %1392 = vmatprep.subr.bf16.mxu0 0
    %1393 = vmatpush1.bf16.msra.mxu0 0
    %1394 = vmatprep.subr.bf16.mxu0 0
    %1395 = vmatpush1.bf16.msra.mxu0 0
    %1396 = vmatprep.subr.bf16.mxu0 0
    %1397 = vmatpush1.bf16.msra.mxu0 %v1380
    %1398 = vmatprep.subr.bf16.mxu0 0
    %1399 = vmatpush2.bf16.msra.mxu0 0
    %1400 = vmatprep.subr.bf16.mxu0 0
    %1401 = vmatpush2.bf16.msra.mxu0 0
    %1402 = vmatprep.subr.bf16.mxu0 0
    %1403 = vmatpush2.bf16.msra.mxu0 0
    %1404 = vmatprep.subr.bf16.mxu0 0
    %1405 = vmatpush2.bf16.msra.mxu0 0
    %1406 = vmatprep.subr.bf16.mxu0 0
    %1407 = vmatpush2.bf16.msra.mxu0 0
    %1408 = vmatprep.subr.bf16.mxu0 0
    %1409 = vmatpush2.bf16.msra.mxu0 0
    %1410 = vmatprep.subr.bf16.mxu0 0
    %1411 = vmatpush2.bf16.msra.mxu0 0
    %1412 = vmatprep.subr.bf16.mxu0 0
    %1413 = vmatpush2.bf16.msra.mxu0 0
    %1414 = vmatprep.mubr.bf16.mxu0 0
    %1415 = vmatmul.mubr.bf16.gmra.mxu0 %v1377
    %v1416 = vpop.f32.mrf.mxu0
    %v1417 = vadd.f32 0.0, %v1416
    %v1418 = vpop.f32.mrf.mxu0
    %v1419 = vpop.f32.mrf.mxu0
    %v1420 = vpop.f32.mrf.mxu0
    %1421 = vdwg.mxu0
    %v1423 = vsel %vm1094, %v1188, 0
    %v1426 = vsel %vm1194, %v722, 0
    %1428 = vmatprep.subr.bf16.mxu0 0
    %1429 = vmatpush1.bf16.msra.mxu0 0
    %1430 = vmatprep.subr.bf16.mxu0 0
    %1431 = vmatpush1.bf16.msra.mxu0 0
    %1432 = vmatprep.subr.bf16.mxu0 0
    %1433 = vmatpush1.bf16.msra.mxu0 0
    %1434 = vmatprep.subr.bf16.mxu0 0
    %1435 = vmatpush1.bf16.msra.mxu0 0
    %1436 = vmatprep.subr.bf16.mxu0 0
    %1437 = vmatpush1.bf16.msra.mxu0 0
    %1438 = vmatprep.subr.bf16.mxu0 0
    %1439 = vmatpush1.bf16.msra.mxu0 0
    %1440 = vmatprep.subr.bf16.mxu0 0
    %1441 = vmatpush1.bf16.msra.mxu0 0
    %1442 = vmatprep.subr.bf16.mxu0 0
    %1443 = vmatpush1.bf16.msra.mxu0 %v1426
    %1444 = vmatprep.subr.bf16.mxu0 0
    %1445 = vmatpush2.bf16.msra.mxu0 0
    %1446 = vmatprep.subr.bf16.mxu0 0
    %1447 = vmatpush2.bf16.msra.mxu0 0
    %1448 = vmatprep.subr.bf16.mxu0 0
    %1449 = vmatpush2.bf16.msra.mxu0 0
    %1450 = vmatprep.subr.bf16.mxu0 0
    %1451 = vmatpush2.bf16.msra.mxu0 0
    %1452 = vmatprep.subr.bf16.mxu0 0
    %1453 = vmatpush2.bf16.msra.mxu0 0
    %1454 = vmatprep.subr.bf16.mxu0 0
    %1455 = vmatpush2.bf16.msra.mxu0 0
    %1456 = vmatprep.subr.bf16.mxu0 0
    %1457 = vmatpush2.bf16.msra.mxu0 0
    %1458 = vmatprep.subr.bf16.mxu0 0
    %1459 = vmatpush2.bf16.msra.mxu0 0
    %1460 = vmatprep.mubr.bf16.mxu0 0
    %1461 = vmatmul.mubr.bf16.gmra.mxu0 %v1423
    %v1462 = vpop.f32.mrf.mxu0
    %v1463 = vadd.f32 0.0, %v1462
    %v1464 = vpop.f32.mrf.mxu0
    %v1465 = vpop.f32.mrf.mxu0
    %v1466 = vpop.f32.mrf.mxu0
    %1467 = vdwg.mxu0
    %v1469 = vsel %vm1094, %v1189, 0
    %v1472 = vsel %vm1194, %v723, 0
    %1474 = vmatprep.subr.bf16.mxu0 0
    %1475 = vmatpush1.bf16.msra.mxu0 0
    %1476 = vmatprep.subr.bf16.mxu0 0
    %1477 = vmatpush1.bf16.msra.mxu0 0
    %1478 = vmatprep.subr.bf16.mxu0 0
    %1479 = vmatpush1.bf16.msra.mxu0 0
    %1480 = vmatprep.subr.bf16.mxu0 0
    %1481 = vmatpush1.bf16.msra.mxu0 0
    %1482 = vmatprep.subr.bf16.mxu0 0
    %1483 = vmatpush1.bf16.msra.mxu0 0
    %1484 = vmatprep.subr.bf16.mxu0 0
    %1485 = vmatpush1.bf16.msra.mxu0 0
    %1486 = vmatprep.subr.bf16.mxu0 0
    %1487 = vmatpush1.bf16.msra.mxu0 0
    %1488 = vmatprep.subr.bf16.mxu0 0
    %1489 = vmatpush1.bf16.msra.mxu0 %v1472
    %1490 = vmatprep.subr.bf16.mxu0 0
    %1491 = vmatpush2.bf16.msra.mxu0 0
    %1492 = vmatprep.subr.bf16.mxu0 0
    %1493 = vmatpush2.bf16.msra.mxu0 0
    %1494 = vmatprep.subr.bf16.mxu0 0
    %1495 = vmatpush2.bf16.msra.mxu0 0
    %1496 = vmatprep.subr.bf16.mxu0 0
    %1497 = vmatpush2.bf16.msra.mxu0 0
    %1498 = vmatprep.subr.bf16.mxu0 0
    %1499 = vmatpush2.bf16.msra.mxu0 0
    %1500 = vmatprep.subr.bf16.mxu0 0
    %1501 = vmatpush2.bf16.msra.mxu0 0
    %1502 = vmatprep.subr.bf16.mxu0 0
    %1503 = vmatpush2.bf16.msra.mxu0 0
    %1504 = vmatprep.subr.bf16.mxu0 0
    %1505 = vmatpush2.bf16.msra.mxu0 0
    %1506 = vmatprep.mubr.bf16.mxu0 0
    %1507 = vmatmul.mubr.bf16.gmra.mxu0 %v1469
    %v1508 = vpop.f32.mrf.mxu0
    %v1509 = vadd.f32 0.0, %v1508
    %v1510 = vpop.f32.mrf.mxu0
    %v1511 = vpop.f32.mrf.mxu0
    %v1512 = vpop.f32.mrf.mxu0
    %1513 = vdwg.mxu0
    %v1515 = vsel %vm1094, %v1190, 0
    %v1518 = vsel %vm1194, %v724, 0
    %1520 = vmatprep.subr.bf16.mxu0 0
    %1521 = vmatpush1.bf16.msra.mxu0 0
    %1522 = vmatprep.subr.bf16.mxu0 0
    %1523 = vmatpush1.bf16.msra.mxu0 0
    %1524 = vmatprep.subr.bf16.mxu0 0
    %1525 = vmatpush1.bf16.msra.mxu0 0
    %1526 = vmatprep.subr.bf16.mxu0 0
    %1527 = vmatpush1.bf16.msra.mxu0 0
    %1528 = vmatprep.subr.bf16.mxu0 0
    %1529 = vmatpush1.bf16.msra.mxu0 0
    %1530 = vmatprep.subr.bf16.mxu0 0
    %1531 = vmatpush1.bf16.msra.mxu0 0
    %1532 = vmatprep.subr.bf16.mxu0 0
    %1533 = vmatpush1.bf16.msra.mxu0 0
    %1534 = vmatprep.subr.bf16.mxu0 0
    %1535 = vmatpush1.bf16.msra.mxu0 %v1518
    %1536 = vmatprep.subr.bf16.mxu0 0
    %1537 = vmatpush2.bf16.msra.mxu0 0
    %1538 = vmatprep.subr.bf16.mxu0 0
    %1539 = vmatpush2.bf16.msra.mxu0 0
    %1540 = vmatprep.subr.bf16.mxu0 0
    %1541 = vmatpush2.bf16.msra.mxu0 0
    %1542 = vmatprep.subr.bf16.mxu0 0
    %1543 = vmatpush2.bf16.msra.mxu0 0
    %1544 = vmatprep.subr.bf16.mxu0 0
    %1545 = vmatpush2.bf16.msra.mxu0 0
    %1546 = vmatprep.subr.bf16.mxu0 0
    %1547 = vmatpush2.bf16.msra.mxu0 0
    %1548 = vmatprep.subr.bf16.mxu0 0
    %1549 = vmatpush2.bf16.msra.mxu0 0
    %1550 = vmatprep.subr.bf16.mxu0 0
    %1551 = vmatpush2.bf16.msra.mxu0 0
    %1552 = vmatprep.mubr.bf16.mxu0 0
    %1553 = vmatmul.mubr.bf16.gmra.mxu0 %v1515
    %v1554 = vpop.f32.mrf.mxu0
    %v1555 = vadd.f32 0.0, %v1554
    %v1556 = vpop.f32.mrf.mxu0
    %v1557 = vpop.f32.mrf.mxu0
    %v1558 = vpop.f32.mrf.mxu0
    %1559 = vdwg.mxu0
    %1562 = vrot.lane.b32.xlu0 %v1325, 32
    %v1563 = vpop.permute.xlu0 %1562
    %1564 = vrot.lane.b32.xlu0 %v1371, 32
    %v1565 = vpop.permute.xlu0 %1564
    %1570 = vrot.lane.b32.xlu0 %v1417, 64
    %v1571 = vpop.permute.xlu0 %1570
    %1572 = vrot.lane.b32.xlu0 %v1463, 64
    %v1573 = vpop.permute.xlu0 %1572
    %1578 = vrot.lane.b32.xlu0 %v1509, 96
    %v1579 = vpop.permute.xlu0 %1578
    %1580 = vrot.lane.b32.xlu0 %v1555, 96
    %v1581 = vpop.permute.xlu0 %1580
    %v1584 = vsel %vm725, %v1233, %v1563
    %v1585 = vsel %vm725, %v1279, %v1565
    %vm1586 = vcmask 523264
    %v1587 = vsel %vm1586, %v1584, %v1571
    %v1588 = vsel %vm1586, %v1585, %v1573
    %vm1589 = vcmask 785408
    %v1590 = vsel %vm1589, %v1587, %v1579
    %v1591 = vsel %vm1589, %v1588, %v1581
    %v1592 = vpack.c.bf16 %v1591, %v1590
    %v1594 = vlaneseq
    %v1595 = vshrl.u32 %v1594, 7
    %v1596 = vsub.s32 0, %v1595
    %v1597 = vrot.slane %v372, %v1596
    %v1615 = vunpack.c.l.b16 %v356
    %v1616 = vunpack.c.l.b16 %v357
    %v1617 = vunpack.c.l.b16 %v358
    %v1618 = vunpack.c.l.b16 %v359
    %v1619 = vunpack.c.l.b16 %v360
    %v1620 = vunpack.c.l.b16 %v361
    %v1621 = vunpack.c.l.b16 %v362
    %v1622 = vunpack.c.l.b16 %v363
    %v1623 = vunpack.c.l.b16 %v364
    %v1624 = vunpack.c.l.b16 %v365
    %v1625 = vunpack.c.l.b16 %v366
    %v1626 = vunpack.c.l.b16 %v367
    %v1627 = vunpack.c.l.b16 %v368
    %v1628 = vunpack.c.l.b16 %v369
    %v1629 = vunpack.c.l.b16 %v370
    %v1630 = vunpack.c.l.b16 %v371
    %v1631 = vpack.c.b16 %v1616, %v1615
    %v1632 = vpack.c.b16 %v1618, %v1617
    %v1633 = vpack.c.b16 %v1620, %v1619
    %v1634 = vpack.c.b16 %v1622, %v1621
    %v1635 = vpack.c.b16 %v1624, %v1623
    %v1636 = vpack.c.b16 %v1626, %v1625
    %v1637 = vpack.c.b16 %v1628, %v1627
    %v1638 = vpack.c.b16 %v1630, %v1629
    %1647 = vmatprep.subr.bf16.mxu0 0
    %1648 = vmatpush1.bf16.msra.mxu0 %v1638
    %1649 = vmatprep.subr.bf16.mxu0 0
    %1650 = vmatpush1.bf16.msra.mxu0 %v1637
    %1651 = vmatprep.subr.bf16.mxu0 0
    %1652 = vmatpush1.bf16.msra.mxu0 %v1636
    %1653 = vmatprep.subr.bf16.mxu0 0
    %1654 = vmatpush1.bf16.msra.mxu0 %v1635
    %1655 = vmatprep.subr.bf16.mxu0 0
    %1656 = vmatpush1.bf16.msra.mxu0 %v1634
    %1657 = vmatprep.subr.bf16.mxu0 0
    %1658 = vmatpush1.bf16.msra.mxu0 %v1633
    %1659 = vmatprep.subr.bf16.mxu0 0
    %1660 = vmatpush1.bf16.msra.mxu0 %v1632
    %1661 = vmatprep.subr.bf16.mxu0 0
    %1662 = vmatpush1.bf16.msra.mxu0 %v1631
    %1663 = vmatprep.subr.bf16.mxu0 0
    %1664 = vmatpush2.bf16.msra.mxu0 0
    %1665 = vmatprep.subr.bf16.mxu0 0
    %1666 = vmatpush2.bf16.msra.mxu0 0
    %1667 = vmatprep.subr.bf16.mxu0 0
    %1668 = vmatpush2.bf16.msra.mxu0 0
    %1669 = vmatprep.subr.bf16.mxu0 0
    %1670 = vmatpush2.bf16.msra.mxu0 0
    %1671 = vmatprep.subr.bf16.mxu0 0
    %1672 = vmatpush2.bf16.msra.mxu0 0
    %1673 = vmatprep.subr.bf16.mxu0 0
    %1674 = vmatpush2.bf16.msra.mxu0 0
    %1675 = vmatprep.subr.bf16.mxu0 0
    %1676 = vmatpush2.bf16.msra.mxu0 0
    %1677 = vmatprep.subr.bf16.mxu0 0
    %1678 = vmatpush2.bf16.msra.mxu0 0
    %1679 = vmatprep.mubr.bf16.mxu0 0
    %1680 = vmatmul.mubr.bf16.gmra.mxu0 %v1592
    %v1681 = vpop.f32.mrf.mxu0
    %v1682 = vadd.f32 %v1597, %v1681
    %v1683 = vpop.f32.mrf.mxu0
    %v1684 = vpop.f32.mrf.mxu0
    %v1685 = vadd.f32 %v1597, %v1684
    %v1686 = vpop.f32.mrf.mxu0
    %1687 = vdwg.mxu0
    %v1688 = vadd.f32 %v1682, %v255
    %v1689 = vadd.f32 %v1685, %v256
    %v1690 = vld [vmem:[%s9] sm:$0x1]
    %v1691 = vld [vmem:[%s10] sm:$0x1]
    %1692 = vadd.xlane.f32.xlu0 %v1688
    %v1693 = vpop.xlane.xlu0 %1692
    %1694 = vadd.xlane.f32.xlu0 %v1689
    %v1695 = vpop.xlane.xlu0 %1694
    %v1696 = vrcp.pop 128.0
    %v1697 = vmul.f32 %v1693, %v1696
    %v1698 = vmul.f32 %v1695, %v1696
    %v1699 = vsub.f32 %v1688, %v1697
    %v1700 = vsub.f32 %v1689, %v1698
    %v1701 = vmul.f32 %v1699, %v1699
    %v1702 = vmul.f32 %v1700, %v1700
    %1703 = vadd.xlane.f32.xlu0 %v1701
    %v1704 = vpop.xlane.xlu0 %1703
    %1705 = vadd.xlane.f32.xlu0 %v1702
    %v1706 = vpop.xlane.xlu0 %1705
    %v1707 = vmul.f32 %v1704, %v1696
    %v1708 = vmul.f32 %v1706, %v1696
    %v1709 = vadd.f32 %v1707, 1e-05
    %v1710 = vadd.f32 %v1708, 1e-05
    %v1711 = vrsqrt.pop %v1709
    %v1712 = vrsqrt.pop %v1710
    %v1713 = vmul.f32 %v1699, %v1711
    %v1714 = vmul.f32 %v1700, %v1712
    %v1716 = vlaneseq
    %v1717 = vshrl.u32 %v1716, 7
    %v1718 = vsub.s32 0, %v1717
    %v1719 = vrot.slane %v1690, %v1718
    %v1721 = vmul.f32 %v1713, %v1719
    %v1722 = vmul.f32 %v1714, %v1719
    %v1724 = vlaneseq
    %v1725 = vshrl.u32 %v1724, 7
    %v1726 = vsub.s32 0, %v1725
    %v1727 = vrot.slane %v1691, %v1726
    %v1729 = vadd.f32 %v1721, %v1727
    %v1730 = vadd.f32 %v1722, %v1727
    %v1731 = vld [vmem:[#allocation14] sm:$0xf]
    %v1732 = vld [vmem:[#allocation14 + $0x4] sm:$0xf]
    %v1733 = vld [vmem:[#allocation14 + $0x8] sm:$0xf]
    %v1734 = vld [vmem:[#allocation14 + $0xc] sm:$0xf]
    %v1735 = vld [vmem:[#allocation14 + $0x10] sm:$0xf]
    %v1736 = vld [vmem:[#allocation14 + $0x14] sm:$0xf]
    %v1737 = vld [vmem:[#allocation14 + $0x18] sm:$0xf]
    %v1738 = vld [vmem:[#allocation14 + $0x1c] sm:$0xf]
    %v1739 = vld [vmem:[#allocation14 + $0x20] sm:$0xf]
    %v1740 = vld [vmem:[#allocation14 + $0x24] sm:$0xf]
    %v1741 = vld [vmem:[#allocation14 + $0x28] sm:$0xf]
    %v1742 = vld [vmem:[#allocation14 + $0x2c] sm:$0xf]
    %v1743 = vld [vmem:[#allocation14 + $0x30] sm:$0xf]
    %v1744 = vld [vmem:[#allocation14 + $0x34] sm:$0xf]
    %v1745 = vld [vmem:[#allocation14 + $0x38] sm:$0xf]
    %v1746 = vld [vmem:[#allocation14 + $0x3c] sm:$0xf]
    %v1747 = vld [vmem:[#allocation16] sm:$0xf]
    %v1748 = vld [vmem:[#allocation16 + $0x4] sm:$0xf]
    %v1749 = vld [vmem:[#allocation16 + $0x8] sm:$0xf]
    %v1750 = vld [vmem:[#allocation16 + $0xc] sm:$0xf]
    %v1751 = vld [vmem:[#allocation16 + $0x10] sm:$0xf]
    %v1752 = vld [vmem:[#allocation16 + $0x14] sm:$0xf]
    %v1753 = vld [vmem:[#allocation16 + $0x18] sm:$0xf]
    %v1754 = vld [vmem:[#allocation16 + $0x1c] sm:$0xf]
    %v1755 = vld [vmem:[#allocation16 + $0x20] sm:$0xf]
    %v1756 = vld [vmem:[#allocation16 + $0x24] sm:$0xf]
    %v1757 = vld [vmem:[#allocation16 + $0x28] sm:$0xf]
    %v1758 = vld [vmem:[#allocation16 + $0x2c] sm:$0xf]
    %v1759 = vld [vmem:[#allocation16 + $0x30] sm:$0xf]
    %v1760 = vld [vmem:[#allocation16 + $0x34] sm:$0xf]
    %v1761 = vld [vmem:[#allocation16 + $0x38] sm:$0xf]
    %v1762 = vld [vmem:[#allocation16 + $0x3c] sm:$0xf]
    %v1763 = vld [vmem:[#allocation17] sm:$0xf]
    %v1764 = vld [vmem:[#allocation17 + $0x4] sm:$0xf]
    %v1765 = vld [vmem:[#allocation17 + $0x8] sm:$0xf]
    %v1766 = vld [vmem:[#allocation17 + $0xc] sm:$0xf]
    %v1767 = vld [vmem:[#allocation17 + $0x10] sm:$0xf]
    %v1768 = vld [vmem:[#allocation17 + $0x14] sm:$0xf]
    %v1769 = vld [vmem:[#allocation17 + $0x18] sm:$0xf]
    %v1770 = vld [vmem:[#allocation17 + $0x1c] sm:$0xf]
    %v1771 = vld [vmem:[#allocation17 + $0x20] sm:$0xf]
    %v1772 = vld [vmem:[#allocation17 + $0x24] sm:$0xf]
    %v1773 = vld [vmem:[#allocation17 + $0x28] sm:$0xf]
    %v1774 = vld [vmem:[#allocation17 + $0x2c] sm:$0xf]
    %v1775 = vld [vmem:[#allocation17 + $0x30] sm:$0xf]
    %v1776 = vld [vmem:[#allocation17 + $0x34] sm:$0xf]
    %v1777 = vld [vmem:[#allocation17 + $0x38] sm:$0xf]
    %v1778 = vld [vmem:[#allocation17 + $0x3c] sm:$0xf]
    %v1779 = vld [vmem:[#allocation19] sm:$0xf]
    %v1780 = vld [vmem:[#allocation19 + $0x4] sm:$0xf]
    %v1781 = vld [vmem:[#allocation19 + $0x8] sm:$0xf]
    %v1782 = vld [vmem:[#allocation19 + $0xc] sm:$0xf]
    %v1783 = vld [vmem:[#allocation19 + $0x10] sm:$0xf]
    %v1784 = vld [vmem:[#allocation19 + $0x14] sm:$0xf]
    %v1785 = vld [vmem:[#allocation19 + $0x18] sm:$0xf]
    %v1786 = vld [vmem:[#allocation19 + $0x1c] sm:$0xf]
    %v1787 = vld [vmem:[#allocation19 + $0x20] sm:$0xf]
    %v1788 = vld [vmem:[#allocation19 + $0x24] sm:$0xf]
    %v1789 = vld [vmem:[#allocation19 + $0x28] sm:$0xf]
    %v1790 = vld [vmem:[#allocation19 + $0x2c] sm:$0xf]
    %v1791 = vld [vmem:[#allocation19 + $0x30] sm:$0xf]
    %v1792 = vld [vmem:[#allocation19 + $0x34] sm:$0xf]
    %v1793 = vld [vmem:[#allocation19 + $0x38] sm:$0xf]
    %v1794 = vld [vmem:[#allocation19 + $0x3c] sm:$0xf]
    %v1795 = vld [vmem:[%s15] sm:$0x1]
    %v1796 = vpack.c.bf16 %v1730, %v1729
    %v1813 = vunpack.c.l.b16 %v1731
    %v1814 = vunpack.c.l.b16 %v1732
    %v1815 = vunpack.c.l.b16 %v1733
    %v1816 = vunpack.c.l.b16 %v1734
    %v1817 = vunpack.c.l.b16 %v1735
    %v1818 = vunpack.c.l.b16 %v1736
    %v1819 = vunpack.c.l.b16 %v1737
    %v1820 = vunpack.c.l.b16 %v1738
    %v1821 = vunpack.c.l.b16 %v1739
    %v1822 = vunpack.c.l.b16 %v1740
    %v1823 = vunpack.c.l.b16 %v1741
    %v1824 = vunpack.c.l.b16 %v1742
    %v1825 = vunpack.c.l.b16 %v1743
    %v1826 = vunpack.c.l.b16 %v1744
    %v1827 = vunpack.c.l.b16 %v1745
    %v1828 = vunpack.c.l.b16 %v1746
    %v1829 = vpack.c.b16 %v1814, %v1813
    %v1830 = vpack.c.b16 %v1816, %v1815
    %v1831 = vpack.c.b16 %v1818, %v1817
    %v1832 = vpack.c.b16 %v1820, %v1819
    %v1833 = vpack.c.b16 %v1822, %v1821
    %v1834 = vpack.c.b16 %v1824, %v1823
    %v1835 = vpack.c.b16 %v1826, %v1825
    %v1836 = vpack.c.b16 %v1828, %v1827
    %1845 = vmatprep.subr.bf16.mxu0 0
    %1846 = vmatpush1.bf16.msra.mxu0 %v1836
    %1847 = vmatprep.subr.bf16.mxu0 0
    %1848 = vmatpush1.bf16.msra.mxu0 %v1835
    %1849 = vmatprep.subr.bf16.mxu0 0
    %1850 = vmatpush1.bf16.msra.mxu0 %v1834
    %1851 = vmatprep.subr.bf16.mxu0 0
    %1852 = vmatpush1.bf16.msra.mxu0 %v1833
    %1853 = vmatprep.subr.bf16.mxu0 0
    %1854 = vmatpush1.bf16.msra.mxu0 %v1832
    %1855 = vmatprep.subr.bf16.mxu0 0
    %1856 = vmatpush1.bf16.msra.mxu0 %v1831
    %1857 = vmatprep.subr.bf16.mxu0 0
    %1858 = vmatpush1.bf16.msra.mxu0 %v1830
    %1859 = vmatprep.subr.bf16.mxu0 0
    %1860 = vmatpush1.bf16.msra.mxu0 %v1829
    %1861 = vmatprep.subr.bf16.mxu0 0
    %1862 = vmatpush2.bf16.msra.mxu0 0
    %1863 = vmatprep.subr.bf16.mxu0 0
    %1864 = vmatpush2.bf16.msra.mxu0 0
    %1865 = vmatprep.subr.bf16.mxu0 0
    %1866 = vmatpush2.bf16.msra.mxu0 0
    %1867 = vmatprep.subr.bf16.mxu0 0
    %1868 = vmatpush2.bf16.msra.mxu0 0
    %1869 = vmatprep.subr.bf16.mxu0 0
    %1870 = vmatpush2.bf16.msra.mxu0 0
    %1871 = vmatprep.subr.bf16.mxu0 0
    %1872 = vmatpush2.bf16.msra.mxu0 0
    %1873 = vmatprep.subr.bf16.mxu0 0
    %1874 = vmatpush2.bf16.msra.mxu0 0
    %1875 = vmatprep.subr.bf16.mxu0 0
    %1876 = vmatpush2.bf16.msra.mxu0 0
    %1877 = vmatprep.mubr.bf16.mxu0 0
    %1878 = vmatmul.mubr.bf16.gmra.mxu0 %v1796
    %v1879 = vpop.f32.mrf.mxu0
    %v1880 = vadd.f32 0.0, %v1879
    %v1881 = vpop.f32.mrf.mxu0
    %v1882 = vpop.f32.mrf.mxu0
    %v1883 = vadd.f32 0.0, %v1882
    %v1884 = vpop.f32.mrf.mxu0
    %1885 = vdwg.mxu0
    %v1886 = vpack.c.bf16 %v258, %v257
    %v1903 = vunpack.c.l.b16 %v1747
    %v1904 = vunpack.c.l.b16 %v1748
    %v1905 = vunpack.c.l.b16 %v1749
    %v1906 = vunpack.c.l.b16 %v1750
    %v1907 = vunpack.c.l.b16 %v1751
    %v1908 = vunpack.c.l.b16 %v1752
    %v1909 = vunpack.c.l.b16 %v1753
    %v1910 = vunpack.c.l.b16 %v1754
    %v1911 = vunpack.c.l.b16 %v1755
    %v1912 = vunpack.c.l.b16 %v1756
    %v1913 = vunpack.c.l.b16 %v1757
    %v1914 = vunpack.c.l.b16 %v1758
    %v1915 = vunpack.c.l.b16 %v1759
    %v1916 = vunpack.c.l.b16 %v1760
    %v1917 = vunpack.c.l.b16 %v1761
    %v1918 = vunpack.c.l.b16 %v1762
    %v1919 = vpack.c.b16 %v1904, %v1903
    %v1920 = vpack.c.b16 %v1906, %v1905
    %v1921 = vpack.c.b16 %v1908, %v1907
    %v1922 = vpack.c.b16 %v1910, %v1909
    %v1923 = vpack.c.b16 %v1912, %v1911
    %v1924 = vpack.c.b16 %v1914, %v1913
    %v1925 = vpack.c.b16 %v1916, %v1915
    %v1926 = vpack.c.b16 %v1918, %v1917
    %1935 = vmatprep.subr.bf16.mxu0 0
    %1936 = vmatpush1.bf16.msra.mxu0 %v1926
    %1937 = vmatprep.subr.bf16.mxu0 0
    %1938 = vmatpush1.bf16.msra.mxu0 %v1925
    %1939 = vmatprep.subr.bf16.mxu0 0
    %1940 = vmatpush1.bf16.msra.mxu0 %v1924
    %1941 = vmatprep.subr.bf16.mxu0 0
    %1942 = vmatpush1.bf16.msra.mxu0 %v1923
    %1943 = vmatprep.subr.bf16.mxu0 0
    %1944 = vmatpush1.bf16.msra.mxu0 %v1922
    %1945 = vmatprep.subr.bf16.mxu0 0
    %1946 = vmatpush1.bf16.msra.mxu0 %v1921
    %1947 = vmatprep.subr.bf16.mxu0 0
    %1948 = vmatpush1.bf16.msra.mxu0 %v1920
    %1949 = vmatprep.subr.bf16.mxu0 0
    %1950 = vmatpush1.bf16.msra.mxu0 %v1919
    %1951 = vmatprep.subr.bf16.mxu0 0
    %1952 = vmatpush2.bf16.msra.mxu0 0
    %1953 = vmatprep.subr.bf16.mxu0 0
    %1954 = vmatpush2.bf16.msra.mxu0 0
    %1955 = vmatprep.subr.bf16.mxu0 0
    %1956 = vmatpush2.bf16.msra.mxu0 0
    %1957 = vmatprep.subr.bf16.mxu0 0
    %1958 = vmatpush2.bf16.msra.mxu0 0
    %1959 = vmatprep.subr.bf16.mxu0 0
    %1960 = vmatpush2.bf16.msra.mxu0 0
    %1961 = vmatprep.subr.bf16.mxu0 0
    %1962 = vmatpush2.bf16.msra.mxu0 0
    %1963 = vmatprep.subr.bf16.mxu0 0
    %1964 = vmatpush2.bf16.msra.mxu0 0
    %1965 = vmatprep.subr.bf16.mxu0 0
    %1966 = vmatpush2.bf16.msra.mxu0 0
    %1967 = vmatprep.mubr.bf16.mxu0 0
    %1968 = vmatmul.mubr.bf16.gmra.mxu0 %v1886
    %v1969 = vpop.f32.mrf.mxu0
    %v1970 = vadd.f32 0.0, %v1969
    %v1971 = vpop.f32.mrf.mxu0
    %v1972 = vpop.f32.mrf.mxu0
    %v1973 = vadd.f32 0.0, %v1972
    %v1974 = vpop.f32.mrf.mxu0
    %1975 = vdwg.mxu0
    %v1976 = vpack.c.bf16 %v260, %v259
    %v1993 = vunpack.c.l.b16 %v1763
    %v1994 = vunpack.c.l.b16 %v1764
    %v1995 = vunpack.c.l.b16 %v1765
    %v1996 = vunpack.c.l.b16 %v1766
    %v1997 = vunpack.c.l.b16 %v1767
    %v1998 = vunpack.c.l.b16 %v1768
    %v1999 = vunpack.c.l.b16 %v1769
    %v2000 = vunpack.c.l.b16 %v1770
    %v2001 = vunpack.c.l.b16 %v1771
    %v2002 = vunpack.c.l.b16 %v1772
    %v2003 = vunpack.c.l.b16 %v1773
    %v2004 = vunpack.c.l.b16 %v1774
    %v2005 = vunpack.c.l.b16 %v1775
    %v2006 = vunpack.c.l.b16 %v1776
    %v2007 = vunpack.c.l.b16 %v1777
    %v2008 = vunpack.c.l.b16 %v1778
    %v2009 = vpack.c.b16 %v1994, %v1993
    %v2010 = vpack.c.b16 %v1996, %v1995
    %v2011 = vpack.c.b16 %v1998, %v1997
    %v2012 = vpack.c.b16 %v2000, %v1999
    %v2013 = vpack.c.b16 %v2002, %v2001
    %v2014 = vpack.c.b16 %v2004, %v2003
    %v2015 = vpack.c.b16 %v2006, %v2005
    %v2016 = vpack.c.b16 %v2008, %v2007
    %2025 = vmatprep.subr.bf16.mxu0 0
    %2026 = vmatpush1.bf16.msra.mxu0 %v2016
    %2027 = vmatprep.subr.bf16.mxu0 0
    %2028 = vmatpush1.bf16.msra.mxu0 %v2015
    %2029 = vmatprep.subr.bf16.mxu0 0
    %2030 = vmatpush1.bf16.msra.mxu0 %v2014
    %2031 = vmatprep.subr.bf16.mxu0 0
    %2032 = vmatpush1.bf16.msra.mxu0 %v2013
    %2033 = vmatprep.subr.bf16.mxu0 0
    %2034 = vmatpush1.bf16.msra.mxu0 %v2012
    %2035 = vmatprep.subr.bf16.mxu0 0
    %2036 = vmatpush1.bf16.msra.mxu0 %v2011
    %2037 = vmatprep.subr.bf16.mxu0 0
    %2038 = vmatpush1.bf16.msra.mxu0 %v2010
    %2039 = vmatprep.subr.bf16.mxu0 0
    %2040 = vmatpush1.bf16.msra.mxu0 %v2009
    %2041 = vmatprep.subr.bf16.mxu0 0
    %2042 = vmatpush2.bf16.msra.mxu0 0
    %2043 = vmatprep.subr.bf16.mxu0 0
    %2044 = vmatpush2.bf16.msra.mxu0 0
    %2045 = vmatprep.subr.bf16.mxu0 0
    %2046 = vmatpush2.bf16.msra.mxu0 0
    %2047 = vmatprep.subr.bf16.mxu0 0
    %2048 = vmatpush2.bf16.msra.mxu0 0
    %2049 = vmatprep.subr.bf16.mxu0 0
    %2050 = vmatpush2.bf16.msra.mxu0 0
    %2051 = vmatprep.subr.bf16.mxu0 0
    %2052 = vmatpush2.bf16.msra.mxu0 0
    %2053 = vmatprep.subr.bf16.mxu0 0
    %2054 = vmatpush2.bf16.msra.mxu0 0
    %2055 = vmatprep.subr.bf16.mxu0 0
    %2056 = vmatpush2.bf16.msra.mxu0 0
    %2057 = vmatprep.mubr.bf16.mxu0 0
    %2058 = vmatmul.mubr.bf16.gmra.mxu0 %v1976
    %v2059 = vpop.f32.mrf.mxu0
    %v2060 = vadd.f32 0.0, %v2059
    %v2061 = vpop.f32.mrf.mxu0
    %v2062 = vpop.f32.mrf.mxu0
    %v2063 = vadd.f32 0.0, %v2062
    %v2064 = vpop.f32.mrf.mxu0
    %2065 = vdwg.mxu0
    %2068 = vrot.lane.b32.xlu0 %v1880, 96
    %v2069 = vpop.permute.xlu0 %2068
    %2070 = vrot.lane.b32.xlu0 %v1883, 96
    %v2071 = vpop.permute.xlu0 %2070
    %2074 = vrot.lane.b32.xlu0 %v1880, 64
    %v2075 = vpop.permute.xlu0 %2074
    %2076 = vrot.lane.b32.xlu0 %v1883, 64
    %v2077 = vpop.permute.xlu0 %2076
    %2080 = vrot.lane.b32.xlu0 %v1880, 32
    %v2081 = vpop.permute.xlu0 %2080
    %2082 = vrot.lane.b32.xlu0 %v1883, 32
    %v2083 = vpop.permute.xlu0 %2082
    %v2086 = vpack.c.bf16 %v1880, %v1880
    %v2087 = vpack.c.bf16 %v1883, %v1883
    %v2088 = vpack.c.bf16 %v2069, %v2069
    %v2089 = vpack.c.bf16 %v2071, %v2071
    %v2090 = vpack.c.bf16 %v2075, %v2075
    %v2091 = vpack.c.bf16 %v2077, %v2077
    %v2092 = vpack.c.bf16 %v2081, %v2081
    %v2093 = vpack.c.bf16 %v2083, %v2083
    %2096 = vrot.lane.b32.xlu0 %v1970, 96
    %v2097 = vpop.permute.xlu0 %2096
    %2098 = vrot.lane.b32.xlu0 %v1973, 96
    %v2099 = vpop.permute.xlu0 %2098
    %2102 = vrot.lane.b32.xlu0 %v1970, 64
    %v2103 = vpop.permute.xlu0 %2102
    %2104 = vrot.lane.b32.xlu0 %v1973, 64
    %v2105 = vpop.permute.xlu0 %2104
    %2108 = vrot.lane.b32.xlu0 %v1970, 32
    %v2109 = vpop.permute.xlu0 %2108
    %2110 = vrot.lane.b32.xlu0 %v1973, 32
    %v2111 = vpop.permute.xlu0 %2110
    %v2114 = vpack.c.bf16 %v1970, %v1970
    %v2115 = vpack.c.bf16 %v1973, %v1973
    %v2116 = vpack.c.bf16 %v2097, %v2097
    %v2117 = vpack.c.bf16 %v2099, %v2099
    %v2118 = vpack.c.bf16 %v2103, %v2103
    %v2119 = vpack.c.bf16 %v2105, %v2105
    %v2120 = vpack.c.bf16 %v2109, %v2109
    %v2121 = vpack.c.bf16 %v2111, %v2111
    %2124 = vrot.lane.b32.xlu0 %v2060, 96
    %v2125 = vpop.permute.xlu0 %2124
    %2126 = vrot.lane.b32.xlu0 %v2063, 96
    %v2127 = vpop.permute.xlu0 %2126
    %2130 = vrot.lane.b32.xlu0 %v2060, 64
    %v2131 = vpop.permute.xlu0 %2130
    %2132 = vrot.lane.b32.xlu0 %v2063, 64
    %v2133 = vpop.permute.xlu0 %2132
    %2136 = vrot.lane.b32.xlu0 %v2060, 32
    %v2137 = vpop.permute.xlu0 %2136
    %2138 = vrot.lane.b32.xlu0 %v2063, 32
    %v2139 = vpop.permute.xlu0 %2138
    %v2142 = vpack.c.bf16 %v2060, %v2060
    %v2143 = vpack.c.bf16 %v2063, %v2063
    %v2144 = vpack.c.bf16 %v2125, %v2125
    %v2145 = vpack.c.bf16 %v2127, %v2127
    %v2146 = vpack.c.bf16 %v2131, %v2131
    %v2147 = vpack.c.bf16 %v2133, %v2133
    %v2148 = vpack.c.bf16 %v2137, %v2137
    %v2149 = vpack.c.bf16 %v2139, %v2139
    %v2150 = vlaneseq
    %v2151 = vshrl.u32 %v2150, 7
    %v2152 = vsub.s32 0, %v2151
    %v2153 = vrot.slane %v306, %v2152
    %v2154 = vlaneseq
    %v2155 = vshrl.u32 %v2154, 7
    %v2156 = vsub.s32 0, %v2155
    %v2157 = vrot.slane %v307, %v2156
    %v2159 = vsel %vm725, %v2086, 0
    %v2162 = vsel %vm725, %v2114, 0
    %2164 = vmatprep.subr.bf16.mxu0 0
    %2165 = vmatpush1.bf16.xpose.msra.mxu0 0
    %2166 = vmatprep.subr.bf16.mxu0 0
    %2167 = vmatpush1.bf16.xpose.msra.mxu0 0
    %2168 = vmatprep.subr.bf16.mxu0 0
    %2169 = vmatpush1.bf16.xpose.msra.mxu0 0
    %2170 = vmatprep.subr.bf16.mxu0 0
    %2171 = vmatpush1.bf16.xpose.msra.mxu0 0
    %2172 = vmatprep.subr.bf16.mxu0 0
    %2173 = vmatpush1.bf16.xpose.msra.mxu0 0
    %2174 = vmatprep.subr.bf16.mxu0 0
    %2175 = vmatpush1.bf16.xpose.msra.mxu0 0
    %2176 = vmatprep.subr.bf16.mxu0 0
    %2177 = vmatpush1.bf16.xpose.msra.mxu0 0
    %2178 = vmatprep.subr.bf16.mxu0 0
    %2179 = vmatpush1.bf16.xpose.msra.mxu0 %v2162
    %2180 = vmatprep.subr.bf16.mxu0 0
    %2181 = vmatpush2.bf16.xpose.msra.mxu0 0
    %2182 = vmatprep.subr.bf16.mxu0 0
    %2183 = vmatpush2.bf16.xpose.msra.mxu0 0
    %2184 = vmatprep.subr.bf16.mxu0 0
    %2185 = vmatpush2.bf16.xpose.msra.mxu0 0
    %2186 = vmatprep.subr.bf16.mxu0 0
    %2187 = vmatpush2.bf16.xpose.msra.mxu0 0
    %2188 = vmatprep.subr.bf16.mxu0 0
    %2189 = vmatpush2.bf16.xpose.msra.mxu0 0
    %2190 = vmatprep.subr.bf16.mxu0 0
    %2191 = vmatpush2.bf16.xpose.msra.mxu0 0
    %2192 = vmatprep.subr.bf16.mxu0 0
    %2193 = vmatpush2.bf16.xpose.msra.mxu0 0
    %2194 = vmatprep.subr.bf16.mxu0 0
    %2195 = vmatpush2.bf16.xpose.msra.mxu0 0
    %2196 = vmatprep.mubr.bf16.mxu0 0
    %2197 = vmatmul.mubr.bf16.gmra.mxu0 %v2159
    %v2198 = vpop.f32.mrf.mxu0
    %v2199 = vadd.f32 %v2153, %v2198
    %v2200 = vpop.f32.mrf.mxu0
    %v2201 = vpop.f32.mrf.mxu0
    %v2202 = vpop.f32.mrf.mxu0
    %2203 = vdwg.mxu0
    %v2205 = vsel %vm725, %v2087, 0
    %v2208 = vsel %vm725, %v2115, 0
    %2210 = vmatprep.subr.bf16.mxu0 0
    %2211 = vmatpush1.bf16.xpose.msra.mxu0 0
    %2212 = vmatprep.subr.bf16.mxu0 0
    %2213 = vmatpush1.bf16.xpose.msra.mxu0 0
    %2214 = vmatprep.subr.bf16.mxu0 0
    %2215 = vmatpush1.bf16.xpose.msra.mxu0 0
    %2216 = vmatprep.subr.bf16.mxu0 0
    %2217 = vmatpush1.bf16.xpose.msra.mxu0 0
    %2218 = vmatprep.subr.bf16.mxu0 0
    %2219 = vmatpush1.bf16.xpose.msra.mxu0 0
    %2220 = vmatprep.subr.bf16.mxu0 0
    %2221 = vmatpush1.bf16.xpose.msra.mxu0 0
    %2222 = vmatprep.subr.bf16.mxu0 0
    %2223 = vmatpush1.bf16.xpose.msra.mxu0 0
    %2224 = vmatprep.subr.bf16.mxu0 0
    %2225 = vmatpush1.bf16.xpose.msra.mxu0 %v2208
    %2226 = vmatprep.subr.bf16.mxu0 0
    %2227 = vmatpush2.bf16.xpose.msra.mxu0 0
    %2228 = vmatprep.subr.bf16.mxu0 0
    %2229 = vmatpush2.bf16.xpose.msra.mxu0 0
    %2230 = vmatprep.subr.bf16.mxu0 0
    %2231 = vmatpush2.bf16.xpose.msra.mxu0 0
    %2232 = vmatprep.subr.bf16.mxu0 0
    %2233 = vmatpush2.bf16.xpose.msra.mxu0 0
    %2234 = vmatprep.subr.bf16.mxu0 0
    %2235 = vmatpush2.bf16.xpose.msra.mxu0 0
    %2236 = vmatprep.subr.bf16.mxu0 0
    %2237 = vmatpush2.bf16.xpose.msra.mxu0 0
    %2238 = vmatprep.subr.bf16.mxu0 0
    %2239 = vmatpush2.bf16.xpose.msra.mxu0 0
    %2240 = vmatprep.subr.bf16.mxu0 0
    %2241 = vmatpush2.bf16.xpose.msra.mxu0 0
    %2242 = vmatprep.mubr.bf16.mxu0 0
    %2243 = vmatmul.mubr.bf16.gmra.mxu0 %v2205
    %v2244 = vpop.f32.mrf.mxu0
    %v2245 = vadd.f32 %v2157, %v2244
    %v2246 = vpop.f32.mrf.mxu0
    %v2247 = vpop.f32.mrf.mxu0
    %v2248 = vpop.f32.mrf.mxu0
    %2249 = vdwg.mxu0
    %v2251 = vsel %vm725, %v2088, 0
    %v2254 = vsel %vm725, %v2116, 0
    %2256 = vmatprep.subr.bf16.mxu0 0
    %2257 = vmatpush1.bf16.xpose.msra.mxu0 0
    %2258 = vmatprep.subr.bf16.mxu0 0
    %2259 = vmatpush1.bf16.xpose.msra.mxu0 0
    %2260 = vmatprep.subr.bf16.mxu0 0
    %2261 = vmatpush1.bf16.xpose.msra.mxu0 0
    %2262 = vmatprep.subr.bf16.mxu0 0
    %2263 = vmatpush1.bf16.xpose.msra.mxu0 0
    %2264 = vmatprep.subr.bf16.mxu0 0
    %2265 = vmatpush1.bf16.xpose.msra.mxu0 0
    %2266 = vmatprep.subr.bf16.mxu0 0
    %2267 = vmatpush1.bf16.xpose.msra.mxu0 0
    %2268 = vmatprep.subr.bf16.mxu0 0
    %2269 = vmatpush1.bf16.xpose.msra.mxu0 0
    %2270 = vmatprep.subr.bf16.mxu0 0
    %2271 = vmatpush1.bf16.xpose.msra.mxu0 %v2254
    %2272 = vmatprep.subr.bf16.mxu0 0
    %2273 = vmatpush2.bf16.xpose.msra.mxu0 0
    %2274 = vmatprep.subr.bf16.mxu0 0
    %2275 = vmatpush2.bf16.xpose.msra.mxu0 0
    %2276 = vmatprep.subr.bf16.mxu0 0
    %2277 = vmatpush2.bf16.xpose.msra.mxu0 0
    %2278 = vmatprep.subr.bf16.mxu0 0
    %2279 = vmatpush2.bf16.xpose.msra.mxu0 0
    %2280 = vmatprep.subr.bf16.mxu0 0
    %2281 = vmatpush2.bf16.xpose.msra.mxu0 0
    %2282 = vmatprep.subr.bf16.mxu0 0
    %2283 = vmatpush2.bf16.xpose.msra.mxu0 0
    %2284 = vmatprep.subr.bf16.mxu0 0
    %2285 = vmatpush2.bf16.xpose.msra.mxu0 0
    %2286 = vmatprep.subr.bf16.mxu0 0
    %2287 = vmatpush2.bf16.xpose.msra.mxu0 0
    %2288 = vmatprep.mubr.bf16.mxu0 0
    %2289 = vmatmul.mubr.bf16.gmra.mxu0 %v2251
    %v2290 = vpop.f32.mrf.mxu0
    %v2291 = vadd.f32 %v2153, %v2290
    %v2292 = vpop.f32.mrf.mxu0
    %v2293 = vpop.f32.mrf.mxu0
    %v2294 = vpop.f32.mrf.mxu0
    %2295 = vdwg.mxu0
    %v2297 = vsel %vm725, %v2089, 0
    %v2300 = vsel %vm725, %v2117, 0
    %2302 = vmatprep.subr.bf16.mxu0 0
    %2303 = vmatpush1.bf16.xpose.msra.mxu0 0
    %2304 = vmatprep.subr.bf16.mxu0 0
    %2305 = vmatpush1.bf16.xpose.msra.mxu0 0
    %2306 = vmatprep.subr.bf16.mxu0 0
    %2307 = vmatpush1.bf16.xpose.msra.mxu0 0
    %2308 = vmatprep.subr.bf16.mxu0 0
    %2309 = vmatpush1.bf16.xpose.msra.mxu0 0
    %2310 = vmatprep.subr.bf16.mxu0 0
    %2311 = vmatpush1.bf16.xpose.msra.mxu0 0
    %2312 = vmatprep.subr.bf16.mxu0 0
    %2313 = vmatpush1.bf16.xpose.msra.mxu0 0
    %2314 = vmatprep.subr.bf16.mxu0 0
    %2315 = vmatpush1.bf16.xpose.msra.mxu0 0
    %2316 = vmatprep.subr.bf16.mxu0 0
    %2317 = vmatpush1.bf16.xpose.msra.mxu0 %v2300
    %2318 = vmatprep.subr.bf16.mxu0 0
    %2319 = vmatpush2.bf16.xpose.msra.mxu0 0
    %2320 = vmatprep.subr.bf16.mxu0 0
    %2321 = vmatpush2.bf16.xpose.msra.mxu0 0
    %2322 = vmatprep.subr.bf16.mxu0 0
    %2323 = vmatpush2.bf16.xpose.msra.mxu0 0
    %2324 = vmatprep.subr.bf16.mxu0 0
    %2325 = vmatpush2.bf16.xpose.msra.mxu0 0
    %2326 = vmatprep.subr.bf16.mxu0 0
    %2327 = vmatpush2.bf16.xpose.msra.mxu0 0
    %2328 = vmatprep.subr.bf16.mxu0 0
    %2329 = vmatpush2.bf16.xpose.msra.mxu0 0
    %2330 = vmatprep.subr.bf16.mxu0 0
    %2331 = vmatpush2.bf16.xpose.msra.mxu0 0
    %2332 = vmatprep.subr.bf16.mxu0 0
    %2333 = vmatpush2.bf16.xpose.msra.mxu0 0
    %2334 = vmatprep.mubr.bf16.mxu0 0
    %2335 = vmatmul.mubr.bf16.gmra.mxu0 %v2297
    %v2336 = vpop.f32.mrf.mxu0
    %v2337 = vadd.f32 %v2157, %v2336
    %v2338 = vpop.f32.mrf.mxu0
    %v2339 = vpop.f32.mrf.mxu0
    %v2340 = vpop.f32.mrf.mxu0
    %2341 = vdwg.mxu0
    %v2343 = vsel %vm725, %v2090, 0
    %v2346 = vsel %vm725, %v2118, 0
    %2348 = vmatprep.subr.bf16.mxu0 0
    %2349 = vmatpush1.bf16.xpose.msra.mxu0 0
    %2350 = vmatprep.subr.bf16.mxu0 0
    %2351 = vmatpush1.bf16.xpose.msra.mxu0 0
    %2352 = vmatprep.subr.bf16.mxu0 0
    %2353 = vmatpush1.bf16.xpose.msra.mxu0 0
    %2354 = vmatprep.subr.bf16.mxu0 0
    %2355 = vmatpush1.bf16.xpose.msra.mxu0 0
    %2356 = vmatprep.subr.bf16.mxu0 0
    %2357 = vmatpush1.bf16.xpose.msra.mxu0 0
    %2358 = vmatprep.subr.bf16.mxu0 0
    %2359 = vmatpush1.bf16.xpose.msra.mxu0 0
    %2360 = vmatprep.subr.bf16.mxu0 0
    %2361 = vmatpush1.bf16.xpose.msra.mxu0 0
    %2362 = vmatprep.subr.bf16.mxu0 0
    %2363 = vmatpush1.bf16.xpose.msra.mxu0 %v2346
    %2364 = vmatprep.subr.bf16.mxu0 0
    %2365 = vmatpush2.bf16.xpose.msra.mxu0 0
    %2366 = vmatprep.subr.bf16.mxu0 0
    %2367 = vmatpush2.bf16.xpose.msra.mxu0 0
    %2368 = vmatprep.subr.bf16.mxu0 0
    %2369 = vmatpush2.bf16.xpose.msra.mxu0 0
    %2370 = vmatprep.subr.bf16.mxu0 0
    %2371 = vmatpush2.bf16.xpose.msra.mxu0 0
    %2372 = vmatprep.subr.bf16.mxu0 0
    %2373 = vmatpush2.bf16.xpose.msra.mxu0 0
    %2374 = vmatprep.subr.bf16.mxu0 0
    %2375 = vmatpush2.bf16.xpose.msra.mxu0 0
    %2376 = vmatprep.subr.bf16.mxu0 0
    %2377 = vmatpush2.bf16.xpose.msra.mxu0 0
    %2378 = vmatprep.subr.bf16.mxu0 0
    %2379 = vmatpush2.bf16.xpose.msra.mxu0 0
    %2380 = vmatprep.mubr.bf16.mxu0 0
    %2381 = vmatmul.mubr.bf16.gmra.mxu0 %v2343
    %v2382 = vpop.f32.mrf.mxu0
    %v2383 = vadd.f32 %v2153, %v2382
    %v2384 = vpop.f32.mrf.mxu0
    %v2385 = vpop.f32.mrf.mxu0
    %v2386 = vpop.f32.mrf.mxu0
    %2387 = vdwg.mxu0
    %v2389 = vsel %vm725, %v2091, 0
    %v2392 = vsel %vm725, %v2119, 0
    %2394 = vmatprep.subr.bf16.mxu0 0
    %2395 = vmatpush1.bf16.xpose.msra.mxu0 0
    %2396 = vmatprep.subr.bf16.mxu0 0
    %2397 = vmatpush1.bf16.xpose.msra.mxu0 0
    %2398 = vmatprep.subr.bf16.mxu0 0
    %2399 = vmatpush1.bf16.xpose.msra.mxu0 0
    %2400 = vmatprep.subr.bf16.mxu0 0
    %2401 = vmatpush1.bf16.xpose.msra.mxu0 0
    %2402 = vmatprep.subr.bf16.mxu0 0
    %2403 = vmatpush1.bf16.xpose.msra.mxu0 0
    %2404 = vmatprep.subr.bf16.mxu0 0
    %2405 = vmatpush1.bf16.xpose.msra.mxu0 0
    %2406 = vmatprep.subr.bf16.mxu0 0
    %2407 = vmatpush1.bf16.xpose.msra.mxu0 0
    %2408 = vmatprep.subr.bf16.mxu0 0
    %2409 = vmatpush1.bf16.xpose.msra.mxu0 %v2392
    %2410 = vmatprep.subr.bf16.mxu0 0
    %2411 = vmatpush2.bf16.xpose.msra.mxu0 0
    %2412 = vmatprep.subr.bf16.mxu0 0
    %2413 = vmatpush2.bf16.xpose.msra.mxu0 0
    %2414 = vmatprep.subr.bf16.mxu0 0
    %2415 = vmatpush2.bf16.xpose.msra.mxu0 0
    %2416 = vmatprep.subr.bf16.mxu0 0
    %2417 = vmatpush2.bf16.xpose.msra.mxu0 0
    %2418 = vmatprep.subr.bf16.mxu0 0
    %2419 = vmatpush2.bf16.xpose.msra.mxu0 0
    %2420 = vmatprep.subr.bf16.mxu0 0
    %2421 = vmatpush2.bf16.xpose.msra.mxu0 0
    %2422 = vmatprep.subr.bf16.mxu0 0
    %2423 = vmatpush2.bf16.xpose.msra.mxu0 0
    %2424 = vmatprep.subr.bf16.mxu0 0
    %2425 = vmatpush2.bf16.xpose.msra.mxu0 0
    %2426 = vmatprep.mubr.bf16.mxu0 0
    %2427 = vmatmul.mubr.bf16.gmra.mxu0 %v2389
    %v2428 = vpop.f32.mrf.mxu0
    %v2429 = vadd.f32 %v2157, %v2428
    %v2430 = vpop.f32.mrf.mxu0
    %v2431 = vpop.f32.mrf.mxu0
    %v2432 = vpop.f32.mrf.mxu0
    %2433 = vdwg.mxu0
    %v2435 = vsel %vm725, %v2092, 0
    %v2438 = vsel %vm725, %v2120, 0
    %2440 = vmatprep.subr.bf16.mxu0 0
    %2441 = vmatpush1.bf16.xpose.msra.mxu0 0
    %2442 = vmatprep.subr.bf16.mxu0 0
    %2443 = vmatpush1.bf16.xpose.msra.mxu0 0
    %2444 = vmatprep.subr.bf16.mxu0 0
    %2445 = vmatpush1.bf16.xpose.msra.mxu0 0
    %2446 = vmatprep.subr.bf16.mxu0 0
    %2447 = vmatpush1.bf16.xpose.msra.mxu0 0
    %2448 = vmatprep.subr.bf16.mxu0 0
    %2449 = vmatpush1.bf16.xpose.msra.mxu0 0
    %2450 = vmatprep.subr.bf16.mxu0 0
    %2451 = vmatpush1.bf16.xpose.msra.mxu0 0
    %2452 = vmatprep.subr.bf16.mxu0 0
    %2453 = vmatpush1.bf16.xpose.msra.mxu0 0
    %2454 = vmatprep.subr.bf16.mxu0 0
    %2455 = vmatpush1.bf16.xpose.msra.mxu0 %v2438
    %2456 = vmatprep.subr.bf16.mxu0 0
    %2457 = vmatpush2.bf16.xpose.msra.mxu0 0
    %2458 = vmatprep.subr.bf16.mxu0 0
    %2459 = vmatpush2.bf16.xpose.msra.mxu0 0
    %2460 = vmatprep.subr.bf16.mxu0 0
    %2461 = vmatpush2.bf16.xpose.msra.mxu0 0
    %2462 = vmatprep.subr.bf16.mxu0 0
    %2463 = vmatpush2.bf16.xpose.msra.mxu0 0
    %2464 = vmatprep.subr.bf16.mxu0 0
    %2465 = vmatpush2.bf16.xpose.msra.mxu0 0
    %2466 = vmatprep.subr.bf16.mxu0 0
    %2467 = vmatpush2.bf16.xpose.msra.mxu0 0
    %2468 = vmatprep.subr.bf16.mxu0 0
    %2469 = vmatpush2.bf16.xpose.msra.mxu0 0
    %2470 = vmatprep.subr.bf16.mxu0 0
    %2471 = vmatpush2.bf16.xpose.msra.mxu0 0
    %2472 = vmatprep.mubr.bf16.mxu0 0
    %2473 = vmatmul.mubr.bf16.gmra.mxu0 %v2435
    %v2474 = vpop.f32.mrf.mxu0
    %v2475 = vadd.f32 %v2153, %v2474
    %v2476 = vpop.f32.mrf.mxu0
    %v2477 = vpop.f32.mrf.mxu0
    %v2478 = vpop.f32.mrf.mxu0
    %2479 = vdwg.mxu0
    %v2481 = vsel %vm725, %v2093, 0
    %v2484 = vsel %vm725, %v2121, 0
    %2486 = vmatprep.subr.bf16.mxu0 0
    %2487 = vmatpush1.bf16.xpose.msra.mxu0 0
    %2488 = vmatprep.subr.bf16.mxu0 0
    %2489 = vmatpush1.bf16.xpose.msra.mxu0 0
    %2490 = vmatprep.subr.bf16.mxu0 0
    %2491 = vmatpush1.bf16.xpose.msra.mxu0 0
    %2492 = vmatprep.subr.bf16.mxu0 0
    %2493 = vmatpush1.bf16.xpose.msra.mxu0 0
    %2494 = vmatprep.subr.bf16.mxu0 0
    %2495 = vmatpush1.bf16.xpose.msra.mxu0 0
    %2496 = vmatprep.subr.bf16.mxu0 0
    %2497 = vmatpush1.bf16.xpose.msra.mxu0 0
    %2498 = vmatprep.subr.bf16.mxu0 0
    %2499 = vmatpush1.bf16.xpose.msra.mxu0 0
    %2500 = vmatprep.subr.bf16.mxu0 0
    %2501 = vmatpush1.bf16.xpose.msra.mxu0 %v2484
    %2502 = vmatprep.subr.bf16.mxu0 0
    %2503 = vmatpush2.bf16.xpose.msra.mxu0 0
    %2504 = vmatprep.subr.bf16.mxu0 0
    %2505 = vmatpush2.bf16.xpose.msra.mxu0 0
    %2506 = vmatprep.subr.bf16.mxu0 0
    %2507 = vmatpush2.bf16.xpose.msra.mxu0 0
    %2508 = vmatprep.subr.bf16.mxu0 0
    %2509 = vmatpush2.bf16.xpose.msra.mxu0 0
    %2510 = vmatprep.subr.bf16.mxu0 0
    %2511 = vmatpush2.bf16.xpose.msra.mxu0 0
    %2512 = vmatprep.subr.bf16.mxu0 0
    %2513 = vmatpush2.bf16.xpose.msra.mxu0 0
    %2514 = vmatprep.subr.bf16.mxu0 0
    %2515 = vmatpush2.bf16.xpose.msra.mxu0 0
    %2516 = vmatprep.subr.bf16.mxu0 0
    %2517 = vmatpush2.bf16.xpose.msra.mxu0 0
    %2518 = vmatprep.mubr.bf16.mxu0 0
    %2519 = vmatmul.mubr.bf16.gmra.mxu0 %v2481
    %v2520 = vpop.f32.mrf.mxu0
    %v2521 = vadd.f32 %v2157, %v2520
    %v2522 = vpop.f32.mrf.mxu0
    %v2523 = vpop.f32.mrf.mxu0
    %v2524 = vpop.f32.mrf.mxu0
    %2525 = vdwg.mxu0
    %v2526 = vsel %vm1094, %v2199, -inf
    %2527 = vmax.xlane.f32.xlu0 %v2526
    %v2528 = vpop.xlane.xlu0 %2527
    %v2529 = vsel %vm1094, %v2245, -inf
    %2530 = vmax.xlane.f32.xlu0 %v2529
    %v2531 = vpop.xlane.xlu0 %2530
    %v2532 = vsel %vm1094, %v2291, -inf
    %2533 = vmax.xlane.f32.xlu0 %v2532
    %v2534 = vpop.xlane.xlu0 %2533
    %v2535 = vsel %vm1094, %v2337, -inf
    %2536 = vmax.xlane.f32.xlu0 %v2535
    %v2537 = vpop.xlane.xlu0 %2536
    %v2538 = vsel %vm1094, %v2383, -inf
    %2539 = vmax.xlane.f32.xlu0 %v2538
    %v2540 = vpop.xlane.xlu0 %2539
    %v2541 = vsel %vm1094, %v2429, -inf
    %2542 = vmax.xlane.f32.xlu0 %v2541
    %v2543 = vpop.xlane.xlu0 %2542
    %v2544 = vsel %vm1094, %v2475, -inf
    %2545 = vmax.xlane.f32.xlu0 %v2544
    %v2546 = vpop.xlane.xlu0 %2545
    %v2547 = vsel %vm1094, %v2521, -inf
    %2548 = vmax.xlane.f32.xlu0 %v2547
    %v2549 = vpop.xlane.xlu0 %2548
    %v2550 = vsub.f32 %v2199, %v2528
    %v2551 = vsub.f32 %v2245, %v2531
    %v2552 = vsub.f32 %v2291, %v2534
    %v2553 = vsub.f32 %v2337, %v2537
    %v2554 = vsub.f32 %v2383, %v2540
    %v2555 = vsub.f32 %v2429, %v2543
    %v2556 = vsub.f32 %v2475, %v2546
    %v2557 = vsub.f32 %v2521, %v2549
    %v2558 = vmul.f32 %v2550, 1.442695
    %v2559 = vpow.pop %v2558
    %v2560 = vmul.f32 %v2551, 1.442695
    %v2561 = vpow.pop %v2560
    %v2562 = vmul.f32 %v2552, 1.442695
    %v2563 = vpow.pop %v2562
    %v2564 = vmul.f32 %v2553, 1.442695
    %v2565 = vpow.pop %v2564
    %v2566 = vmul.f32 %v2554, 1.442695
    %v2567 = vpow.pop %v2566
    %v2568 = vmul.f32 %v2555, 1.442695
    %v2569 = vpow.pop %v2568
    %v2570 = vmul.f32 %v2556, 1.442695
    %v2571 = vpow.pop %v2570
    %v2572 = vmul.f32 %v2557, 1.442695
    %v2573 = vpow.pop %v2572
    %v2574 = vsel %vm1094, %v2559, 0.0
    %2575 = vadd.xlane.f32.xlu0 %v2574
    %v2576 = vpop.xlane.xlu0 %2575
    %v2577 = vsel %vm1094, %v2561, 0.0
    %2578 = vadd.xlane.f32.xlu0 %v2577
    %v2579 = vpop.xlane.xlu0 %2578
    %v2580 = vsel %vm1094, %v2563, 0.0
    %2581 = vadd.xlane.f32.xlu0 %v2580
    %v2582 = vpop.xlane.xlu0 %2581
    %v2583 = vsel %vm1094, %v2565, 0.0
    %2584 = vadd.xlane.f32.xlu0 %v2583
    %v2585 = vpop.xlane.xlu0 %2584
    %v2586 = vsel %vm1094, %v2567, 0.0
    %2587 = vadd.xlane.f32.xlu0 %v2586
    %v2588 = vpop.xlane.xlu0 %2587
    %v2589 = vsel %vm1094, %v2569, 0.0
    %2590 = vadd.xlane.f32.xlu0 %v2589
    %v2591 = vpop.xlane.xlu0 %2590
    %v2592 = vsel %vm1094, %v2571, 0.0
    %2593 = vadd.xlane.f32.xlu0 %v2592
    %v2594 = vpop.xlane.xlu0 %2593
    %v2595 = vsel %vm1094, %v2573, 0.0
    %2596 = vadd.xlane.f32.xlu0 %v2595
    %v2597 = vpop.xlane.xlu0 %2596
    %v2598 = vrcp.pop %v2576
    %v2599 = vrcp.pop %v2579
    %v2600 = vrcp.pop %v2582
    %v2601 = vrcp.pop %v2585
    %v2602 = vrcp.pop %v2588
    %v2603 = vrcp.pop %v2591
    %v2604 = vrcp.pop %v2594
    %v2605 = vrcp.pop %v2597
    %v2606 = vmul.f32 %v2559, %v2598
    %v2607 = vmul.f32 %v2561, %v2599
    %v2608 = vmul.f32 %v2563, %v2600
    %v2609 = vmul.f32 %v2565, %v2601
    %v2610 = vmul.f32 %v2567, %v2602
    %v2611 = vmul.f32 %v2569, %v2603
    %v2612 = vmul.f32 %v2571, %v2604
    %v2613 = vmul.f32 %v2573, %v2605
    %v2614 = vpack.c.bf16 %v2606, %v2606
    %v2615 = vpack.c.bf16 %v2607, %v2607
    %v2616 = vpack.c.bf16 %v2608, %v2608
    %v2617 = vpack.c.bf16 %v2609, %v2609
    %v2618 = vpack.c.bf16 %v2610, %v2610
    %v2619 = vpack.c.bf16 %v2611, %v2611
    %v2620 = vpack.c.bf16 %v2612, %v2612
    %v2621 = vpack.c.bf16 %v2613, %v2613
    %v2623 = vsel %vm1094, %v2614, 0
    %v2626 = vsel %vm1194, %v2142, 0
    %2628 = vmatprep.subr.bf16.mxu0 0
    %2629 = vmatpush1.bf16.msra.mxu0 0
    %2630 = vmatprep.subr.bf16.mxu0 0
    %2631 = vmatpush1.bf16.msra.mxu0 0
    %2632 = vmatprep.subr.bf16.mxu0 0
    %2633 = vmatpush1.bf16.msra.mxu0 0
    %2634 = vmatprep.subr.bf16.mxu0 0
    %2635 = vmatpush1.bf16.msra.mxu0 0
    %2636 = vmatprep.subr.bf16.mxu0 0
    %2637 = vmatpush1.bf16.msra.mxu0 0
    %2638 = vmatprep.subr.bf16.mxu0 0
    %2639 = vmatpush1.bf16.msra.mxu0 0
    %2640 = vmatprep.subr.bf16.mxu0 0
    %2641 = vmatpush1.bf16.msra.mxu0 0
    %2642 = vmatprep.subr.bf16.mxu0 0
    %2643 = vmatpush1.bf16.msra.mxu0 %v2626
    %2644 = vmatprep.subr.bf16.mxu0 0
    %2645 = vmatpush2.bf16.msra.mxu0 0
    %2646 = vmatprep.subr.bf16.mxu0 0
    %2647 = vmatpush2.bf16.msra.mxu0 0
    %2648 = vmatprep.subr.bf16.mxu0 0
    %2649 = vmatpush2.bf16.msra.mxu0 0
    %2650 = vmatprep.subr.bf16.mxu0 0
    %2651 = vmatpush2.bf16.msra.mxu0 0
    %2652 = vmatprep.subr.bf16.mxu0 0
    %2653 = vmatpush2.bf16.msra.mxu0 0
    %2654 = vmatprep.subr.bf16.mxu0 0
    %2655 = vmatpush2.bf16.msra.mxu0 0
    %2656 = vmatprep.subr.bf16.mxu0 0
    %2657 = vmatpush2.bf16.msra.mxu0 0
    %2658 = vmatprep.subr.bf16.mxu0 0
    %2659 = vmatpush2.bf16.msra.mxu0 0
    %2660 = vmatprep.mubr.bf16.mxu0 0
    %2661 = vmatmul.mubr.bf16.gmra.mxu0 %v2623
    %v2662 = vpop.f32.mrf.mxu0
    %v2663 = vadd.f32 0.0, %v2662
    %v2664 = vpop.f32.mrf.mxu0
    %v2665 = vpop.f32.mrf.mxu0
    %v2666 = vpop.f32.mrf.mxu0
    %2667 = vdwg.mxu0
    %v2669 = vsel %vm1094, %v2615, 0
    %v2672 = vsel %vm1194, %v2143, 0
    %2674 = vmatprep.subr.bf16.mxu0 0
    %2675 = vmatpush1.bf16.msra.mxu0 0
    %2676 = vmatprep.subr.bf16.mxu0 0
    %2677 = vmatpush1.bf16.msra.mxu0 0
    %2678 = vmatprep.subr.bf16.mxu0 0
    %2679 = vmatpush1.bf16.msra.mxu0 0
    %2680 = vmatprep.subr.bf16.mxu0 0
    %2681 = vmatpush1.bf16.msra.mxu0 0
    %2682 = vmatprep.subr.bf16.mxu0 0
    %2683 = vmatpush1.bf16.msra.mxu0 0
    %2684 = vmatprep.subr.bf16.mxu0 0
    %2685 = vmatpush1.bf16.msra.mxu0 0
    %2686 = vmatprep.subr.bf16.mxu0 0
    %2687 = vmatpush1.bf16.msra.mxu0 0
    %2688 = vmatprep.subr.bf16.mxu0 0
    %2689 = vmatpush1.bf16.msra.mxu0 %v2672
    %2690 = vmatprep.subr.bf16.mxu0 0
    %2691 = vmatpush2.bf16.msra.mxu0 0
    %2692 = vmatprep.subr.bf16.mxu0 0
    %2693 = vmatpush2.bf16.msra.mxu0 0
    %2694 = vmatprep.subr.bf16.mxu0 0
    %2695 = vmatpush2.bf16.msra.mxu0 0
    %2696 = vmatprep.subr.bf16.mxu0 0
    %2697 = vmatpush2.bf16.msra.mxu0 0
    %2698 = vmatprep.subr.bf16.mxu0 0
    %2699 = vmatpush2.bf16.msra.mxu0 0
    %2700 = vmatprep.subr.bf16.mxu0 0
    %2701 = vmatpush2.bf16.msra.mxu0 0
    %2702 = vmatprep.subr.bf16.mxu0 0
    %2703 = vmatpush2.bf16.msra.mxu0 0
    %2704 = vmatprep.subr.bf16.mxu0 0
    %2705 = vmatpush2.bf16.msra.mxu0 0
    %2706 = vmatprep.mubr.bf16.mxu0 0
    %2707 = vmatmul.mubr.bf16.gmra.mxu0 %v2669
    %v2708 = vpop.f32.mrf.mxu0
    %v2709 = vadd.f32 0.0, %v2708
    %v2710 = vpop.f32.mrf.mxu0
    %v2711 = vpop.f32.mrf.mxu0
    %v2712 = vpop.f32.mrf.mxu0
    %2713 = vdwg.mxu0
    %v2715 = vsel %vm1094, %v2616, 0
    %v2718 = vsel %vm1194, %v2144, 0
    %2720 = vmatprep.subr.bf16.mxu0 0
    %2721 = vmatpush1.bf16.msra.mxu0 0
    %2722 = vmatprep.subr.bf16.mxu0 0
    %2723 = vmatpush1.bf16.msra.mxu0 0
    %2724 = vmatprep.subr.bf16.mxu0 0
    %2725 = vmatpush1.bf16.msra.mxu0 0
    %2726 = vmatprep.subr.bf16.mxu0 0
    %2727 = vmatpush1.bf16.msra.mxu0 0
    %2728 = vmatprep.subr.bf16.mxu0 0
    %2729 = vmatpush1.bf16.msra.mxu0 0
    %2730 = vmatprep.subr.bf16.mxu0 0
    %2731 = vmatpush1.bf16.msra.mxu0 0
    %2732 = vmatprep.subr.bf16.mxu0 0
    %2733 = vmatpush1.bf16.msra.mxu0 0
    %2734 = vmatprep.subr.bf16.mxu0 0
    %2735 = vmatpush1.bf16.msra.mxu0 %v2718
    %2736 = vmatprep.subr.bf16.mxu0 0
    %2737 = vmatpush2.bf16.msra.mxu0 0
    %2738 = vmatprep.subr.bf16.mxu0 0
    %2739 = vmatpush2.bf16.msra.mxu0 0
    %2740 = vmatprep.subr.bf16.mxu0 0
    %2741 = vmatpush2.bf16.msra.mxu0 0
    %2742 = vmatprep.subr.bf16.mxu0 0
    %2743 = vmatpush2.bf16.msra.mxu0 0
    %2744 = vmatprep.subr.bf16.mxu0 0
    %2745 = vmatpush2.bf16.msra.mxu0 0
    %2746 = vmatprep.subr.bf16.mxu0 0
    %2747 = vmatpush2.bf16.msra.mxu0 0
    %2748 = vmatprep.subr.bf16.mxu0 0
    %2749 = vmatpush2.bf16.msra.mxu0 0
    %2750 = vmatprep.subr.bf16.mxu0 0
    %2751 = vmatpush2.bf16.msra.mxu0 0
    %2752 = vmatprep.mubr.bf16.mxu0 0
    %2753 = vmatmul.mubr.bf16.gmra.mxu0 %v2715
    %v2754 = vpop.f32.mrf.mxu0
    %v2755 = vadd.f32 0.0, %v2754
    %v2756 = vpop.f32.mrf.mxu0
    %v2757 = vpop.f32.mrf.mxu0
    %v2758 = vpop.f32.mrf.mxu0
    %2759 = vdwg.mxu0
    %v2761 = vsel %vm1094, %v2617, 0
    %v2764 = vsel %vm1194, %v2145, 0
    %2766 = vmatprep.subr.bf16.mxu0 0
    %2767 = vmatpush1.bf16.msra.mxu0 0
    %2768 = vmatprep.subr.bf16.mxu0 0
    %2769 = vmatpush1.bf16.msra.mxu0 0
    %2770 = vmatprep.subr.bf16.mxu0 0
    %2771 = vmatpush1.bf16.msra.mxu0 0
    %2772 = vmatprep.subr.bf16.mxu0 0
    %2773 = vmatpush1.bf16.msra.mxu0 0
    %2774 = vmatprep.subr.bf16.mxu0 0
    %2775 = vmatpush1.bf16.msra.mxu0 0
    %2776 = vmatprep.subr.bf16.mxu0 0
    %2777 = vmatpush1.bf16.msra.mxu0 0
    %2778 = vmatprep.subr.bf16.mxu0 0
    %2779 = vmatpush1.bf16.msra.mxu0 0
    %2780 = vmatprep.subr.bf16.mxu0 0
    %2781 = vmatpush1.bf16.msra.mxu0 %v2764
    %2782 = vmatprep.subr.bf16.mxu0 0
    %2783 = vmatpush2.bf16.msra.mxu0 0
    %2784 = vmatprep.subr.bf16.mxu0 0
    %2785 = vmatpush2.bf16.msra.mxu0 0
    %2786 = vmatprep.subr.bf16.mxu0 0
    %2787 = vmatpush2.bf16.msra.mxu0 0
    %2788 = vmatprep.subr.bf16.mxu0 0
    %2789 = vmatpush2.bf16.msra.mxu0 0
    %2790 = vmatprep.subr.bf16.mxu0 0
    %2791 = vmatpush2.bf16.msra.mxu0 0
    %2792 = vmatprep.subr.bf16.mxu0 0
    %2793 = vmatpush2.bf16.msra.mxu0 0
    %2794 = vmatprep.subr.bf16.mxu0 0
    %2795 = vmatpush2.bf16.msra.mxu0 0
    %2796 = vmatprep.subr.bf16.mxu0 0
    %2797 = vmatpush2.bf16.msra.mxu0 0
    %2798 = vmatprep.mubr.bf16.mxu0 0
    %2799 = vmatmul.mubr.bf16.gmra.mxu0 %v2761
    %v2800 = vpop.f32.mrf.mxu0
    %v2801 = vadd.f32 0.0, %v2800
    %v2802 = vpop.f32.mrf.mxu0
    %v2803 = vpop.f32.mrf.mxu0
    %v2804 = vpop.f32.mrf.mxu0
    %2805 = vdwg.mxu0
    %v2807 = vsel %vm1094, %v2618, 0
    %v2810 = vsel %vm1194, %v2146, 0
    %2812 = vmatprep.subr.bf16.mxu0 0
    %2813 = vmatpush1.bf16.msra.mxu0 0
    %2814 = vmatprep.subr.bf16.mxu0 0
    %2815 = vmatpush1.bf16.msra.mxu0 0
    %2816 = vmatprep.subr.bf16.mxu0 0
    %2817 = vmatpush1.bf16.msra.mxu0 0
    %2818 = vmatprep.subr.bf16.mxu0 0
    %2819 = vmatpush1.bf16.msra.mxu0 0
    %2820 = vmatprep.subr.bf16.mxu0 0
    %2821 = vmatpush1.bf16.msra.mxu0 0
    %2822 = vmatprep.subr.bf16.mxu0 0
    %2823 = vmatpush1.bf16.msra.mxu0 0
    %2824 = vmatprep.subr.bf16.mxu0 0
    %2825 = vmatpush1.bf16.msra.mxu0 0
    %2826 = vmatprep.subr.bf16.mxu0 0
    %2827 = vmatpush1.bf16.msra.mxu0 %v2810
    %2828 = vmatprep.subr.bf16.mxu0 0
    %2829 = vmatpush2.bf16.msra.mxu0 0
    %2830 = vmatprep.subr.bf16.mxu0 0
    %2831 = vmatpush2.bf16.msra.mxu0 0
    %2832 = vmatprep.subr.bf16.mxu0 0
    %2833 = vmatpush2.bf16.msra.mxu0 0
    %2834 = vmatprep.subr.bf16.mxu0 0
    %2835 = vmatpush2.bf16.msra.mxu0 0
    %2836 = vmatprep.subr.bf16.mxu0 0
    %2837 = vmatpush2.bf16.msra.mxu0 0
    %2838 = vmatprep.subr.bf16.mxu0 0
    %2839 = vmatpush2.bf16.msra.mxu0 0
    %2840 = vmatprep.subr.bf16.mxu0 0
    %2841 = vmatpush2.bf16.msra.mxu0 0
    %2842 = vmatprep.subr.bf16.mxu0 0
    %2843 = vmatpush2.bf16.msra.mxu0 0
    %2844 = vmatprep.mubr.bf16.mxu0 0
    %2845 = vmatmul.mubr.bf16.gmra.mxu0 %v2807
    %v2846 = vpop.f32.mrf.mxu0
    %v2847 = vadd.f32 0.0, %v2846
    %v2848 = vpop.f32.mrf.mxu0
    %v2849 = vpop.f32.mrf.mxu0
    %v2850 = vpop.f32.mrf.mxu0
    %2851 = vdwg.mxu0
    %v2853 = vsel %vm1094, %v2619, 0
    %v2856 = vsel %vm1194, %v2147, 0
    %2858 = vmatprep.subr.bf16.mxu0 0
    %2859 = vmatpush1.bf16.msra.mxu0 0
    %2860 = vmatprep.subr.bf16.mxu0 0
    %2861 = vmatpush1.bf16.msra.mxu0 0
    %2862 = vmatprep.subr.bf16.mxu0 0
    %2863 = vmatpush1.bf16.msra.mxu0 0
    %2864 = vmatprep.subr.bf16.mxu0 0
    %2865 = vmatpush1.bf16.msra.mxu0 0
    %2866 = vmatprep.subr.bf16.mxu0 0
    %2867 = vmatpush1.bf16.msra.mxu0 0
    %2868 = vmatprep.subr.bf16.mxu0 0
    %2869 = vmatpush1.bf16.msra.mxu0 0
    %2870 = vmatprep.subr.bf16.mxu0 0
    %2871 = vmatpush1.bf16.msra.mxu0 0
    %2872 = vmatprep.subr.bf16.mxu0 0
    %2873 = vmatpush1.bf16.msra.mxu0 %v2856
    %2874 = vmatprep.subr.bf16.mxu0 0
    %2875 = vmatpush2.bf16.msra.mxu0 0
    %2876 = vmatprep.subr.bf16.mxu0 0
    %2877 = vmatpush2.bf16.msra.mxu0 0
    %2878 = vmatprep.subr.bf16.mxu0 0
    %2879 = vmatpush2.bf16.msra.mxu0 0
    %2880 = vmatprep.subr.bf16.mxu0 0
    %2881 = vmatpush2.bf16.msra.mxu0 0
    %2882 = vmatprep.subr.bf16.mxu0 0
    %2883 = vmatpush2.bf16.msra.mxu0 0
    %2884 = vmatprep.subr.bf16.mxu0 0
    %2885 = vmatpush2.bf16.msra.mxu0 0
    %2886 = vmatprep.subr.bf16.mxu0 0
    %2887 = vmatpush2.bf16.msra.mxu0 0
    %2888 = vmatprep.subr.bf16.mxu0 0
    %2889 = vmatpush2.bf16.msra.mxu0 0
    %2890 = vmatprep.mubr.bf16.mxu0 0
    %2891 = vmatmul.mubr.bf16.gmra.mxu0 %v2853
    %v2892 = vpop.f32.mrf.mxu0
    %v2893 = vadd.f32 0.0, %v2892
    %v2894 = vpop.f32.mrf.mxu0
    %v2895 = vpop.f32.mrf.mxu0
    %v2896 = vpop.f32.mrf.mxu0
    %2897 = vdwg.mxu0
    %v2899 = vsel %vm1094, %v2620, 0
    %v2902 = vsel %vm1194, %v2148, 0
    %2904 = vmatprep.subr.bf16.mxu0 0
    %2905 = vmatpush1.bf16.msra.mxu0 0
    %2906 = vmatprep.subr.bf16.mxu0 0
    %2907 = vmatpush1.bf16.msra.mxu0 0
    %2908 = vmatprep.subr.bf16.mxu0 0
    %2909 = vmatpush1.bf16.msra.mxu0 0
    %2910 = vmatprep.subr.bf16.mxu0 0
    %2911 = vmatpush1.bf16.msra.mxu0 0
    %2912 = vmatprep.subr.bf16.mxu0 0
    %2913 = vmatpush1.bf16.msra.mxu0 0
    %2914 = vmatprep.subr.bf16.mxu0 0
    %2915 = vmatpush1.bf16.msra.mxu0 0
    %2916 = vmatprep.subr.bf16.mxu0 0
    %2917 = vmatpush1.bf16.msra.mxu0 0
    %2918 = vmatprep.subr.bf16.mxu0 0
    %2919 = vmatpush1.bf16.msra.mxu0 %v2902
    %2920 = vmatprep.subr.bf16.mxu0 0
    %2921 = vmatpush2.bf16.msra.mxu0 0
    %2922 = vmatprep.subr.bf16.mxu0 0
    %2923 = vmatpush2.bf16.msra.mxu0 0
    %2924 = vmatprep.subr.bf16.mxu0 0
    %2925 = vmatpush2.bf16.msra.mxu0 0
    %2926 = vmatprep.subr.bf16.mxu0 0
    %2927 = vmatpush2.bf16.msra.mxu0 0
    %2928 = vmatprep.subr.bf16.mxu0 0
    %2929 = vmatpush2.bf16.msra.mxu0 0
    %2930 = vmatprep.subr.bf16.mxu0 0
    %2931 = vmatpush2.bf16.msra.mxu0 0
    %2932 = vmatprep.subr.bf16.mxu0 0
    %2933 = vmatpush2.bf16.msra.mxu0 0
    %2934 = vmatprep.subr.bf16.mxu0 0
    %2935 = vmatpush2.bf16.msra.mxu0 0
    %2936 = vmatprep.mubr.bf16.mxu0 0
    %2937 = vmatmul.mubr.bf16.gmra.mxu0 %v2899
    %v2938 = vpop.f32.mrf.mxu0
    %v2939 = vadd.f32 0.0, %v2938
    %v2940 = vpop.f32.mrf.mxu0
    %v2941 = vpop.f32.mrf.mxu0
    %v2942 = vpop.f32.mrf.mxu0
    %2943 = vdwg.mxu0
    %v2945 = vsel %vm1094, %v2621, 0
    %v2948 = vsel %vm1194, %v2149, 0
    %2950 = vmatprep.subr.bf16.mxu0 0
    %2951 = vmatpush1.bf16.msra.mxu0 0
    %2952 = vmatprep.subr.bf16.mxu0 0
    %2953 = vmatpush1.bf16.msra.mxu0 0
    %2954 = vmatprep.subr.bf16.mxu0 0
    %2955 = vmatpush1.bf16.msra.mxu0 0
    %2956 = vmatprep.subr.bf16.mxu0 0
    %2957 = vmatpush1.bf16.msra.mxu0 0
    %2958 = vmatprep.subr.bf16.mxu0 0
    %2959 = vmatpush1.bf16.msra.mxu0 0
    %2960 = vmatprep.subr.bf16.mxu0 0
    %2961 = vmatpush1.bf16.msra.mxu0 0
    %2962 = vmatprep.subr.bf16.mxu0 0
    %2963 = vmatpush1.bf16.msra.mxu0 0
    %2964 = vmatprep.subr.bf16.mxu0 0
    %2965 = vmatpush1.bf16.msra.mxu0 %v2948
    %2966 = vmatprep.subr.bf16.mxu0 0
    %2967 = vmatpush2.bf16.msra.mxu0 0
    %2968 = vmatprep.subr.bf16.mxu0 0
    %2969 = vmatpush2.bf16.msra.mxu0 0
    %2970 = vmatprep.subr.bf16.mxu0 0
    %2971 = vmatpush2.bf16.msra.mxu0 0
    %2972 = vmatprep.subr.bf16.mxu0 0
    %2973 = vmatpush2.bf16.msra.mxu0 0
    %2974 = vmatprep.subr.bf16.mxu0 0
    %2975 = vmatpush2.bf16.msra.mxu0 0
    %2976 = vmatprep.subr.bf16.mxu0 0
    %2977 = vmatpush2.bf16.msra.mxu0 0
    %2978 = vmatprep.subr.bf16.mxu0 0
    %2979 = vmatpush2.bf16.msra.mxu0 0
    %2980 = vmatprep.subr.bf16.mxu0 0
    %2981 = vmatpush2.bf16.msra.mxu0 0
    %2982 = vmatprep.mubr.bf16.mxu0 0
    %2983 = vmatmul.mubr.bf16.gmra.mxu0 %v2945
    %v2984 = vpop.f32.mrf.mxu0
    %v2985 = vadd.f32 0.0, %v2984
    %v2986 = vpop.f32.mrf.mxu0
    %v2987 = vpop.f32.mrf.mxu0
    %v2988 = vpop.f32.mrf.mxu0
    %2989 = vdwg.mxu0
    %2992 = vrot.lane.b32.xlu0 %v2755, 32
    %v2993 = vpop.permute.xlu0 %2992
    %2994 = vrot.lane.b32.xlu0 %v2801, 32
    %v2995 = vpop.permute.xlu0 %2994
    %3000 = vrot.lane.b32.xlu0 %v2847, 64
    %v3001 = vpop.permute.xlu0 %3000
    %3002 = vrot.lane.b32.xlu0 %v2893, 64
    %v3003 = vpop.permute.xlu0 %3002
    %3008 = vrot.lane.b32.xlu0 %v2939, 96
    %v3009 = vpop.permute.xlu0 %3008
    %3010 = vrot.lane.b32.xlu0 %v2985, 96
    %v3011 = vpop.permute.xlu0 %3010
    %v3014 = vsel %vm725, %v2663, %v2993
    %v3015 = vsel %vm725, %v2709, %v2995
    %v3016 = vsel %vm1586, %v3014, %v3001
    %v3017 = vsel %vm1586, %v3015, %v3003
    %v3018 = vsel %vm1589, %v3016, %v3009
    %v3019 = vsel %vm1589, %v3017, %v3011
    %v3020 = vpack.c.bf16 %v3019, %v3018
    %v3022 = vlaneseq
    %v3023 = vshrl.u32 %v3022, 7
    %v3024 = vsub.s32 0, %v3023
    %v3025 = vrot.slane %v1795, %v3024
    %v3043 = vunpack.c.l.b16 %v1779
    %v3044 = vunpack.c.l.b16 %v1780
    %v3045 = vunpack.c.l.b16 %v1781
    %v3046 = vunpack.c.l.b16 %v1782
    %v3047 = vunpack.c.l.b16 %v1783
    %v3048 = vunpack.c.l.b16 %v1784
    %v3049 = vunpack.c.l.b16 %v1785
    %v3050 = vunpack.c.l.b16 %v1786
    %v3051 = vunpack.c.l.b16 %v1787
    %v3052 = vunpack.c.l.b16 %v1788
    %v3053 = vunpack.c.l.b16 %v1789
    %v3054 = vunpack.c.l.b16 %v1790
    %v3055 = vunpack.c.l.b16 %v1791
    %v3056 = vunpack.c.l.b16 %v1792
    %v3057 = vunpack.c.l.b16 %v1793
    %v3058 = vunpack.c.l.b16 %v1794
    %v3059 = vpack.c.b16 %v3044, %v3043
    %v3060 = vpack.c.b16 %v3046, %v3045
    %v3061 = vpack.c.b16 %v3048, %v3047
    %v3062 = vpack.c.b16 %v3050, %v3049
    %v3063 = vpack.c.b16 %v3052, %v3051
    %v3064 = vpack.c.b16 %v3054, %v3053
    %v3065 = vpack.c.b16 %v3056, %v3055
    %v3066 = vpack.c.b16 %v3058, %v3057
    %3075 = vmatprep.subr.bf16.mxu0 0
    %3076 = vmatpush1.bf16.msra.mxu0 %v3066
    %3077 = vmatprep.subr.bf16.mxu0 0
    %3078 = vmatpush1.bf16.msra.mxu0 %v3065
    %3079 = vmatprep.subr.bf16.mxu0 0
    %3080 = vmatpush1.bf16.msra.mxu0 %v3064
    %3081 = vmatprep.subr.bf16.mxu0 0
    %3082 = vmatpush1.bf16.msra.mxu0 %v3063
    %3083 = vmatprep.subr.bf16.mxu0 0
    %3084 = vmatpush1.bf16.msra.mxu0 %v3062
    %3085 = vmatprep.subr.bf16.mxu0 0
    %3086 = vmatpush1.bf16.msra.mxu0 %v3061
    %3087 = vmatprep.subr.bf16.mxu0 0
    %3088 = vmatpush1.bf16.msra.mxu0 %v3060
    %3089 = vmatprep.subr.bf16.mxu0 0
    %3090 = vmatpush1.bf16.msra.mxu0 %v3059
    %3091 = vmatprep.subr.bf16.mxu0 0
    %3092 = vmatpush2.bf16.msra.mxu0 0
    %3093 = vmatprep.subr.bf16.mxu0 0
    %3094 = vmatpush2.bf16.msra.mxu0 0
    %3095 = vmatprep.subr.bf16.mxu0 0
    %3096 = vmatpush2.bf16.msra.mxu0 0
    %3097 = vmatprep.subr.bf16.mxu0 0
    %3098 = vmatpush2.bf16.msra.mxu0 0
    %3099 = vmatprep.subr.bf16.mxu0 0
    %3100 = vmatpush2.bf16.msra.mxu0 0
    %3101 = vmatprep.subr.bf16.mxu0 0
    %3102 = vmatpush2.bf16.msra.mxu0 0
    %3103 = vmatprep.subr.bf16.mxu0 0
    %3104 = vmatpush2.bf16.msra.mxu0 0
    %3105 = vmatprep.subr.bf16.mxu0 0
    %3106 = vmatpush2.bf16.msra.mxu0 0
    %3107 = vmatprep.mubr.bf16.mxu0 0
    %3108 = vmatmul.mubr.bf16.gmra.mxu0 %v3020
    %v3109 = vpop.f32.mrf.mxu0
    %v3110 = vadd.f32 %v3025, %v3109
    %v3111 = vpop.f32.mrf.mxu0
    %v3112 = vpop.f32.mrf.mxu0
    %v3113 = vadd.f32 %v3025, %v3112
    %v3114 = vpop.f32.mrf.mxu0
    %3115 = vdwg.mxu0
    %v3116 = vadd.f32 %v3110, %v1729
    %v3117 = vadd.f32 %v3113, %v1730
    %v3118 = vld [vmem:[%s16] sm:$0x1]
    %v3119 = vld [vmem:[%s17] sm:$0x1]
    %3120 = vadd.xlane.f32.xlu0 %v3116
    %v3121 = vpop.xlane.xlu0 %3120
    %3122 = vadd.xlane.f32.xlu0 %v3117
    %v3123 = vpop.xlane.xlu0 %3122
    %v3124 = vmul.f32 %v3121, %v1696
    %v3125 = vmul.f32 %v3123, %v1696
    %v3126 = vsub.f32 %v3116, %v3124
    %v3127 = vsub.f32 %v3117, %v3125
    %v3128 = vmul.f32 %v3126, %v3126
    %v3129 = vmul.f32 %v3127, %v3127
    %3130 = vadd.xlane.f32.xlu0 %v3128
    %v3131 = vpop.xlane.xlu0 %3130
    %3132 = vadd.xlane.f32.xlu0 %v3129
    %v3133 = vpop.xlane.xlu0 %3132
    %v3134 = vmul.f32 %v3131, %v1696
    %v3135 = vmul.f32 %v3133, %v1696
    %v3136 = vadd.f32 %v3134, 1e-05
    %v3137 = vadd.f32 %v3135, 1e-05
    %v3138 = vrsqrt.pop %v3136
    %v3139 = vrsqrt.pop %v3137
    %v3140 = vmul.f32 %v3126, %v3138
    %v3141 = vmul.f32 %v3127, %v3139
    %v3143 = vlaneseq
    %v3144 = vshrl.u32 %v3143, 7
    %v3145 = vsub.s32 0, %v3144
    %v3146 = vrot.slane %v3118, %v3145
    %v3148 = vmul.f32 %v3140, %v3146
    %v3149 = vmul.f32 %v3141, %v3146
    %v3151 = vlaneseq
    %v3152 = vshrl.u32 %v3151, 7
    %v3153 = vsub.s32 0, %v3152
    %v3154 = vrot.slane %v3119, %v3153
    %v3156 = vadd.f32 %v3148, %v3154
    %v3157 = vadd.f32 %v3149, %v3154
    %v3158 = vpack.c.bf16 %v3157, %v3156
    %v3159 = vld [vmem:[#allocation20] sm:$0xff]
    %v3160 = vld [vmem:[#allocation20 + $0x8] sm:$0xff]
    %v3161 = vld [vmem:[#allocation20 + $0x10] sm:$0xff]
    %v3162 = vld [vmem:[#allocation20 + $0x18] sm:$0xff]
    %v3163 = vld [vmem:[#allocation20 + $0x20] sm:$0xff]
    %v3164 = vld [vmem:[#allocation20 + $0x28] sm:$0xff]
    %v3165 = vld [vmem:[#allocation20 + $0x30] sm:$0xff]
    %v3166 = vld [vmem:[#allocation20 + $0x38] sm:$0xff]
    %v3167 = vld [vmem:[#allocation20 + $0x40] sm:$0xff]
    %v3168 = vld [vmem:[#allocation20 + $0x48] sm:$0xff]
    %v3169 = vld [vmem:[#allocation20 + $0x50] sm:$0xff]
    %v3170 = vld [vmem:[#allocation20 + $0x58] sm:$0xff]
    %v3171 = vld [vmem:[#allocation20 + $0x60] sm:$0xff]
    %v3172 = vld [vmem:[#allocation20 + $0x68] sm:$0xff]
    %v3173 = vld [vmem:[#allocation20 + $0x70] sm:$0xff]
    %v3174 = vld [vmem:[#allocation20 + $0x78] sm:$0xff]
    %v3175 = vld [vmem:[#allocation20 + $0x80] sm:$0xff]
    %v3176 = vld [vmem:[#allocation20 + $0x88] sm:$0xff]
    %v3177 = vld [vmem:[#allocation20 + $0x90] sm:$0xff]
    %v3178 = vld [vmem:[#allocation20 + $0x98] sm:$0xff]
    %v3179 = vld [vmem:[#allocation20 + $0xa0] sm:$0xff]
    %v3180 = vld [vmem:[#allocation20 + $0xa8] sm:$0xff]
    %v3181 = vld [vmem:[#allocation20 + $0xb0] sm:$0xff]
    %v3182 = vld [vmem:[#allocation20 + $0xb8] sm:$0xff]
    %v3183 = vld [vmem:[#allocation20 + $0xc0] sm:$0xff]
    %v3184 = vld [vmem:[#allocation20 + $0xc8] sm:$0xff]
    %v3185 = vld [vmem:[#allocation20 + $0xd0] sm:$0xff]
    %v3186 = vld [vmem:[#allocation20 + $0xd8] sm:$0xff]
    %v3187 = vld [vmem:[#allocation20 + $0xe0] sm:$0xff]
    %v3188 = vld [vmem:[#allocation20 + $0xe8] sm:$0xff]
    %v3189 = vld [vmem:[#allocation20 + $0xf0] sm:$0xff]
    %v3190 = vld [vmem:[#allocation20 + $0xf8] sm:$0xff]
    %v3191 = vld [vmem:[%s19] sm:$0xf]
    %v3193 = vlaneseq
    %v3194 = vshrl.u32 %v3193, 7
    %v3195 = vsub.s32 0, %v3194
    %v3196 = vrot.slane %v3191, %v3195
    %v3197 = vlaneseq
    %v3198 = vshrl.u32 %v3197, 7
    %v3199 = vsub.s32 1, %v3198
    %v3200 = vrot.slane %v3191, %v3199
    %v3201 = vlaneseq
    %v3202 = vshrl.u32 %v3201, 7
    %v3203 = vsub.s32 2, %v3202
    %v3204 = vrot.slane %v3191, %v3203
    %v3205 = vlaneseq
    %v3206 = vshrl.u32 %v3205, 7
    %v3207 = vsub.s32 3, %v3206
    %v3208 = vrot.slane %v3191, %v3207
    %v3245 = vunpack.c.l.b16 %v3159
    %v3246 = vunpack.c.h.b16 %v3159
    %v3247 = vunpack.c.l.b16 %v3160
    %v3248 = vunpack.c.h.b16 %v3160
    %v3249 = vunpack.c.l.b16 %v3161
    %v3250 = vunpack.c.h.b16 %v3161
    %v3251 = vunpack.c.l.b16 %v3162
    %v3252 = vunpack.c.h.b16 %v3162
    %v3253 = vunpack.c.l.b16 %v3163
    %v3254 = vunpack.c.h.b16 %v3163
    %v3255 = vunpack.c.l.b16 %v3164
    %v3256 = vunpack.c.h.b16 %v3164
    %v3257 = vunpack.c.l.b16 %v3165
    %v3258 = vunpack.c.h.b16 %v3165
    %v3259 = vunpack.c.l.b16 %v3166
    %v3260 = vunpack.c.h.b16 %v3166
    %v3261 = vunpack.c.l.b16 %v3167
    %v3262 = vunpack.c.h.b16 %v3167
    %v3263 = vunpack.c.l.b16 %v3168
    %v3264 = vunpack.c.h.b16 %v3168
    %v3265 = vunpack.c.l.b16 %v3169
    %v3266 = vunpack.c.h.b16 %v3169
    %v3267 = vunpack.c.l.b16 %v3170
    %v3268 = vunpack.c.h.b16 %v3170
    %v3269 = vunpack.c.l.b16 %v3171
    %v3270 = vunpack.c.h.b16 %v3171
    %v3271 = vunpack.c.l.b16 %v3172
    %v3272 = vunpack.c.h.b16 %v3172
    %v3273 = vunpack.c.l.b16 %v3173
    %v3274 = vunpack.c.h.b16 %v3173
    %v3275 = vunpack.c.l.b16 %v3174
    %v3276 = vunpack.c.h.b16 %v3174
    %v3277 = vunpack.c.l.b16 %v3175
    %v3278 = vunpack.c.h.b16 %v3175
    %v3279 = vunpack.c.l.b16 %v3176
    %v3280 = vunpack.c.h.b16 %v3176
    %v3281 = vunpack.c.l.b16 %v3177
    %v3282 = vunpack.c.h.b16 %v3177
    %v3283 = vunpack.c.l.b16 %v3178
    %v3284 = vunpack.c.h.b16 %v3178
    %v3285 = vunpack.c.l.b16 %v3179
    %v3286 = vunpack.c.h.b16 %v3179
    %v3287 = vunpack.c.l.b16 %v3180
    %v3288 = vunpack.c.h.b16 %v3180
    %v3289 = vunpack.c.l.b16 %v3181
    %v3290 = vunpack.c.h.b16 %v3181
    %v3291 = vunpack.c.l.b16 %v3182
    %v3292 = vunpack.c.h.b16 %v3182
    %v3293 = vunpack.c.l.b16 %v3183
    %v3294 = vunpack.c.h.b16 %v3183
    %v3295 = vunpack.c.l.b16 %v3184
    %v3296 = vunpack.c.h.b16 %v3184
    %v3297 = vunpack.c.l.b16 %v3185
    %v3298 = vunpack.c.h.b16 %v3185
    %v3299 = vunpack.c.l.b16 %v3186
    %v3300 = vunpack.c.h.b16 %v3186
    %v3301 = vunpack.c.l.b16 %v3187
    %v3302 = vunpack.c.h.b16 %v3187
    %v3303 = vunpack.c.l.b16 %v3188
    %v3304 = vunpack.c.h.b16 %v3188
    %v3305 = vunpack.c.l.b16 %v3189
    %v3306 = vunpack.c.h.b16 %v3189
    %v3307 = vunpack.c.l.b16 %v3190
    %v3308 = vunpack.c.h.b16 %v3190
    %v3309 = vpack.c.b16 %v3249, %v3245
    %v3310 = vpack.c.b16 %v3250, %v3246
    %v3311 = vpack.c.b16 %v3251, %v3247
    %v3312 = vpack.c.b16 %v3252, %v3248
    %v3313 = vpack.c.b16 %v3257, %v3253
    %v3314 = vpack.c.b16 %v3258, %v3254
    %v3315 = vpack.c.b16 %v3259, %v3255
    %v3316 = vpack.c.b16 %v3260, %v3256
    %v3317 = vpack.c.b16 %v3265, %v3261
    %v3318 = vpack.c.b16 %v3266, %v3262
    %v3319 = vpack.c.b16 %v3267, %v3263
    %v3320 = vpack.c.b16 %v3268, %v3264
    %v3321 = vpack.c.b16 %v3273, %v3269
    %v3322 = vpack.c.b16 %v3274, %v3270
    %v3323 = vpack.c.b16 %v3275, %v3271
    %v3324 = vpack.c.b16 %v3276, %v3272
    %v3325 = vpack.c.b16 %v3281, %v3277
    %v3326 = vpack.c.b16 %v3282, %v3278
    %v3327 = vpack.c.b16 %v3283, %v3279
    %v3328 = vpack.c.b16 %v3284, %v3280
    %v3329 = vpack.c.b16 %v3289, %v3285
    %v3330 = vpack.c.b16 %v3290, %v3286
    %v3331 = vpack.c.b16 %v3291, %v3287
    %v3332 = vpack.c.b16 %v3292, %v3288
    %v3333 = vpack.c.b16 %v3297, %v3293
    %v3334 = vpack.c.b16 %v3298, %v3294
    %v3335 = vpack.c.b16 %v3299, %v3295
    %v3336 = vpack.c.b16 %v3300, %v3296
    %v3337 = vpack.c.b16 %v3305, %v3301
    %v3338 = vpack.c.b16 %v3306, %v3302
    %v3339 = vpack.c.b16 %v3307, %v3303
    %v3340 = vpack.c.b16 %v3308, %v3304
    %3373 = vmatprep.subr.bf16.mxu0 %v3338
    %3374 = vmatpush1.bf16.msra.mxu0 %v3337
    %3375 = vmatprep.subr.bf16.mxu0 %v3334
    %3376 = vmatpush1.bf16.msra.mxu0 %v3333
    %3377 = vmatprep.subr.bf16.mxu0 %v3330
    %3378 = vmatpush1.bf16.msra.mxu0 %v3329
    %3379 = vmatprep.subr.bf16.mxu0 %v3326
    %3380 = vmatpush1.bf16.msra.mxu0 %v3325
    %3381 = vmatprep.subr.bf16.mxu0 %v3322
    %3382 = vmatpush1.bf16.msra.mxu0 %v3321
    %3383 = vmatprep.subr.bf16.mxu0 %v3318
    %3384 = vmatpush1.bf16.msra.mxu0 %v3317
    %3385 = vmatprep.subr.bf16.mxu0 %v3314
    %3386 = vmatpush1.bf16.msra.mxu0 %v3313
    %3387 = vmatprep.subr.bf16.mxu0 %v3310
    %3388 = vmatpush1.bf16.msra.mxu0 %v3309
    %3389 = vmatprep.subr.bf16.mxu0 0
    %3390 = vmatpush2.bf16.msra.mxu0 0
    %3391 = vmatprep.subr.bf16.mxu0 0
    %3392 = vmatpush2.bf16.msra.mxu0 0
    %3393 = vmatprep.subr.bf16.mxu0 0
    %3394 = vmatpush2.bf16.msra.mxu0 0
    %3395 = vmatprep.subr.bf16.mxu0 0
    %3396 = vmatpush2.bf16.msra.mxu0 0
    %3397 = vmatprep.subr.bf16.mxu0 0
    %3398 = vmatpush2.bf16.msra.mxu0 0
    %3399 = vmatprep.subr.bf16.mxu0 0
    %3400 = vmatpush2.bf16.msra.mxu0 0
    %3401 = vmatprep.subr.bf16.mxu0 0
    %3402 = vmatpush2.bf16.msra.mxu0 0
    %3403 = vmatprep.subr.bf16.mxu0 0
    %3404 = vmatpush2.bf16.msra.mxu0 0
    %3405 = vmatprep.mubr.bf16.mxu0 0
    %3406 = vmatmul.mubr.bf16.gmra.mxu0 %v3158
    %v3407 = vpop.f32.mrf.mxu0
    %v3408 = vadd.f32 %v3196, %v3407
    %v3409 = vpop.f32.mrf.mxu0
    %v3410 = vadd.f32 %v3200, %v3409
    %v3411 = vpop.f32.mrf.mxu0
    %v3412 = vadd.f32 %v3196, %v3411
    %v3413 = vpop.f32.mrf.mxu0
    %v3414 = vadd.f32 %v3200, %v3413
    %3415 = vdwg.mxu0
    %3416 = vmatprep.subr.bf16.mxu0 %v3340
    %3417 = vmatpush1.bf16.msra.mxu0 %v3339
    %3418 = vmatprep.subr.bf16.mxu0 %v3336
    %3419 = vmatpush1.bf16.msra.mxu0 %v3335
    %3420 = vmatprep.subr.bf16.mxu0 %v3332
    %3421 = vmatpush1.bf16.msra.mxu0 %v3331
    %3422 = vmatprep.subr.bf16.mxu0 %v3328
    %3423 = vmatpush1.bf16.msra.mxu0 %v3327
    %3424 = vmatprep.subr.bf16.mxu0 %v3324
    %3425 = vmatpush1.bf16.msra.mxu0 %v3323
    %3426 = vmatprep.subr.bf16.mxu0 %v3320
    %3427 = vmatpush1.bf16.msra.mxu0 %v3319
    %3428 = vmatprep.subr.bf16.mxu0 %v3316
    %3429 = vmatpush1.bf16.msra.mxu0 %v3315
    %3430 = vmatprep.subr.bf16.mxu0 %v3312
    %3431 = vmatpush1.bf16.msra.mxu0 %v3311
    %3432 = vmatprep.subr.bf16.mxu0 0
    %3433 = vmatpush2.bf16.msra.mxu0 0
    %3434 = vmatprep.subr.bf16.mxu0 0
    %3435 = vmatpush2.bf16.msra.mxu0 0
    %3436 = vmatprep.subr.bf16.mxu0 0
    %3437 = vmatpush2.bf16.msra.mxu0 0
    %3438 = vmatprep.subr.bf16.mxu0 0
    %3439 = vmatpush2.bf16.msra.mxu0 0
    %3440 = vmatprep.subr.bf16.mxu0 0
    %3441 = vmatpush2.bf16.msra.mxu0 0
    %3442 = vmatprep.subr.bf16.mxu0 0
    %3443 = vmatpush2.bf16.msra.mxu0 0
    %3444 = vmatprep.subr.bf16.mxu0 0
    %3445 = vmatpush2.bf16.msra.mxu0 0
    %3446 = vmatprep.subr.bf16.mxu0 0
    %3447 = vmatpush2.bf16.msra.mxu0 0
    %3448 = vmatprep.mubr.bf16.mxu0 0
    %3449 = vmatmul.mubr.bf16.gmra.mxu0 %v3158
    %v3450 = vpop.f32.mrf.mxu0
    %v3451 = vadd.f32 %v3204, %v3450
    %v3452 = vpop.f32.mrf.mxu0
    %v3453 = vadd.f32 %v3208, %v3452
    %v3454 = vpop.f32.mrf.mxu0
    %v3455 = vadd.f32 %v3204, %v3454
    %v3456 = vpop.f32.mrf.mxu0
    %v3457 = vadd.f32 %v3208, %v3456
    %3458 = vdwg.mxu0
    %v3459 = vmax.f32 %v3408, 0.0
    %v3460 = vmax.f32 %v3410, 0.0
    %v3461 = vmax.f32 %v3451, 0.0
    %v3462 = vmax.f32 %v3453, 0.0
    %v3463 = vmax.f32 %v3412, 0.0
    %v3464 = vmax.f32 %v3414, 0.0
    %v3465 = vmax.f32 %v3455, 0.0
    %v3466 = vmax.f32 %v3457, 0.0
    %v3467 = vpack.c.bf16 %v3463, %v3459
    %v3468 = vpack.c.bf16 %v3464, %v3460
    %v3469 = vpack.c.bf16 %v3465, %v3461
    %v3470 = vpack.c.bf16 %v3466, %v3462
    %v3471 = vld [vmem:[#allocation22] sm:$0xf]
    %v3472 = vld [vmem:[#allocation22 + $0x4] sm:$0xf]
    %v3473 = vld [vmem:[#allocation22 + $0x8] sm:$0xf]
    %v3474 = vld [vmem:[#allocation22 + $0xc] sm:$0xf]
    %v3475 = vld [vmem:[#allocation22 + $0x10] sm:$0xf]
    %v3476 = vld [vmem:[#allocation22 + $0x14] sm:$0xf]
    %v3477 = vld [vmem:[#allocation22 + $0x18] sm:$0xf]
    %v3478 = vld [vmem:[#allocation22 + $0x1c] sm:$0xf]
    %v3479 = vld [vmem:[#allocation22 + $0x20] sm:$0xf]
    %v3480 = vld [vmem:[#allocation22 + $0x24] sm:$0xf]
    %v3481 = vld [vmem:[#allocation22 + $0x28] sm:$0xf]
    %v3482 = vld [vmem:[#allocation22 + $0x2c] sm:$0xf]
    %v3483 = vld [vmem:[#allocation22 + $0x30] sm:$0xf]
    %v3484 = vld [vmem:[#allocation22 + $0x34] sm:$0xf]
    %v3485 = vld [vmem:[#allocation22 + $0x38] sm:$0xf]
    %v3486 = vld [vmem:[#allocation22 + $0x3c] sm:$0xf]
    %v3487 = vld [vmem:[#allocation22 + $0x40] sm:$0xf]
    %v3488 = vld [vmem:[#allocation22 + $0x44] sm:$0xf]
    %v3489 = vld [vmem:[#allocation22 + $0x48] sm:$0xf]
    %v3490 = vld [vmem:[#allocation22 + $0x4c] sm:$0xf]
    %v3491 = vld [vmem:[#allocation22 + $0x50] sm:$0xf]
    %v3492 = vld [vmem:[#allocation22 + $0x54] sm:$0xf]
    %v3493 = vld [vmem:[#allocation22 + $0x58] sm:$0xf]
    %v3494 = vld [vmem:[#allocation22 + $0x5c] sm:$0xf]
    %v3495 = vld [vmem:[#allocation22 + $0x60] sm:$0xf]
    %v3496 = vld [vmem:[#allocation22 + $0x64] sm:$0xf]
    %v3497 = vld [vmem:[#allocation22 + $0x68] sm:$0xf]
    %v3498 = vld [vmem:[#allocation22 + $0x6c] sm:$0xf]
    %v3499 = vld [vmem:[#allocation22 + $0x70] sm:$0xf]
    %v3500 = vld [vmem:[#allocation22 + $0x74] sm:$0xf]
    %v3501 = vld [vmem:[#allocation22 + $0x78] sm:$0xf]
    %v3502 = vld [vmem:[#allocation22 + $0x7c] sm:$0xf]
    %v3503 = vld [vmem:[#allocation22 + $0x80] sm:$0xf]
    %v3504 = vld [vmem:[#allocation22 + $0x84] sm:$0xf]
    %v3505 = vld [vmem:[#allocation22 + $0x88] sm:$0xf]
    %v3506 = vld [vmem:[#allocation22 + $0x8c] sm:$0xf]
    %v3507 = vld [vmem:[#allocation22 + $0x90] sm:$0xf]
    %v3508 = vld [vmem:[#allocation22 + $0x94] sm:$0xf]
    %v3509 = vld [vmem:[#allocation22 + $0x98] sm:$0xf]
    %v3510 = vld [vmem:[#allocation22 + $0x9c] sm:$0xf]
    %v3511 = vld [vmem:[#allocation22 + $0xa0] sm:$0xf]
    %v3512 = vld [vmem:[#allocation22 + $0xa4] sm:$0xf]
    %v3513 = vld [vmem:[#allocation22 + $0xa8] sm:$0xf]
    %v3514 = vld [vmem:[#allocation22 + $0xac] sm:$0xf]
    %v3515 = vld [vmem:[#allocation22 + $0xb0] sm:$0xf]
    %v3516 = vld [vmem:[#allocation22 + $0xb4] sm:$0xf]
    %v3517 = vld [vmem:[#allocation22 + $0xb8] sm:$0xf]
    %v3518 = vld [vmem:[#allocation22 + $0xbc] sm:$0xf]
    %v3519 = vld [vmem:[#allocation22 + $0xc0] sm:$0xf]
    %v3520 = vld [vmem:[#allocation22 + $0xc4] sm:$0xf]
    %v3521 = vld [vmem:[#allocation22 + $0xc8] sm:$0xf]
    %v3522 = vld [vmem:[#allocation22 + $0xcc] sm:$0xf]
    %v3523 = vld [vmem:[#allocation22 + $0xd0] sm:$0xf]
    %v3524 = vld [vmem:[#allocation22 + $0xd4] sm:$0xf]
    %v3525 = vld [vmem:[#allocation22 + $0xd8] sm:$0xf]
    %v3526 = vld [vmem:[#allocation22 + $0xdc] sm:$0xf]
    %v3527 = vld [vmem:[#allocation22 + $0xe0] sm:$0xf]
    %v3528 = vld [vmem:[#allocation22 + $0xe4] sm:$0xf]
    %v3529 = vld [vmem:[#allocation22 + $0xe8] sm:$0xf]
    %v3530 = vld [vmem:[#allocation22 + $0xec] sm:$0xf]
    %v3531 = vld [vmem:[#allocation22 + $0xf0] sm:$0xf]
    %v3532 = vld [vmem:[#allocation22 + $0xf4] sm:$0xf]
    %v3533 = vld [vmem:[#allocation22 + $0xf8] sm:$0xf]
    %v3534 = vld [vmem:[#allocation22 + $0xfc] sm:$0xf]
    %v3535 = vld [vmem:[%s21] sm:$0x1]
    %v3537 = vlaneseq
    %v3538 = vshrl.u32 %v3537, 7
    %v3539 = vsub.s32 0, %v3538
    %v3540 = vrot.slane %v3535, %v3539
    %v3606 = vunpack.c.l.b16 %v3471
    %v3607 = vunpack.c.l.b16 %v3472
    %v3608 = vunpack.c.l.b16 %v3473
    %v3609 = vunpack.c.l.b16 %v3474
    %v3610 = vunpack.c.l.b16 %v3475
    %v3611 = vunpack.c.l.b16 %v3476
    %v3612 = vunpack.c.l.b16 %v3477
    %v3613 = vunpack.c.l.b16 %v3478
    %v3614 = vunpack.c.l.b16 %v3479
    %v3615 = vunpack.c.l.b16 %v3480
    %v3616 = vunpack.c.l.b16 %v3481
    %v3617 = vunpack.c.l.b16 %v3482
    %v3618 = vunpack.c.l.b16 %v3483
    %v3619 = vunpack.c.l.b16 %v3484
    %v3620 = vunpack.c.l.b16 %v3485
    %v3621 = vunpack.c.l.b16 %v3486
    %v3622 = vunpack.c.l.b16 %v3487
    %v3623 = vunpack.c.l.b16 %v3488
    %v3624 = vunpack.c.l.b16 %v3489
    %v3625 = vunpack.c.l.b16 %v3490
    %v3626 = vunpack.c.l.b16 %v3491
    %v3627 = vunpack.c.l.b16 %v3492
    %v3628 = vunpack.c.l.b16 %v3493
    %v3629 = vunpack.c.l.b16 %v3494
    %v3630 = vunpack.c.l.b16 %v3495
    %v3631 = vunpack.c.l.b16 %v3496
    %v3632 = vunpack.c.l.b16 %v3497
    %v3633 = vunpack.c.l.b16 %v3498
    %v3634 = vunpack.c.l.b16 %v3499
    %v3635 = vunpack.c.l.b16 %v3500
    %v3636 = vunpack.c.l.b16 %v3501
    %v3637 = vunpack.c.l.b16 %v3502
    %v3638 = vunpack.c.l.b16 %v3503
    %v3639 = vunpack.c.l.b16 %v3504
    %v3640 = vunpack.c.l.b16 %v3505
    %v3641 = vunpack.c.l.b16 %v3506
    %v3642 = vunpack.c.l.b16 %v3507
    %v3643 = vunpack.c.l.b16 %v3508
    %v3644 = vunpack.c.l.b16 %v3509
    %v3645 = vunpack.c.l.b16 %v3510
    %v3646 = vunpack.c.l.b16 %v3511
    %v3647 = vunpack.c.l.b16 %v3512
    %v3648 = vunpack.c.l.b16 %v3513
    %v3649 = vunpack.c.l.b16 %v3514
    %v3650 = vunpack.c.l.b16 %v3515
    %v3651 = vunpack.c.l.b16 %v3516
    %v3652 = vunpack.c.l.b16 %v3517
    %v3653 = vunpack.c.l.b16 %v3518
    %v3654 = vunpack.c.l.b16 %v3519
    %v3655 = vunpack.c.l.b16 %v3520
    %v3656 = vunpack.c.l.b16 %v3521
    %v3657 = vunpack.c.l.b16 %v3522
    %v3658 = vunpack.c.l.b16 %v3523
    %v3659 = vunpack.c.l.b16 %v3524
    %v3660 = vunpack.c.l.b16 %v3525
    %v3661 = vunpack.c.l.b16 %v3526
    %v3662 = vunpack.c.l.b16 %v3527
    %v3663 = vunpack.c.l.b16 %v3528
    %v3664 = vunpack.c.l.b16 %v3529
    %v3665 = vunpack.c.l.b16 %v3530
    %v3666 = vunpack.c.l.b16 %v3531
    %v3667 = vunpack.c.l.b16 %v3532
    %v3668 = vunpack.c.l.b16 %v3533
    %v3669 = vunpack.c.l.b16 %v3534
    %v3670 = vpack.c.b16 %v3607, %v3606
    %v3671 = vpack.c.b16 %v3609, %v3608
    %v3672 = vpack.c.b16 %v3611, %v3610
    %v3673 = vpack.c.b16 %v3613, %v3612
    %v3674 = vpack.c.b16 %v3615, %v3614
    %v3675 = vpack.c.b16 %v3617, %v3616
    %v3676 = vpack.c.b16 %v3619, %v3618
    %v3677 = vpack.c.b16 %v3621, %v3620
    %v3678 = vpack.c.b16 %v3623, %v3622
    %v3679 = vpack.c.b16 %v3625, %v3624
    %v3680 = vpack.c.b16 %v3627, %v3626
    %v3681 = vpack.c.b16 %v3629, %v3628
    %v3682 = vpack.c.b16 %v3631, %v3630
    %v3683 = vpack.c.b16 %v3633, %v3632
    %v3684 = vpack.c.b16 %v3635, %v3634
    %v3685 = vpack.c.b16 %v3637, %v3636
    %v3686 = vpack.c.b16 %v3639, %v3638
    %v3687 = vpack.c.b16 %v3641, %v3640
    %v3688 = vpack.c.b16 %v3643, %v3642
    %v3689 = vpack.c.b16 %v3645, %v3644
    %v3690 = vpack.c.b16 %v3647, %v3646
    %v3691 = vpack.c.b16 %v3649, %v3648
    %v3692 = vpack.c.b16 %v3651, %v3650
    %v3693 = vpack.c.b16 %v3653, %v3652
    %v3694 = vpack.c.b16 %v3655, %v3654
    %v3695 = vpack.c.b16 %v3657, %v3656
    %v3696 = vpack.c.b16 %v3659, %v3658
    %v3697 = vpack.c.b16 %v3661, %v3660
    %v3698 = vpack.c.b16 %v3663, %v3662
    %v3699 = vpack.c.b16 %v3665, %v3664
    %v3700 = vpack.c.b16 %v3667, %v3666
    %v3701 = vpack.c.b16 %v3669, %v3668
    %3734 = vmatprep.subr.bf16.mxu0 0
    %3735 = vmatpush1.bf16.msra.mxu0 %v3677
    %3736 = vmatprep.subr.bf16.mxu0 0
    %3737 = vmatpush1.bf16.msra.mxu0 %v3676
    %3738 = vmatprep.subr.bf16.mxu0 0
    %3739 = vmatpush1.bf16.msra.mxu0 %v3675
    %3740 = vmatprep.subr.bf16.mxu0 0
    %3741 = vmatpush1.bf16.msra.mxu0 %v3674
    %3742 = vmatprep.subr.bf16.mxu0 0
    %3743 = vmatpush1.bf16.msra.mxu0 %v3673
    %3744 = vmatprep.subr.bf16.mxu0 0
    %3745 = vmatpush1.bf16.msra.mxu0 %v3672
    %3746 = vmatprep.subr.bf16.mxu0 0
    %3747 = vmatpush1.bf16.msra.mxu0 %v3671
    %3748 = vmatprep.subr.bf16.mxu0 0
    %3749 = vmatpush1.bf16.msra.mxu0 %v3670
    %3750 = vmatprep.subr.bf16.mxu0 0
    %3751 = vmatpush2.bf16.msra.mxu0 %v3685
    %3752 = vmatprep.subr.bf16.mxu0 0
    %3753 = vmatpush2.bf16.msra.mxu0 %v3684
    %3754 = vmatprep.subr.bf16.mxu0 0
    %3755 = vmatpush2.bf16.msra.mxu0 %v3683
    %3756 = vmatprep.subr.bf16.mxu0 0
    %3757 = vmatpush2.bf16.msra.mxu0 %v3682
    %3758 = vmatprep.subr.bf16.mxu0 0
    %3759 = vmatpush2.bf16.msra.mxu0 %v3681
    %3760 = vmatprep.subr.bf16.mxu0 0
    %3761 = vmatpush2.bf16.msra.mxu0 %v3680
    %3762 = vmatprep.subr.bf16.mxu0 0
    %3763 = vmatpush2.bf16.msra.mxu0 %v3679
    %3764 = vmatprep.subr.bf16.mxu0 0
    %3765 = vmatpush2.bf16.msra.mxu0 %v3678
    %3766 = vmatprep.mubr.bf16.mxu0 %v3468
    %3767 = vmatmul.mubr.bf16.gmra.mxu0 %v3467
    %v3768 = vpop.f32.mrf.mxu0
    %v3769 = vadd.f32 %v3540, %v3768
    %v3770 = vpop.f32.mrf.mxu0
    %v3771 = vpop.f32.mrf.mxu0
    %v3772 = vadd.f32 %v3540, %v3771
    %v3773 = vpop.f32.mrf.mxu0
    %3774 = vdwg.mxu0
    %3775 = vmatprep.subr.bf16.mxu0 0
    %3776 = vmatpush1.bf16.msra.mxu0 %v3693
    %3777 = vmatprep.subr.bf16.mxu0 0
    %3778 = vmatpush1.bf16.msra.mxu0 %v3692
    %3779 = vmatprep.subr.bf16.mxu0 0
    %3780 = vmatpush1.bf16.msra.mxu0 %v3691
    %3781 = vmatprep.subr.bf16.mxu0 0
    %3782 = vmatpush1.bf16.msra.mxu0 %v3690
    %3783 = vmatprep.subr.bf16.mxu0 0
    %3784 = vmatpush1.bf16.msra.mxu0 %v3689
    %3785 = vmatprep.subr.bf16.mxu0 0
    %3786 = vmatpush1.bf16.msra.mxu0 %v3688
    %3787 = vmatprep.subr.bf16.mxu0 0
    %3788 = vmatpush1.bf16.msra.mxu0 %v3687
    %3789 = vmatprep.subr.bf16.mxu0 0
    %3790 = vmatpush1.bf16.msra.mxu0 %v3686
    %3791 = vmatprep.subr.bf16.mxu0 0
    %3792 = vmatpush2.bf16.msra.mxu0 %v3701
    %3793 = vmatprep.subr.bf16.mxu0 0
    %3794 = vmatpush2.bf16.msra.mxu0 %v3700
    %3795 = vmatprep.subr.bf16.mxu0 0
    %3796 = vmatpush2.bf16.msra.mxu0 %v3699
    %3797 = vmatprep.subr.bf16.mxu0 0
    %3798 = vmatpush2.bf16.msra.mxu0 %v3698
    %3799 = vmatprep.subr.bf16.mxu0 0
    %3800 = vmatpush2.bf16.msra.mxu0 %v3697
    %3801 = vmatprep.subr.bf16.mxu0 0
    %3802 = vmatpush2.bf16.msra.mxu0 %v3696
    %3803 = vmatprep.subr.bf16.mxu0 0
    %3804 = vmatpush2.bf16.msra.mxu0 %v3695
    %3805 = vmatprep.subr.bf16.mxu0 0
    %3806 = vmatpush2.bf16.msra.mxu0 %v3694
    %3807 = vmatprep.mubr.bf16.mxu0 %v3470
    %3808 = vmatmul.mubr.bf16.gmra.mxu0 %v3469
    %v3809 = vpop.f32.mrf.mxu0
    %v3810 = vadd.f32 %v3769, %v3809
    %v3811 = vpop.f32.mrf.mxu0
    %v3812 = vpop.f32.mrf.mxu0
    %v3813 = vadd.f32 %v3772, %v3812
    %v3814 = vpop.f32.mrf.mxu0
    %3815 = vdwg.mxu0
    %v3816 = vadd.f32 %v3810, %v3156
    %v3817 = vadd.f32 %v3813, %v3157
    %v3818 = vld [vmem:[%s22] sm:$0x1]
    %v3819 = vld [vmem:[%s23] sm:$0x1]
    %3820 = vadd.xlane.f32.xlu0 %v3816
    %v3821 = vpop.xlane.xlu0 %3820
    %3822 = vadd.xlane.f32.xlu0 %v3817
    %v3823 = vpop.xlane.xlu0 %3822
    %v3824 = vmul.f32 %v3821, %v1696
    %v3825 = vmul.f32 %v3823, %v1696
    %v3826 = vsub.f32 %v3816, %v3824
    %v3827 = vsub.f32 %v3817, %v3825
    %v3828 = vmul.f32 %v3826, %v3826
    %v3829 = vmul.f32 %v3827, %v3827
    %3830 = vadd.xlane.f32.xlu0 %v3828
    %v3831 = vpop.xlane.xlu0 %3830
    %3832 = vadd.xlane.f32.xlu0 %v3829
    %v3833 = vpop.xlane.xlu0 %3832
    %v3834 = vmul.f32 %v3831, %v1696
    %v3835 = vmul.f32 %v3833, %v1696
    %v3836 = vadd.f32 %v3834, 1e-05
    %v3837 = vadd.f32 %v3835, 1e-05
    %v3838 = vrsqrt.pop %v3836
    %v3839 = vrsqrt.pop %v3837
    %v3840 = vmul.f32 %v3826, %v3838
    %v3841 = vmul.f32 %v3827, %v3839
    %v3843 = vlaneseq
    %v3844 = vshrl.u32 %v3843, 7
    %v3845 = vsub.s32 0, %v3844
    %v3846 = vrot.slane %v3818, %v3845
    %v3848 = vmul.f32 %v3840, %v3846
    %v3849 = vmul.f32 %v3841, %v3846
    %v3851 = vlaneseq
    %v3852 = vshrl.u32 %v3851, 7
    %v3853 = vsub.s32 0, %v3852
    %v3854 = vrot.slane %v3819, %v3853
    %v3856 = vadd.f32 %v3848, %v3854
    %v3857 = vadd.f32 %v3849, %v3854
    %3858 = vst [vmem:[#allocation23] sm:$0xff] %v3856
    %3859 = vst [vmem:[#allocation23 + $0x8] sm:$0xff] %v3857
    // Predicated region
    $region150: #{tpu_custom_call.1} parent=1 // pred_check
      _
    $region151: #{tpu_custom_call.1} parent=1 // pred_check_branch
      %3861 = sbr.rel (0) target = $region153
    $region152: #{tpu_custom_call.1} parent=1 // pred_region
      %s3863 = ssub.s32 256, 256
      %3864 = vsyncadd [#allocation4], %s3863
      %s3865 = sshll.u32 [#allocation23], 4
      %s3866 = int_to_ptr.vmem [resolvable:$true] %s3865
      %3871 = dma.vmem_to_hbm [thread:$0]  %s3866, 256, %s24, [#allocation4], 128, 128, 8
    $region153: #{tpu_custom_call.1} parent=1 // pred_fallthru
      _
    // Predicated region
    $region154: #{tpu_custom_call.1} parent=1 // pred_check
      _
    $region155: #{tpu_custom_call.1} parent=1 // pred_check_branch
      %3873 = sbr.rel (0) target = $region157
    $region156: #{tpu_custom_call.1} parent=1 // pred_region
      %3874 = dma.done [#allocation4], 256
    $region157: #{tpu_custom_call.1} parent=1 // pred_fallthru
      _
    %3875 = vsyncpa [#allocation3], 1
    %3876 = vsyncpa [#allocation6], 1
    %3877 = vsyncpa [#allocation9], 1
    %3878 = vsyncpa [#allocation12], 1
    %3879 = vsyncpa [#allocation15], 1
    %3880 = vsyncpa [#allocation18], 1
    %3881 = vsyncpa [#allocation21], 1
    %3882 = vsyncpa [#allocation4], 1

</llo_original>
